<compile_context>
chip_gen: v6e
topology: v6e:2x2x1
jax: 0.10.0
libtpu: 0.0.40
codegen_flags: <defaults>
</compile_context>

<pallas_src>
import functools

import jax
import jax.numpy as jnp
from jax.experimental import pallas as pl
from jax.experimental.pallas import tpu as pltpu


def _round_up(v, m):
    return (v + m - 1) // m * m


# ------------------------------- fused kernel --------------------------------
def _star_block_kernel(x_ref, w12_ref, b12_ref, wg_ref, bg_ref,
                       wdw1_ref, bdw1_ref, wdw2_ref, bdw2_ref,
                       o_ref, p1_ref, p2_ref, *, H, W, C, R):
    # x_ref/o_ref: (1, C, H*W)            (NCHW with the pixel dims flattened)
    # w12_ref:     (2R, C) bf16, b12_ref: (2R, 1) f32   (f1|f2 fused, BN-free)
    # wg_ref:      (C, R)  bf16, bg_ref:  (C, 1)  f32   (BN folded)
    # wdw*_ref:    (C, 49) f32,  bdw*_ref:(C, 1)  f32   (dw1 has BN folded)
    # p1/p2_ref:   (C, (H+7)*Wr) f32 VMEM scratch = zero-padded flat frames
    f32 = jnp.float32
    Wr = W + 6                  # padded row stride (3 left + 3 right zeros)
    L = H * Wr                  # flat length covering all H output rows
    PLEN = (H + 7) * Wr         # 3 top pad rows + H rows + 3 bottom + 1 guard

    z3 = jnp.zeros((C, 3), f32)

    # ---- re-zero only the halo borders (cheap; every read byte is written
    #      every step, so the batch grid axis is safely "parallel") ----
    ztop = jnp.zeros((C, 3 * Wr), f32)
    zbot = jnp.zeros((C, 4 * Wr), f32)
    p1_ref[:, 0:3 * Wr] = ztop
    p1_ref[:, (H + 3) * Wr:PLEN] = zbot
    p2_ref[:, 0:3 * Wr] = ztop
    p2_ref[:, (H + 3) * Wr:PLEN] = zbot

    # ---- place x rows into the padded flat frame (row stride Wr) ----
    for h in range(H):
        xrow = x_ref[0, :, h * W:(h + 1) * W].astype(f32)          # (C, W)
        p1_ref[:, (h + 3) * Wr:(h + 4) * Wr] = jnp.concatenate(
            [z3, xrow, z3], axis=1)

    # ---- depthwise 7x7 on a flat padded frame (shared row stride Wr) ----
    def dw7(pad_ref, w_ref, b_ref):
        acc0 = jnp.zeros((C, L), f32)
        acc1 = jnp.zeros((C, L), f32)
        for i in range(7):
            strip = pad_ref[:, i * Wr:i * Wr + L + 6]   # one strip load per i
            for j in range(7):
                t = 7 * i + j
                tap = strip[:, j:j + L]                 # in-register lane shift
                w = w_ref[:, t:t + 1]                   # (C, 1) per-channel tap
                if t % 2 == 0:
                    acc0 = acc0 + tap * w
                else:
                    acc1 = acc1 + tap * w
        return acc0 + acc1 + b_ref[...]

    # ---- dwconv (+ folded BN) ----
    hmat = dw7(p1_ref, wdw1_ref, bdw1_ref)              # (C, L) f32

    # ---- pointwise chain (fused f1|f2 -> relu6*mul -> g) in row chunks ----
    b12 = b12_ref[...]
    bg = bg_ref[...]
    rows_per_chunk = max(1, 1024 // Wr)
    for r0 in range(0, H, rows_per_chunk):
        nr = min(rows_per_chunk, H - r0)
        hc = hmat[:, r0 * Wr:(r0 + nr) * Wr].astype(jnp.bfloat16)
        x12 = jnp.dot(w12_ref[...], hc,
                      preferred_element_type=jnp.float32) + b12    # (2R, nr*Wr)
        z = jnp.clip(x12[:R, :], 0.0, 6.0) * x12[R:, :]            # relu6 * x2
        gc = jnp.dot(wg_ref[...], z.astype(jnp.bfloat16),
                     preferred_element_type=jnp.float32) + bg      # (C, nr*Wr)
        # place valid columns of g into the second padded frame
        for hh in range(nr):
            grow = gc[:, hh * Wr:hh * Wr + W]
            p2_ref[:, (r0 + hh + 3) * Wr:(r0 + hh + 4) * Wr] = jnp.concatenate(
                [z3, grow, z3], axis=1)

    # ---- dwconv2 (conv bias only) ----
    d2 = dw7(p2_ref, wdw2_ref, bdw2_ref)                # (C, L) f32

    # ---- residual add + single dense output store ----
    d2c = jnp.concatenate([d2[:, h * Wr:h * Wr + W] for h in range(H)],
                          axis=1)                        # (C, H*W)
    o_ref[0] = (x_ref[0].astype(f32) + d2c).astype(o_ref.dtype)


def _vmem_limit_bytes():
    # Per-generation VMEM budget (leave headroom for double buffers); safe
    # fallback if the query is unavailable.
    try:
        cap = pltpu.get_tpu_info().vmem_capacity_bytes
    except Exception:
        cap = 64 * 1024 * 1024
    return min(int(cap * 0.7), 100 * 1024 * 1024)


def star_block_pallas(x_flat, w12, b12, wg, bg, wdw1, bdw1, wdw2, bdw2, *, H, W):
    B, C, HW = x_flat.shape
    assert HW == H * W
    R = w12.shape[0] // 2
    Wr = W + 6
    PLEN = (H + 7) * Wr

    kernel = functools.partial(_star_block_kernel, H=H, W=W, C=C, R=R)

    grid_spec = pltpu.PrefetchScalarGridSpec(
        num_scalar_prefetch=0,
        grid=(B,),
        in_specs=[
            pl.BlockSpec((1, C, HW), lambda b: (b, 0, 0)),   # x (flat pixels)
            pl.BlockSpec((2 * R, C), lambda b: (0, 0)),      # w_f1|w_f2 (bf16)
            pl.BlockSpec((2 * R, 1), lambda b: (0, 0)),      # b_f1|b_f2
            pl.BlockSpec((C, R), lambda b: (0, 0)),          # w_g (BN folded, bf16)
            pl.BlockSpec((C, 1), lambda b: (0, 0)),          # b_g (BN folded)
            pl.BlockSpec((C, 49), lambda b: (0, 0)),         # dw1 taps (BN folded)
            pl.BlockSpec((C, 1), lambda b: (0, 0)),          # dw1 bias (BN folded)
            pl.BlockSpec((C, 49), lambda b: (0, 0)),         # dw2 taps
            pl.BlockSpec((C, 1), lambda b: (0, 0)),          # dw2 bias
        ],
        out_specs=pl.BlockSpec((1, C, HW), lambda b: (b, 0, 0)),
        scratch_shapes=[
            pltpu.VMEM((C, PLEN), jnp.float32),              # padded frame for x
            pltpu.VMEM((C, PLEN), jnp.float32),              # padded frame for g
        ],
    )

    return pl.pallas_call(
        kernel,
        out_shape=jax.ShapeDtypeStruct((B, C, HW), x_flat.dtype),
        grid_spec=grid_spec,
        compiler_params=pltpu.CompilerParams(
            dimension_semantics=("parallel",),
            vmem_limit_bytes=_vmem_limit_bytes(),
        ),
    )(x_flat, w12, b12, wg, bg, wdw1, bdw1, wdw2, bdw2)


# --------------------------- BN folding (eval mode) ---------------------------
def fold_bn_dw(w, b, gamma, beta, mean, var, eps=1e-5):
    # w: (7, 7, C) depthwise weights, b: (C,)
    s = gamma / jnp.sqrt(var + eps)
    return w * s, (b - mean) * s + beta


def fold_bn_pw(w, b, gamma, beta, mean, var, eps=1e-5):
    # w: (Cin, Cout), b: (Cout,)
    s = gamma / jnp.sqrt(var + eps)
    return w * s[None, :], (b - mean) * s + beta


# ------------------------------ StarBlock wrapper -----------------------------
def star_block(x_nchw, p, eps=1e-5):
    B, C, H, W = x_nchw.shape
    C3 = p["w_f1"].shape[1]
    R = _round_up(C3, 8)
    f32 = jnp.float32

    # fold BN (eval mode) into dwconv1 and g
    wdw1, bdw1 = fold_bn_dw(p["w_dw1"], p["b_dw1"], *p["bn1"], eps=eps)
    wg, bg = fold_bn_pw(p["w_g"], p["b_g"], *p["bn2"], eps=eps)

    # depthwise taps -> (C, 49)
    wdw1_k = jnp.transpose(wdw1, (2, 0, 1)).reshape(C, 49)
    wdw2_k = jnp.transpose(p["w_dw2"], (2, 0, 1)).reshape(C, 49)

    # f1|f2 fused, output-major, rows zero-padded to R -> (2R, C) bf16
    def pad_rows_w(w_in_out):                       # (C, C3) -> (R, C)
        return jnp.zeros((R, C), f32).at[:C3, :].set(w_in_out.T)

    def pad_rows_b(b_vec):                          # (C3,) -> (R,)
        return jnp.zeros((R,), f32).at[:C3].set(b_vec)

    w12 = jnp.concatenate([pad_rows_w(p["w_f1"]), pad_rows_w(p["w_f2"])],
                          axis=0).astype(jnp.bfloat16)
    b12 = jnp.concatenate([pad_rows_b(p["b_f1"]), pad_rows_b(p["b_f2"])],
                          axis=0).reshape(2 * R, 1)

    # g: output-major (C, C3) zero-padded to (C, R), bf16; BN folded
    wg_k = jnp.zeros((C, R), f32).at[:, :C3].set(wg.T).astype(jnp.bfloat16)
    bg_k = bg.reshape(C, 1)

    out = star_block_pallas(
        x_nchw.reshape(B, C, H * W),
        w12, b12, wg_k, bg_k,
        wdw1_k, bdw1.reshape(C, 1),
        wdw2_k, p["b_dw2"].reshape(C, 1),
        H=H, W=W,
    )
    return out.reshape(B, C, H, W)


# ------------------------------ pure-JAX reference ----------------------------
def star_block_ref(x_nchw, p, eps=1e-5):
    prec = jax.lax.Precision.HIGHEST
    x = jnp.transpose(x_nchw, (0, 2, 3, 1))

    def dw7(inp, w, b):
        B, H, W, C = inp.shape
        xp = jnp.pad(inp, ((0, 0), (3, 3), (3, 3), (0, 0)))
        acc = jnp.zeros_like(inp)
        for i in range(7):
            for j in range(7):
                acc = acc + xp[:, i:i + H, j:j + W, :] * w[i, j, :]
        return acc + b

    def bn(t, gamma, beta, mean, var):
        return (t - mean) / jnp.sqrt(var + eps) * gamma + beta

    h = bn(dw7(x, p["w_dw1"], p["b_dw1"]), *p["bn1"])
    x1 = jnp.einsum("bhwc,cd->bhwd", h, p["w_f1"], precision=prec) + p["b_f1"]
    x2 = jnp.einsum("bhwc,cd->bhwd", h, p["w_f2"], precision=prec) + p["b_f2"]
    z = jnp.clip(x1, 0.0, 6.0) * x2
    g = bn(jnp.einsum("bhwc,cd->bhwd", z, p["w_g"], precision=prec) + p["b_g"],
           *p["bn2"])
    d2 = dw7(g, p["w_dw2"], p["b_dw2"])
    return jnp.transpose(x + d2, (0, 3, 1, 2))


if __name__ == "__main__":
    # StarBlock(dim=4, mlp_ratio=3, drop_path=0.0)
    B, C, H, W = 2, 4, 16, 16
    mlp_ratio = 3
    C3 = mlp_ratio * C

    key = jax.random.PRNGKey(0)
    ks = jax.random.split(key, 17)
    x = jax.random.normal(ks[0], (B, C, H, W), jnp.float32)

    params = {
        # dwconv (7x7 depthwise); PyTorch weight (C,1,7,7) -> stored (7,7,C)
        "w_dw1": jax.random.normal(ks[1], (7, 7, C), jnp.float32) * 0.1,
        "b_dw1": jax.random.normal(ks[2], (C,), jnp.float32) * 0.1,
        "bn1": (
            jax.random.uniform(ks[3], (C,), jnp.float32, 0.5, 1.5),   # gamma
            jax.random.normal(ks[4], (C,), jnp.float32) * 0.1,        # beta
            jax.random.normal(ks[5], (C,), jnp.float32) * 0.1,        # running_mean
            jax.random.uniform(ks[6], (C,), jnp.float32, 0.5, 1.5),   # running_var
        ),
        # f1, f2: 1x1 convs dim -> 3*dim (PyTorch (3C,C,1,1) -> stored (C,3C))
        "w_f1": jax.random.normal(ks[7], (C, C3), jnp.float32) * 0.2,
        "b_f1": jax.random.normal(ks[8], (C3,), jnp.float32) * 0.1,
        "w_f2": jax.random.normal(ks[9], (C, C3), jnp.float32) * 0.2,
        "b_f2": jax.random.normal(ks[10], (C3,), jnp.float32) * 0.1,
        # g: 1x1 conv 3*dim -> dim, with BN (stored (3C, C))
        "w_g": jax.random.normal(ks[11], (C3, C), jnp.float32) * 0.2,
        "b_g": jax.random.normal(ks[12], (C,), jnp.float32) * 0.1,
        "bn2": (
            jax.random.uniform(ks[13], (C,), jnp.float32, 0.5, 1.5),
            jax.random.normal(ks[14], (C,), jnp.float32) * 0.1,
            jax.random.normal(ks[15], (C,), jnp.float32) * 0.1,
            jax.random.uniform(ks[16], (C,), jnp.float32, 0.5, 1.5),
        ),
        # dwconv2 (7x7 depthwise, no BN)
        "w_dw2": jax.random.normal(jax.random.fold_in(key, 100), (7, 7, C),
                                   jnp.float32) * 0.1,
        "b_dw2": jax.random.normal(jax.random.fold_in(key, 101), (C,),
                                   jnp.float32) * 0.1,
    }

    out = jax.block_until_ready(star_block(x, params))
    assert out.shape == (B, C, H, W), out.shape

    ref = jax.block_until_ready(star_block_ref(x, params))
    # The 1x1 convs run with bf16 operands on the MXU (f32 accumulation), so
    # compare against the f32 reference with a bf16-appropriate tolerance.
    assert jnp.allclose(out, ref, atol=2e-2, rtol=2e-2), (
        "mismatch vs reference: max abs diff = %e"
        % float(jnp.max(jnp.abs(out - ref)))
    )

    print("KERNEL_OK")
</pallas_src>

<mosaic_0001>
module attributes {stable_mosaic.version = 11 : i64} {
  func.func @_star_block_kernel(%arg0: i32, %arg1: memref<1x4x256xf32, #tpu.memory_space<vmem>>, %arg2: memref<32x4xbf16, #tpu.memory_space<vmem>>, %arg3: memref<32x1xf32, #tpu.memory_space<vmem>>, %arg4: memref<4x16xbf16, #tpu.memory_space<vmem>>, %arg5: memref<4x1xf32, #tpu.memory_space<vmem>>, %arg6: memref<4x49xf32, #tpu.memory_space<vmem>>, %arg7: memref<4x1xf32, #tpu.memory_space<vmem>>, %arg8: memref<4x49xf32, #tpu.memory_space<vmem>>, %arg9: memref<4x1xf32, #tpu.memory_space<vmem>>, %arg10: memref<1x4x256xf32, #tpu.memory_space<vmem>>, %arg11: memref<4x506xf32, #tpu.memory_space<vmem>>, %arg12: memref<4x506xf32, #tpu.memory_space<vmem>>) attributes {dimension_semantics = [#tpu.dimension_semantics<parallel>], iteration_bounds = array<i64: 2>, scalar_prefetch = 0 : i64, scratch_operands = 2 : i64, tpu.core_type = #tpu.core_type<tc>, window_params = [{transform_indices = @transform_0, window_bounds = array<i64: 1, 4, 256>}, {pipeline_mode = #tpu.pipeline_mode<synchronous>, transform_indices = @transform_1, window_bounds = array<i64: 32, 4>}, {pipeline_mode = #tpu.pipeline_mode<synchronous>, transform_indices = @transform_2, window_bounds = array<i64: 32, 1>}, {pipeline_mode = #tpu.pipeline_mode<synchronous>, transform_indices = @transform_3, window_bounds = array<i64: 4, 16>}, {pipeline_mode = #tpu.pipeline_mode<synchronous>, transform_indices = @transform_4, window_bounds = array<i64: 4, 1>}, {pipeline_mode = #tpu.pipeline_mode<synchronous>, transform_indices = @transform_5, window_bounds = array<i64: 4, 49>}, {pipeline_mode = #tpu.pipeline_mode<synchronous>, transform_indices = @transform_6, window_bounds = array<i64: 4, 1>}, {pipeline_mode = #tpu.pipeline_mode<synchronous>, transform_indices = @transform_7, window_bounds = array<i64: 4, 49>}, {pipeline_mode = #tpu.pipeline_mode<synchronous>, transform_indices = @transform_8, window_bounds = array<i64: 4, 1>}, {transform_indices = @transform_9, window_bounds = array<i64: 1, 4, 256>}]} {
    %cst = arith.constant 0.000000e+00 : f32
    %0 = vector.broadcast %cst : f32 to vector<4x3xf32>
    %cst_0 = arith.constant 0.000000e+00 : f32
    %1 = vector.broadcast %cst_0 : f32 to vector<4x66xf32>
    %cst_1 = arith.constant 0.000000e+00 : f32
    %2 = vector.broadcast %cst_1 : f32 to vector<4x88xf32>
    %c0 = arith.constant 0 : index
    %c0_2 = arith.constant 0 : index
    %3 = vector.load %arg11[%c0, %c0_2] : memref<4x506xf32, #tpu.memory_space<vmem>>, vector<4x66xf32>
    tpu.vector_store %arg11[%c0, %c0_2], %1 {strides = array<i32>} : memref<4x506xf32, #tpu.memory_space<vmem>>, vector<4x66xf32>,
    %c0_3 = arith.constant 0 : index
    %c418 = arith.constant 418 : index
    %4 = vector.load %arg11[%c0_3, %c418] : memref<4x506xf32, #tpu.memory_space<vmem>>, vector<4x88xf32>
    tpu.vector_store %arg11[%c0_3, %c418], %2 {strides = array<i32>} : memref<4x506xf32, #tpu.memory_space<vmem>>, vector<4x88xf32>,
    %c0_4 = arith.constant 0 : index
    %c0_5 = arith.constant 0 : index
    %5 = vector.load %arg12[%c0_4, %c0_5] : memref<4x506xf32, #tpu.memory_space<vmem>>, vector<4x66xf32>
    tpu.vector_store %arg12[%c0_4, %c0_5], %1 {strides = array<i32>} : memref<4x506xf32, #tpu.memory_space<vmem>>, vector<4x66xf32>,
    %c0_6 = arith.constant 0 : index
    %c418_7 = arith.constant 418 : index
    %6 = vector.load %arg12[%c0_6, %c418_7] : memref<4x506xf32, #tpu.memory_space<vmem>>, vector<4x88xf32>
    tpu.vector_store %arg12[%c0_6, %c418_7], %2 {strides = array<i32>} : memref<4x506xf32, #tpu.memory_space<vmem>>, vector<4x88xf32>,
    %c0_8 = arith.constant 0 : index
    %c0_9 = arith.constant 0 : index
    %c0_10 = arith.constant 0 : index
    %7 = vector.load %arg1[%c0_8, %c0_9, %c0_10] : memref<1x4x256xf32, #tpu.memory_space<vmem>>, vector<1x4x16xf32>
    %8 = vector.shape_cast %7 : vector<1x4x16xf32> to vector<4x16xf32>
    %9 = tpu.concatenate %0, %8, %0 in 1 : vector<4x3xf32>, vector<4x16xf32>, vector<4x3xf32> -> vector<4x22xf32>
    %c0_11 = arith.constant 0 : index
    %c66 = arith.constant 66 : index
    %10 = vector.load %arg11[%c0_11, %c66] : memref<4x506xf32, #tpu.memory_space<vmem>>, vector<4x22xf32>
    tpu.vector_store %arg11[%c0_11, %c66], %9 {strides = array<i32>} : memref<4x506xf32, #tpu.memory_space<vmem>>, vector<4x22xf32>,
    %c0_12 = arith.constant 0 : index
    %c0_13 = arith.constant 0 : index
    %c16 = arith.constant 16 : index
    %11 = vector.load %arg1[%c0_12, %c0_13, %c16] : memref<1x4x256xf32, #tpu.memory_space<vmem>>, vector<1x4x16xf32>
    %12 = vector.shape_cast %11 : vector<1x4x16xf32> to vector<4x16xf32>
    %13 = tpu.concatenate %0, %12, %0 in 1 : vector<4x3xf32>, vector<4x16xf32>, vector<4x3xf32> -> vector<4x22xf32>
    %c0_14 = arith.constant 0 : index
    %c88 = arith.constant 88 : index
    %14 = vector.load %arg11[%c0_14, %c88] : memref<4x506xf32, #tpu.memory_space<vmem>>, vector<4x22xf32>
    tpu.vector_store %arg11[%c0_14, %c88], %13 {strides = array<i32>} : memref<4x506xf32, #tpu.memory_space<vmem>>, vector<4x22xf32>,
    %c0_15 = arith.constant 0 : index
    %c0_16 = arith.constant 0 : index
    %c32 = arith.constant 32 : index
    %15 = vector.load %arg1[%c0_15, %c0_16, %c32] : memref<1x4x256xf32, #tpu.memory_space<vmem>>, vector<1x4x16xf32>
    %16 = vector.shape_cast %15 : vector<1x4x16xf32> to vector<4x16xf32>
    %17 = tpu.concatenate %0, %16, %0 in 1 : vector<4x3xf32>, vector<4x16xf32>, vector<4x3xf32> -> vector<4x22xf32>
    %c0_17 = arith.constant 0 : index
    %c110 = arith.constant 110 : index
    %18 = vector.load %arg11[%c0_17, %c110] : memref<4x506xf32, #tpu.memory_space<vmem>>, vector<4x22xf32>
    tpu.vector_store %arg11[%c0_17, %c110], %17 {strides = array<i32>} : memref<4x506xf32, #tpu.memory_space<vmem>>, vector<4x22xf32>,
    %c0_18 = arith.constant 0 : index
    %c0_19 = arith.constant 0 : index
    %c48 = arith.constant 48 : index
    %19 = vector.load %arg1[%c0_18, %c0_19, %c48] : memref<1x4x256xf32, #tpu.memory_space<vmem>>, vector<1x4x16xf32>
    %20 = vector.shape_cast %19 : vector<1x4x16xf32> to vector<4x16xf32>
    %21 = tpu.concatenate %0, %20, %0 in 1 : vector<4x3xf32>, vector<4x16xf32>, vector<4x3xf32> -> vector<4x22xf32>
    %c0_20 = arith.constant 0 : index
    %c132 = arith.constant 132 : index
    %22 = vector.load %arg11[%c0_20, %c132] : memref<4x506xf32, #tpu.memory_space<vmem>>, vector<4x22xf32>
    tpu.vector_store %arg11[%c0_20, %c132], %21 {strides = array<i32>} : memref<4x506xf32, #tpu.memory_space<vmem>>, vector<4x22xf32>,
    %c0_21 = arith.constant 0 : index
    %c0_22 = arith.constant 0 : index
    %c64 = arith.constant 64 : index
    %23 = vector.load %arg1[%c0_21, %c0_22, %c64] : memref<1x4x256xf32, #tpu.memory_space<vmem>>, vector<1x4x16xf32>
    %24 = vector.shape_cast %23 : vector<1x4x16xf32> to vector<4x16xf32>
    %25 = tpu.concatenate %0, %24, %0 in 1 : vector<4x3xf32>, vector<4x16xf32>, vector<4x3xf32> -> vector<4x22xf32>
    %c0_23 = arith.constant 0 : index
    %c154 = arith.constant 154 : index
    %26 = vector.load %arg11[%c0_23, %c154] : memref<4x506xf32, #tpu.memory_space<vmem>>, vector<4x22xf32>
    tpu.vector_store %arg11[%c0_23, %c154], %25 {strides = array<i32>} : memref<4x506xf32, #tpu.memory_space<vmem>>, vector<4x22xf32>,
    %c0_24 = arith.constant 0 : index
    %c0_25 = arith.constant 0 : index
    %c80 = arith.constant 80 : index
    %27 = vector.load %arg1[%c0_24, %c0_25, %c80] : memref<1x4x256xf32, #tpu.memory_space<vmem>>, vector<1x4x16xf32>
    %28 = vector.shape_cast %27 : vector<1x4x16xf32> to vector<4x16xf32>
    %29 = tpu.concatenate %0, %28, %0 in 1 : vector<4x3xf32>, vector<4x16xf32>, vector<4x3xf32> -> vector<4x22xf32>
    %c0_26 = arith.constant 0 : index
    %c176 = arith.constant 176 : index
    %30 = vector.load %arg11[%c0_26, %c176] : memref<4x506xf32, #tpu.memory_space<vmem>>, vector<4x22xf32>
    tpu.vector_store %arg11[%c0_26, %c176], %29 {strides = array<i32>} : memref<4x506xf32, #tpu.memory_space<vmem>>, vector<4x22xf32>,
    %c0_27 = arith.constant 0 : index
    %c0_28 = arith.constant 0 : index
    %c96 = arith.constant 96 : index
    %31 = vector.load %arg1[%c0_27, %c0_28, %c96] : memref<1x4x256xf32, #tpu.memory_space<vmem>>, vector<1x4x16xf32>
    %32 = vector.shape_cast %31 : vector<1x4x16xf32> to vector<4x16xf32>
    %33 = tpu.concatenate %0, %32, %0 in 1 : vector<4x3xf32>, vector<4x16xf32>, vector<4x3xf32> -> vector<4x22xf32>
    %c0_29 = arith.constant 0 : index
    %c198 = arith.constant 198 : index
    %34 = vector.load %arg11[%c0_29, %c198] : memref<4x506xf32, #tpu.memory_space<vmem>>, vector<4x22xf32>
    tpu.vector_store %arg11[%c0_29, %c198], %33 {strides = array<i32>} : memref<4x506xf32, #tpu.memory_space<vmem>>, vector<4x22xf32>,
    %c0_30 = arith.constant 0 : index
    %c0_31 = arith.constant 0 : index
    %c112 = arith.constant 112 : index
    %35 = vector.load %arg1[%c0_30, %c0_31, %c112] : memref<1x4x256xf32, #tpu.memory_space<vmem>>, vector<1x4x16xf32>
    %36 = vector.shape_cast %35 : vector<1x4x16xf32> to vector<4x16xf32>
    %37 = tpu.concatenate %0, %36, %0 in 1 : vector<4x3xf32>, vector<4x16xf32>, vector<4x3xf32> -> vector<4x22xf32>
    %c0_32 = arith.constant 0 : index
    %c220 = arith.constant 220 : index
    %38 = vector.load %arg11[%c0_32, %c220] : memref<4x506xf32, #tpu.memory_space<vmem>>, vector<4x22xf32>
    tpu.vector_store %arg11[%c0_32, %c220], %37 {strides = array<i32>} : memref<4x506xf32, #tpu.memory_space<vmem>>, vector<4x22xf32>,
    %c0_33 = arith.constant 0 : index
    %c0_34 = arith.constant 0 : index
    %c128 = arith.constant 128 : index
    %39 = vector.load %arg1[%c0_33, %c0_34, %c128] : memref<1x4x256xf32, #tpu.memory_space<vmem>>, vector<1x4x16xf32>
    %40 = vector.shape_cast %39 : vector<1x4x16xf32> to vector<4x16xf32>
    %41 = tpu.concatenate %0, %40, %0 in 1 : vector<4x3xf32>, vector<4x16xf32>, vector<4x3xf32> -> vector<4x22xf32>
    %c0_35 = arith.constant 0 : index
    %c242 = arith.constant 242 : index
    %42 = vector.load %arg11[%c0_35, %c242] : memref<4x506xf32, #tpu.memory_space<vmem>>, vector<4x22xf32>
    tpu.vector_store %arg11[%c0_35, %c242], %41 {strides = array<i32>} : memref<4x506xf32, #tpu.memory_space<vmem>>, vector<4x22xf32>,
    %c0_36 = arith.constant 0 : index
    %c0_37 = arith.constant 0 : index
    %c144 = arith.constant 144 : index
    %43 = vector.load %arg1[%c0_36, %c0_37, %c144] : memref<1x4x256xf32, #tpu.memory_space<vmem>>, vector<1x4x16xf32>
    %44 = vector.shape_cast %43 : vector<1x4x16xf32> to vector<4x16xf32>
    %45 = tpu.concatenate %0, %44, %0 in 1 : vector<4x3xf32>, vector<4x16xf32>, vector<4x3xf32> -> vector<4x22xf32>
    %c0_38 = arith.constant 0 : index
    %c264 = arith.constant 264 : index
    %46 = vector.load %arg11[%c0_38, %c264] : memref<4x506xf32, #tpu.memory_space<vmem>>, vector<4x22xf32>
    tpu.vector_store %arg11[%c0_38, %c264], %45 {strides = array<i32>} : memref<4x506xf32, #tpu.memory_space<vmem>>, vector<4x22xf32>,
    %c0_39 = arith.constant 0 : index
    %c0_40 = arith.constant 0 : index
    %c160 = arith.constant 160 : index
    %47 = vector.load %arg1[%c0_39, %c0_40, %c160] : memref<1x4x256xf32, #tpu.memory_space<vmem>>, vector<1x4x16xf32>
    %48 = vector.shape_cast %47 : vector<1x4x16xf32> to vector<4x16xf32>
    %49 = tpu.concatenate %0, %48, %0 in 1 : vector<4x3xf32>, vector<4x16xf32>, vector<4x3xf32> -> vector<4x22xf32>
    %c0_41 = arith.constant 0 : index
    %c286 = arith.constant 286 : index
    %50 = vector.load %arg11[%c0_41, %c286] : memref<4x506xf32, #tpu.memory_space<vmem>>, vector<4x22xf32>
    tpu.vector_store %arg11[%c0_41, %c286], %49 {strides = array<i32>} : memref<4x506xf32, #tpu.memory_space<vmem>>, vector<4x22xf32>,
    %c0_42 = arith.constant 0 : index
    %c0_43 = arith.constant 0 : index
    %c176_44 = arith.constant 176 : index
    %51 = vector.load %arg1[%c0_42, %c0_43, %c176_44] : memref<1x4x256xf32, #tpu.memory_space<vmem>>, vector<1x4x16xf32>
    %52 = vector.shape_cast %51 : vector<1x4x16xf32> to vector<4x16xf32>
    %53 = tpu.concatenate %0, %52, %0 in 1 : vector<4x3xf32>, vector<4x16xf32>, vector<4x3xf32> -> vector<4x22xf32>
    %c0_45 = arith.constant 0 : index
    %c308 = arith.constant 308 : index
    %54 = vector.load %arg11[%c0_45, %c308] : memref<4x506xf32, #tpu.memory_space<vmem>>, vector<4x22xf32>
    tpu.vector_store %arg11[%c0_45, %c308], %53 {strides = array<i32>} : memref<4x506xf32, #tpu.memory_space<vmem>>, vector<4x22xf32>,
    %c0_46 = arith.constant 0 : index
    %c0_47 = arith.constant 0 : index
    %c192 = arith.constant 192 : index
    %55 = vector.load %arg1[%c0_46, %c0_47, %c192] : memref<1x4x256xf32, #tpu.memory_space<vmem>>, vector<1x4x16xf32>
    %56 = vector.shape_cast %55 : vector<1x4x16xf32> to vector<4x16xf32>
    %57 = tpu.concatenate %0, %56, %0 in 1 : vector<4x3xf32>, vector<4x16xf32>, vector<4x3xf32> -> vector<4x22xf32>
    %c0_48 = arith.constant 0 : index
    %c330 = arith.constant 330 : index
    %58 = vector.load %arg11[%c0_48, %c330] : memref<4x506xf32, #tpu.memory_space<vmem>>, vector<4x22xf32>
    tpu.vector_store %arg11[%c0_48, %c330], %57 {strides = array<i32>} : memref<4x506xf32, #tpu.memory_space<vmem>>, vector<4x22xf32>,
    %c0_49 = arith.constant 0 : index
    %c0_50 = arith.constant 0 : index
    %c208 = arith.constant 208 : index
    %59 = vector.load %arg1[%c0_49, %c0_50, %c208] : memref<1x4x256xf32, #tpu.memory_space<vmem>>, vector<1x4x16xf32>
    %60 = vector.shape_cast %59 : vector<1x4x16xf32> to vector<4x16xf32>
    %61 = tpu.concatenate %0, %60, %0 in 1 : vector<4x3xf32>, vector<4x16xf32>, vector<4x3xf32> -> vector<4x22xf32>
    %c0_51 = arith.constant 0 : index
    %c352 = arith.constant 352 : index
    %62 = vector.load %arg11[%c0_51, %c352] : memref<4x506xf32, #tpu.memory_space<vmem>>, vector<4x22xf32>
    tpu.vector_store %arg11[%c0_51, %c352], %61 {strides = array<i32>} : memref<4x506xf32, #tpu.memory_space<vmem>>, vector<4x22xf32>,
    %c0_52 = arith.constant 0 : index
    %c0_53 = arith.constant 0 : index
    %c224 = arith.constant 224 : index
    %63 = vector.load %arg1[%c0_52, %c0_53, %c224] : memref<1x4x256xf32, #tpu.memory_space<vmem>>, vector<1x4x16xf32>
    %64 = vector.shape_cast %63 : vector<1x4x16xf32> to vector<4x16xf32>
    %65 = tpu.concatenate %0, %64, %0 in 1 : vector<4x3xf32>, vector<4x16xf32>, vector<4x3xf32> -> vector<4x22xf32>
    %c0_54 = arith.constant 0 : index
    %c374 = arith.constant 374 : index
    %66 = vector.load %arg11[%c0_54, %c374] : memref<4x506xf32, #tpu.memory_space<vmem>>, vector<4x22xf32>
    tpu.vector_store %arg11[%c0_54, %c374], %65 {strides = array<i32>} : memref<4x506xf32, #tpu.memory_space<vmem>>, vector<4x22xf32>,
    %c0_55 = arith.constant 0 : index
    %c0_56 = arith.constant 0 : index
    %c240 = arith.constant 240 : index
    %67 = vector.load %arg1[%c0_55, %c0_56, %c240] : memref<1x4x256xf32, #tpu.memory_space<vmem>>, vector<1x4x16xf32>
    %68 = vector.shape_cast %67 : vector<1x4x16xf32> to vector<4x16xf32>
    %69 = tpu.concatenate %0, %68, %0 in 1 : vector<4x3xf32>, vector<4x16xf32>, vector<4x3xf32> -> vector<4x22xf32>
    %c0_57 = arith.constant 0 : index
    %c396 = arith.constant 396 : index
    %70 = vector.load %arg11[%c0_57, %c396] : memref<4x506xf32, #tpu.memory_space<vmem>>, vector<4x22xf32>
    tpu.vector_store %arg11[%c0_57, %c396], %69 {strides = array<i32>} : memref<4x506xf32, #tpu.memory_space<vmem>>, vector<4x22xf32>,
    %cst_58 = arith.constant 0.000000e+00 : f32
    %71 = vector.broadcast %cst_58 : f32 to vector<4x352xf32>
    %cst_59 = arith.constant 0.000000e+00 : f32
    %72 = vector.broadcast %cst_59 : f32 to vector<4x352xf32>
    %c0_60 = arith.constant 0 : index
    %c0_61 = arith.constant 0 : index
    %73 = vector.load %arg11[%c0_60, %c0_61] : memref<4x506xf32, #tpu.memory_space<vmem>>, vector<4x358xf32>
    %74 = vector.extract_strided_slice %73 {offsets = [0, 0], sizes = [4, 352], strides = [1, 1]} : vector<4x358xf32> to vector<4x352xf32>
    %c0_62 = arith.constant 0 : index
    %c0_63 = arith.constant 0 : index
    %75 = vector.load %arg6[%c0_62, %c0_63] : memref<4x49xf32, #tpu.memory_space<vmem>>, vector<4x1xf32>
    %76 = vector.broadcast %75 : vector<4x1xf32> to vector<4x352xf32>
    %77 = arith.mulf %74, %76 : vector<4x352xf32>
    %78 = arith.addf %71, %77 : vector<4x352xf32>
    %79 = vector.extract_strided_slice %73 {offsets = [0, 1], sizes = [4, 352], strides = [1, 1]} : vector<4x358xf32> to vector<4x352xf32>
    %c0_64 = arith.constant 0 : index
    %c1 = arith.constant 1 : index
    %80 = vector.load %arg6[%c0_64, %c1] : memref<4x49xf32, #tpu.memory_space<vmem>>, vector<4x1xf32>
    %81 = vector.broadcast %80 : vector<4x1xf32> to vector<4x352xf32>
    %82 = arith.mulf %79, %81 : vector<4x352xf32>
    %83 = arith.addf %72, %82 : vector<4x352xf32>
    %84 = vector.extract_strided_slice %73 {offsets = [0, 2], sizes = [4, 352], strides = [1, 1]} : vector<4x358xf32> to vector<4x352xf32>
    %c0_65 = arith.constant 0 : index
    %c2 = arith.constant 2 : index
    %85 = vector.load %arg6[%c0_65, %c2] : memref<4x49xf32, #tpu.memory_space<vmem>>, vector<4x1xf32>
    %86 = vector.broadcast %85 : vector<4x1xf32> to vector<4x352xf32>
    %87 = arith.mulf %84, %86 : vector<4x352xf32>
    %88 = arith.addf %78, %87 : vector<4x352xf32>
    %89 = vector.extract_strided_slice %73 {offsets = [0, 3], sizes = [4, 352], strides = [1, 1]} : vector<4x358xf32> to vector<4x352xf32>
    %c0_66 = arith.constant 0 : index
    %c3 = arith.constant 3 : index
    %90 = vector.load %arg6[%c0_66, %c3] : memref<4x49xf32, #tpu.memory_space<vmem>>, vector<4x1xf32>
    %91 = vector.broadcast %90 : vector<4x1xf32> to vector<4x352xf32>
    %92 = arith.mulf %89, %91 : vector<4x352xf32>
    %93 = arith.addf %83, %92 : vector<4x352xf32>
    %94 = vector.extract_strided_slice %73 {offsets = [0, 4], sizes = [4, 352], strides = [1, 1]} : vector<4x358xf32> to vector<4x352xf32>
    %c0_67 = arith.constant 0 : index
    %c4 = arith.constant 4 : index
    %95 = vector.load %arg6[%c0_67, %c4] : memref<4x49xf32, #tpu.memory_space<vmem>>, vector<4x1xf32>
    %96 = vector.broadcast %95 : vector<4x1xf32> to vector<4x352xf32>
    %97 = arith.mulf %94, %96 : vector<4x352xf32>
    %98 = arith.addf %88, %97 : vector<4x352xf32>
    %99 = vector.extract_strided_slice %73 {offsets = [0, 5], sizes = [4, 352], strides = [1, 1]} : vector<4x358xf32> to vector<4x352xf32>
    %c0_68 = arith.constant 0 : index
    %c5 = arith.constant 5 : index
    %100 = vector.load %arg6[%c0_68, %c5] : memref<4x49xf32, #tpu.memory_space<vmem>>, vector<4x1xf32>
    %101 = vector.broadcast %100 : vector<4x1xf32> to vector<4x352xf32>
    %102 = arith.mulf %99, %101 : vector<4x352xf32>
    %103 = arith.addf %93, %102 : vector<4x352xf32>
    %104 = vector.extract_strided_slice %73 {offsets = [0, 6], sizes = [4, 352], strides = [1, 1]} : vector<4x358xf32> to vector<4x352xf32>
    %c0_69 = arith.constant 0 : index
    %c6 = arith.constant 6 : index
    %105 = vector.load %arg6[%c0_69, %c6] : memref<4x49xf32, #tpu.memory_space<vmem>>, vector<4x1xf32>
    %106 = vector.broadcast %105 : vector<4x1xf32> to vector<4x352xf32>
    %107 = arith.mulf %104, %106 : vector<4x352xf32>
    %108 = arith.addf %98, %107 : vector<4x352xf32>
    %c0_70 = arith.constant 0 : index
    %c22 = arith.constant 22 : index
    %109 = vector.load %arg11[%c0_70, %c22] : memref<4x506xf32, #tpu.memory_space<vmem>>, vector<4x358xf32>
    %110 = vector.extract_strided_slice %109 {offsets = [0, 0], sizes = [4, 352], strides = [1, 1]} : vector<4x358xf32> to vector<4x352xf32>
    %c0_71 = arith.constant 0 : index
    %c7 = arith.constant 7 : index
    %111 = vector.load %arg6[%c0_71, %c7] : memref<4x49xf32, #tpu.memory_space<vmem>>, vector<4x1xf32>
    %112 = vector.broadcast %111 : vector<4x1xf32> to vector<4x352xf32>
    %113 = arith.mulf %110, %112 : vector<4x352xf32>
    %114 = arith.addf %103, %113 : vector<4x352xf32>
    %115 = vector.extract_strided_slice %109 {offsets = [0, 1], sizes = [4, 352], strides = [1, 1]} : vector<4x358xf32> to vector<4x352xf32>
    %c0_72 = arith.constant 0 : index
    %c8 = arith.constant 8 : index
    %116 = vector.load %arg6[%c0_72, %c8] : memref<4x49xf32, #tpu.memory_space<vmem>>, vector<4x1xf32>
    %117 = vector.broadcast %116 : vector<4x1xf32> to vector<4x352xf32>
    %118 = arith.mulf %115, %117 : vector<4x352xf32>
    %119 = arith.addf %108, %118 : vector<4x352xf32>
    %120 = vector.extract_strided_slice %109 {offsets = [0, 2], sizes = [4, 352], strides = [1, 1]} : vector<4x358xf32> to vector<4x352xf32>
    %c0_73 = arith.constant 0 : index
    %c9 = arith.constant 9 : index
    %121 = vector.load %arg6[%c0_73, %c9] : memref<4x49xf32, #tpu.memory_space<vmem>>, vector<4x1xf32>
    %122 = vector.broadcast %121 : vector<4x1xf32> to vector<4x352xf32>
    %123 = arith.mulf %120, %122 : vector<4x352xf32>
    %124 = arith.addf %114, %123 : vector<4x352xf32>
    %125 = vector.extract_strided_slice %109 {offsets = [0, 3], sizes = [4, 352], strides = [1, 1]} : vector<4x358xf32> to vector<4x352xf32>
    %c0_74 = arith.constant 0 : index
    %c10 = arith.constant 10 : index
    %126 = vector.load %arg6[%c0_74, %c10] : memref<4x49xf32, #tpu.memory_space<vmem>>, vector<4x1xf32>
    %127 = vector.broadcast %126 : vector<4x1xf32> to vector<4x352xf32>
    %128 = arith.mulf %125, %127 : vector<4x352xf32>
    %129 = arith.addf %119, %128 : vector<4x352xf32>
    %130 = vector.extract_strided_slice %109 {offsets = [0, 4], sizes = [4, 352], strides = [1, 1]} : vector<4x358xf32> to vector<4x352xf32>
    %c0_75 = arith.constant 0 : index
    %c11 = arith.constant 11 : index
    %131 = vector.load %arg6[%c0_75, %c11] : memref<4x49xf32, #tpu.memory_space<vmem>>, vector<4x1xf32>
    %132 = vector.broadcast %131 : vector<4x1xf32> to vector<4x352xf32>
    %133 = arith.mulf %130, %132 : vector<4x352xf32>
    %134 = arith.addf %124, %133 : vector<4x352xf32>
    %135 = vector.extract_strided_slice %109 {offsets = [0, 5], sizes = [4, 352], strides = [1, 1]} : vector<4x358xf32> to vector<4x352xf32>
    %c0_76 = arith.constant 0 : index
    %c12 = arith.constant 12 : index
    %136 = vector.load %arg6[%c0_76, %c12] : memref<4x49xf32, #tpu.memory_space<vmem>>, vector<4x1xf32>
    %137 = vector.broadcast %136 : vector<4x1xf32> to vector<4x352xf32>
    %138 = arith.mulf %135, %137 : vector<4x352xf32>
    %139 = arith.addf %129, %138 : vector<4x352xf32>
    %140 = vector.extract_strided_slice %109 {offsets = [0, 6], sizes = [4, 352], strides = [1, 1]} : vector<4x358xf32> to vector<4x352xf32>
    %c0_77 = arith.constant 0 : index
    %c13 = arith.constant 13 : index
    %141 = vector.load %arg6[%c0_77, %c13] : memref<4x49xf32, #tpu.memory_space<vmem>>, vector<4x1xf32>
    %142 = vector.broadcast %141 : vector<4x1xf32> to vector<4x352xf32>
    %143 = arith.mulf %140, %142 : vector<4x352xf32>
    %144 = arith.addf %134, %143 : vector<4x352xf32>
    %c0_78 = arith.constant 0 : index
    %c44 = arith.constant 44 : index
    %145 = vector.load %arg11[%c0_78, %c44] : memref<4x506xf32, #tpu.memory_space<vmem>>, vector<4x358xf32>
    %146 = vector.extract_strided_slice %145 {offsets = [0, 0], sizes = [4, 352], strides = [1, 1]} : vector<4x358xf32> to vector<4x352xf32>
    %c0_79 = arith.constant 0 : index
    %c14 = arith.constant 14 : index
    %147 = vector.load %arg6[%c0_79, %c14] : memref<4x49xf32, #tpu.memory_space<vmem>>, vector<4x1xf32>
    %148 = vector.broadcast %147 : vector<4x1xf32> to vector<4x352xf32>
    %149 = arith.mulf %146, %148 : vector<4x352xf32>
    %150 = arith.addf %139, %149 : vector<4x352xf32>
    %151 = vector.extract_strided_slice %145 {offsets = [0, 1], sizes = [4, 352], strides = [1, 1]} : vector<4x358xf32> to vector<4x352xf32>
    %c0_80 = arith.constant 0 : index
    %c15 = arith.constant 15 : index
    %152 = vector.load %arg6[%c0_80, %c15] : memref<4x49xf32, #tpu.memory_space<vmem>>, vector<4x1xf32>
    %153 = vector.broadcast %152 : vector<4x1xf32> to vector<4x352xf32>
    %154 = arith.mulf %151, %153 : vector<4x352xf32>
    %155 = arith.addf %144, %154 : vector<4x352xf32>
    %156 = vector.extract_strided_slice %145 {offsets = [0, 2], sizes = [4, 352], strides = [1, 1]} : vector<4x358xf32> to vector<4x352xf32>
    %c0_81 = arith.constant 0 : index
    %c16_82 = arith.constant 16 : index
    %157 = vector.load %arg6[%c0_81, %c16_82] : memref<4x49xf32, #tpu.memory_space<vmem>>, vector<4x1xf32>
    %158 = vector.broadcast %157 : vector<4x1xf32> to vector<4x352xf32>
    %159 = arith.mulf %156, %158 : vector<4x352xf32>
    %160 = arith.addf %150, %159 : vector<4x352xf32>
    %161 = vector.extract_strided_slice %145 {offsets = [0, 3], sizes = [4, 352], strides = [1, 1]} : vector<4x358xf32> to vector<4x352xf32>
    %c0_83 = arith.constant 0 : index
    %c17 = arith.constant 17 : index
    %162 = vector.load %arg6[%c0_83, %c17] : memref<4x49xf32, #tpu.memory_space<vmem>>, vector<4x1xf32>
    %163 = vector.broadcast %162 : vector<4x1xf32> to vector<4x352xf32>
    %164 = arith.mulf %161, %163 : vector<4x352xf32>
    %165 = arith.addf %155, %164 : vector<4x352xf32>
    %166 = vector.extract_strided_slice %145 {offsets = [0, 4], sizes = [4, 352], strides = [1, 1]} : vector<4x358xf32> to vector<4x352xf32>
    %c0_84 = arith.constant 0 : index
    %c18 = arith.constant 18 : index
    %167 = vector.load %arg6[%c0_84, %c18] : memref<4x49xf32, #tpu.memory_space<vmem>>, vector<4x1xf32>
    %168 = vector.broadcast %167 : vector<4x1xf32> to vector<4x352xf32>
    %169 = arith.mulf %166, %168 : vector<4x352xf32>
    %170 = arith.addf %160, %169 : vector<4x352xf32>
    %171 = vector.extract_strided_slice %145 {offsets = [0, 5], sizes = [4, 352], strides = [1, 1]} : vector<4x358xf32> to vector<4x352xf32>
    %c0_85 = arith.constant 0 : index
    %c19 = arith.constant 19 : index
    %172 = vector.load %arg6[%c0_85, %c19] : memref<4x49xf32, #tpu.memory_space<vmem>>, vector<4x1xf32>
    %173 = vector.broadcast %172 : vector<4x1xf32> to vector<4x352xf32>
    %174 = arith.mulf %171, %173 : vector<4x352xf32>
    %175 = arith.addf %165, %174 : vector<4x352xf32>
    %176 = vector.extract_strided_slice %145 {offsets = [0, 6], sizes = [4, 352], strides = [1, 1]} : vector<4x358xf32> to vector<4x352xf32>
    %c0_86 = arith.constant 0 : index
    %c20 = arith.constant 20 : index
    %177 = vector.load %arg6[%c0_86, %c20] : memref<4x49xf32, #tpu.memory_space<vmem>>, vector<4x1xf32>
    %178 = vector.broadcast %177 : vector<4x1xf32> to vector<4x352xf32>
    %179 = arith.mulf %176, %178 : vector<4x352xf32>
    %180 = arith.addf %170, %179 : vector<4x352xf32>
    %c0_87 = arith.constant 0 : index
    %c66_88 = arith.constant 66 : index
    %181 = vector.load %arg11[%c0_87, %c66_88] : memref<4x506xf32, #tpu.memory_space<vmem>>, vector<4x358xf32>
    %182 = vector.extract_strided_slice %181 {offsets = [0, 0], sizes = [4, 352], strides = [1, 1]} : vector<4x358xf32> to vector<4x352xf32>
    %c0_89 = arith.constant 0 : index
    %c21 = arith.constant 21 : index
    %183 = vector.load %arg6[%c0_89, %c21] : memref<4x49xf32, #tpu.memory_space<vmem>>, vector<4x1xf32>
    %184 = vector.broadcast %183 : vector<4x1xf32> to vector<4x352xf32>
    %185 = arith.mulf %182, %184 : vector<4x352xf32>
    %186 = arith.addf %175, %185 : vector<4x352xf32>
    %187 = vector.extract_strided_slice %181 {offsets = [0, 1], sizes = [4, 352], strides = [1, 1]} : vector<4x358xf32> to vector<4x352xf32>
    %c0_90 = arith.constant 0 : index
    %c22_91 = arith.constant 22 : index
    %188 = vector.load %arg6[%c0_90, %c22_91] : memref<4x49xf32, #tpu.memory_space<vmem>>, vector<4x1xf32>
    %189 = vector.broadcast %188 : vector<4x1xf32> to vector<4x352xf32>
    %190 = arith.mulf %187, %189 : vector<4x352xf32>
    %191 = arith.addf %180, %190 : vector<4x352xf32>
    %192 = vector.extract_strided_slice %181 {offsets = [0, 2], sizes = [4, 352], strides = [1, 1]} : vector<4x358xf32> to vector<4x352xf32>
    %c0_92 = arith.constant 0 : index
    %c23 = arith.constant 23 : index
    %193 = vector.load %arg6[%c0_92, %c23] : memref<4x49xf32, #tpu.memory_space<vmem>>, vector<4x1xf32>
    %194 = vector.broadcast %193 : vector<4x1xf32> to vector<4x352xf32>
    %195 = arith.mulf %192, %194 : vector<4x352xf32>
    %196 = arith.addf %186, %195 : vector<4x352xf32>
    %197 = vector.extract_strided_slice %181 {offsets = [0, 3], sizes = [4, 352], strides = [1, 1]} : vector<4x358xf32> to vector<4x352xf32>
    %c0_93 = arith.constant 0 : index
    %c24 = arith.constant 24 : index
    %198 = vector.load %arg6[%c0_93, %c24] : memref<4x49xf32, #tpu.memory_space<vmem>>, vector<4x1xf32>
    %199 = vector.broadcast %198 : vector<4x1xf32> to vector<4x352xf32>
    %200 = arith.mulf %197, %199 : vector<4x352xf32>
    %201 = arith.addf %191, %200 : vector<4x352xf32>
    %202 = vector.extract_strided_slice %181 {offsets = [0, 4], sizes = [4, 352], strides = [1, 1]} : vector<4x358xf32> to vector<4x352xf32>
    %c0_94 = arith.constant 0 : index
    %c25 = arith.constant 25 : index
    %203 = vector.load %arg6[%c0_94, %c25] : memref<4x49xf32, #tpu.memory_space<vmem>>, vector<4x1xf32>
    %204 = vector.broadcast %203 : vector<4x1xf32> to vector<4x352xf32>
    %205 = arith.mulf %202, %204 : vector<4x352xf32>
    %206 = arith.addf %196, %205 : vector<4x352xf32>
    %207 = vector.extract_strided_slice %181 {offsets = [0, 5], sizes = [4, 352], strides = [1, 1]} : vector<4x358xf32> to vector<4x352xf32>
    %c0_95 = arith.constant 0 : index
    %c26 = arith.constant 26 : index
    %208 = vector.load %arg6[%c0_95, %c26] : memref<4x49xf32, #tpu.memory_space<vmem>>, vector<4x1xf32>
    %209 = vector.broadcast %208 : vector<4x1xf32> to vector<4x352xf32>
    %210 = arith.mulf %207, %209 : vector<4x352xf32>
    %211 = arith.addf %201, %210 : vector<4x352xf32>
    %212 = vector.extract_strided_slice %181 {offsets = [0, 6], sizes = [4, 352], strides = [1, 1]} : vector<4x358xf32> to vector<4x352xf32>
    %c0_96 = arith.constant 0 : index
    %c27 = arith.constant 27 : index
    %213 = vector.load %arg6[%c0_96, %c27] : memref<4x49xf32, #tpu.memory_space<vmem>>, vector<4x1xf32>
    %214 = vector.broadcast %213 : vector<4x1xf32> to vector<4x352xf32>
    %215 = arith.mulf %212, %214 : vector<4x352xf32>
    %216 = arith.addf %206, %215 : vector<4x352xf32>
    %c0_97 = arith.constant 0 : index
    %c88_98 = arith.constant 88 : index
    %217 = vector.load %arg11[%c0_97, %c88_98] : memref<4x506xf32, #tpu.memory_space<vmem>>, vector<4x358xf32>
    %218 = vector.extract_strided_slice %217 {offsets = [0, 0], sizes = [4, 352], strides = [1, 1]} : vector<4x358xf32> to vector<4x352xf32>
    %c0_99 = arith.constant 0 : index
    %c28 = arith.constant 28 : index
    %219 = vector.load %arg6[%c0_99, %c28] : memref<4x49xf32, #tpu.memory_space<vmem>>, vector<4x1xf32>
    %220 = vector.broadcast %219 : vector<4x1xf32> to vector<4x352xf32>
    %221 = arith.mulf %218, %220 : vector<4x352xf32>
    %222 = arith.addf %211, %221 : vector<4x352xf32>
    %223 = vector.extract_strided_slice %217 {offsets = [0, 1], sizes = [4, 352], strides = [1, 1]} : vector<4x358xf32> to vector<4x352xf32>
    %c0_100 = arith.constant 0 : index
    %c29 = arith.constant 29 : index
    %224 = vector.load %arg6[%c0_100, %c29] : memref<4x49xf32, #tpu.memory_space<vmem>>, vector<4x1xf32>
    %225 = vector.broadcast %224 : vector<4x1xf32> to vector<4x352xf32>
    %226 = arith.mulf %223, %225 : vector<4x352xf32>
    %227 = arith.addf %216, %226 : vector<4x352xf32>
    %228 = vector.extract_strided_slice %217 {offsets = [0, 2], sizes = [4, 352], strides = [1, 1]} : vector<4x358xf32> to vector<4x352xf32>
    %c0_101 = arith.constant 0 : index
    %c30 = arith.constant 30 : index
    %229 = vector.load %arg6[%c0_101, %c30] : memref<4x49xf32, #tpu.memory_space<vmem>>, vector<4x1xf32>
    %230 = vector.broadcast %229 : vector<4x1xf32> to vector<4x352xf32>
    %231 = arith.mulf %228, %230 : vector<4x352xf32>
    %232 = arith.addf %222, %231 : vector<4x352xf32>
    %233 = vector.extract_strided_slice %217 {offsets = [0, 3], sizes = [4, 352], strides = [1, 1]} : vector<4x358xf32> to vector<4x352xf32>
    %c0_102 = arith.constant 0 : index
    %c31 = arith.constant 31 : index
    %234 = vector.load %arg6[%c0_102, %c31] : memref<4x49xf32, #tpu.memory_space<vmem>>, vector<4x1xf32>
    %235 = vector.broadcast %234 : vector<4x1xf32> to vector<4x352xf32>
    %236 = arith.mulf %233, %235 : vector<4x352xf32>
    %237 = arith.addf %227, %236 : vector<4x352xf32>
    %238 = vector.extract_strided_slice %217 {offsets = [0, 4], sizes = [4, 352], strides = [1, 1]} : vector<4x358xf32> to vector<4x352xf32>
    %c0_103 = arith.constant 0 : index
    %c32_104 = arith.constant 32 : index
    %239 = vector.load %arg6[%c0_103, %c32_104] : memref<4x49xf32, #tpu.memory_space<vmem>>, vector<4x1xf32>
    %240 = vector.broadcast %239 : vector<4x1xf32> to vector<4x352xf32>
    %241 = arith.mulf %238, %240 : vector<4x352xf32>
    %242 = arith.addf %232, %241 : vector<4x352xf32>
    %243 = vector.extract_strided_slice %217 {offsets = [0, 5], sizes = [4, 352], strides = [1, 1]} : vector<4x358xf32> to vector<4x352xf32>
    %c0_105 = arith.constant 0 : index
    %c33 = arith.constant 33 : index
    %244 = vector.load %arg6[%c0_105, %c33] : memref<4x49xf32, #tpu.memory_space<vmem>>, vector<4x1xf32>
    %245 = vector.broadcast %244 : vector<4x1xf32> to vector<4x352xf32>
    %246 = arith.mulf %243, %245 : vector<4x352xf32>
    %247 = arith.addf %237, %246 : vector<4x352xf32>
    %248 = vector.extract_strided_slice %217 {offsets = [0, 6], sizes = [4, 352], strides = [1, 1]} : vector<4x358xf32> to vector<4x352xf32>
    %c0_106 = arith.constant 0 : index
    %c34 = arith.constant 34 : index
    %249 = vector.load %arg6[%c0_106, %c34] : memref<4x49xf32, #tpu.memory_space<vmem>>, vector<4x1xf32>
    %250 = vector.broadcast %249 : vector<4x1xf32> to vector<4x352xf32>
    %251 = arith.mulf %248, %250 : vector<4x352xf32>
    %252 = arith.addf %242, %251 : vector<4x352xf32>
    %c0_107 = arith.constant 0 : index
    %c110_108 = arith.constant 110 : index
    %253 = vector.load %arg11[%c0_107, %c110_108] : memref<4x506xf32, #tpu.memory_space<vmem>>, vector<4x358xf32>
    %254 = vector.extract_strided_slice %253 {offsets = [0, 0], sizes = [4, 352], strides = [1, 1]} : vector<4x358xf32> to vector<4x352xf32>
    %c0_109 = arith.constant 0 : index
    %c35 = arith.constant 35 : index
    %255 = vector.load %arg6[%c0_109, %c35] : memref<4x49xf32, #tpu.memory_space<vmem>>, vector<4x1xf32>
    %256 = vector.broadcast %255 : vector<4x1xf32> to vector<4x352xf32>
    %257 = arith.mulf %254, %256 : vector<4x352xf32>
    %258 = arith.addf %247, %257 : vector<4x352xf32>
    %259 = vector.extract_strided_slice %253 {offsets = [0, 1], sizes = [4, 352], strides = [1, 1]} : vector<4x358xf32> to vector<4x352xf32>
    %c0_110 = arith.constant 0 : index
    %c36 = arith.constant 36 : index
    %260 = vector.load %arg6[%c0_110, %c36] : memref<4x49xf32, #tpu.memory_space<vmem>>, vector<4x1xf32>
    %261 = vector.broadcast %260 : vector<4x1xf32> to vector<4x352xf32>
    %262 = arith.mulf %259, %261 : vector<4x352xf32>
    %263 = arith.addf %252, %262 : vector<4x352xf32>
    %264 = vector.extract_strided_slice %253 {offsets = [0, 2], sizes = [4, 352], strides = [1, 1]} : vector<4x358xf32> to vector<4x352xf32>
    %c0_111 = arith.constant 0 : index
    %c37 = arith.constant 37 : index
    %265 = vector.load %arg6[%c0_111, %c37] : memref<4x49xf32, #tpu.memory_space<vmem>>, vector<4x1xf32>
    %266 = vector.broadcast %265 : vector<4x1xf32> to vector<4x352xf32>
    %267 = arith.mulf %264, %266 : vector<4x352xf32>
    %268 = arith.addf %258, %267 : vector<4x352xf32>
    %269 = vector.extract_strided_slice %253 {offsets = [0, 3], sizes = [4, 352], strides = [1, 1]} : vector<4x358xf32> to vector<4x352xf32>
    %c0_112 = arith.constant 0 : index
    %c38 = arith.constant 38 : index
    %270 = vector.load %arg6[%c0_112, %c38] : memref<4x49xf32, #tpu.memory_space<vmem>>, vector<4x1xf32>
    %271 = vector.broadcast %270 : vector<4x1xf32> to vector<4x352xf32>
    %272 = arith.mulf %269, %271 : vector<4x352xf32>
    %273 = arith.addf %263, %272 : vector<4x352xf32>
    %274 = vector.extract_strided_slice %253 {offsets = [0, 4], sizes = [4, 352], strides = [1, 1]} : vector<4x358xf32> to vector<4x352xf32>
    %c0_113 = arith.constant 0 : index
    %c39 = arith.constant 39 : index
    %275 = vector.load %arg6[%c0_113, %c39] : memref<4x49xf32, #tpu.memory_space<vmem>>, vector<4x1xf32>
    %276 = vector.broadcast %275 : vector<4x1xf32> to vector<4x352xf32>
    %277 = arith.mulf %274, %276 : vector<4x352xf32>
    %278 = arith.addf %268, %277 : vector<4x352xf32>
    %279 = vector.extract_strided_slice %253 {offsets = [0, 5], sizes = [4, 352], strides = [1, 1]} : vector<4x358xf32> to vector<4x352xf32>
    %c0_114 = arith.constant 0 : index
    %c40 = arith.constant 40 : index
    %280 = vector.load %arg6[%c0_114, %c40] : memref<4x49xf32, #tpu.memory_space<vmem>>, vector<4x1xf32>
    %281 = vector.broadcast %280 : vector<4x1xf32> to vector<4x352xf32>
    %282 = arith.mulf %279, %281 : vector<4x352xf32>
    %283 = arith.addf %273, %282 : vector<4x352xf32>
    %284 = vector.extract_strided_slice %253 {offsets = [0, 6], sizes = [4, 352], strides = [1, 1]} : vector<4x358xf32> to vector<4x352xf32>
    %c0_115 = arith.constant 0 : index
    %c41 = arith.constant 41 : index
    %285 = vector.load %arg6[%c0_115, %c41] : memref<4x49xf32, #tpu.memory_space<vmem>>, vector<4x1xf32>
    %286 = vector.broadcast %285 : vector<4x1xf32> to vector<4x352xf32>
    %287 = arith.mulf %284, %286 : vector<4x352xf32>
    %288 = arith.addf %278, %287 : vector<4x352xf32>
    %c0_116 = arith.constant 0 : index
    %c132_117 = arith.constant 132 : index
    %289 = vector.load %arg11[%c0_116, %c132_117] : memref<4x506xf32, #tpu.memory_space<vmem>>, vector<4x358xf32>
    %290 = vector.extract_strided_slice %289 {offsets = [0, 0], sizes = [4, 352], strides = [1, 1]} : vector<4x358xf32> to vector<4x352xf32>
    %c0_118 = arith.constant 0 : index
    %c42 = arith.constant 42 : index
    %291 = vector.load %arg6[%c0_118, %c42] : memref<4x49xf32, #tpu.memory_space<vmem>>, vector<4x1xf32>
    %292 = vector.broadcast %291 : vector<4x1xf32> to vector<4x352xf32>
    %293 = arith.mulf %290, %292 : vector<4x352xf32>
    %294 = arith.addf %283, %293 : vector<4x352xf32>
    %295 = vector.extract_strided_slice %289 {offsets = [0, 1], sizes = [4, 352], strides = [1, 1]} : vector<4x358xf32> to vector<4x352xf32>
    %c0_119 = arith.constant 0 : index
    %c43 = arith.constant 43 : index
    %296 = vector.load %arg6[%c0_119, %c43] : memref<4x49xf32, #tpu.memory_space<vmem>>, vector<4x1xf32>
    %297 = vector.broadcast %296 : vector<4x1xf32> to vector<4x352xf32>
    %298 = arith.mulf %295, %297 : vector<4x352xf32>
    %299 = arith.addf %288, %298 : vector<4x352xf32>
    %300 = vector.extract_strided_slice %289 {offsets = [0, 2], sizes = [4, 352], strides = [1, 1]} : vector<4x358xf32> to vector<4x352xf32>
    %c0_120 = arith.constant 0 : index
    %c44_121 = arith.constant 44 : index
    %301 = vector.load %arg6[%c0_120, %c44_121] : memref<4x49xf32, #tpu.memory_space<vmem>>, vector<4x1xf32>
    %302 = vector.broadcast %301 : vector<4x1xf32> to vector<4x352xf32>
    %303 = arith.mulf %300, %302 : vector<4x352xf32>
    %304 = arith.addf %294, %303 : vector<4x352xf32>
    %305 = vector.extract_strided_slice %289 {offsets = [0, 3], sizes = [4, 352], strides = [1, 1]} : vector<4x358xf32> to vector<4x352xf32>
    %c0_122 = arith.constant 0 : index
    %c45 = arith.constant 45 : index
    %306 = vector.load %arg6[%c0_122, %c45] : memref<4x49xf32, #tpu.memory_space<vmem>>, vector<4x1xf32>
    %307 = vector.broadcast %306 : vector<4x1xf32> to vector<4x352xf32>
    %308 = arith.mulf %305, %307 : vector<4x352xf32>
    %309 = arith.addf %299, %308 : vector<4x352xf32>
    %310 = vector.extract_strided_slice %289 {offsets = [0, 4], sizes = [4, 352], strides = [1, 1]} : vector<4x358xf32> to vector<4x352xf32>
    %c0_123 = arith.constant 0 : index
    %c46 = arith.constant 46 : index
    %311 = vector.load %arg6[%c0_123, %c46] : memref<4x49xf32, #tpu.memory_space<vmem>>, vector<4x1xf32>
    %312 = vector.broadcast %311 : vector<4x1xf32> to vector<4x352xf32>
    %313 = arith.mulf %310, %312 : vector<4x352xf32>
    %314 = arith.addf %304, %313 : vector<4x352xf32>
    %315 = vector.extract_strided_slice %289 {offsets = [0, 5], sizes = [4, 352], strides = [1, 1]} : vector<4x358xf32> to vector<4x352xf32>
    %c0_124 = arith.constant 0 : index
    %c47 = arith.constant 47 : index
    %316 = vector.load %arg6[%c0_124, %c47] : memref<4x49xf32, #tpu.memory_space<vmem>>, vector<4x1xf32>
    %317 = vector.broadcast %316 : vector<4x1xf32> to vector<4x352xf32>
    %318 = arith.mulf %315, %317 : vector<4x352xf32>
    %319 = arith.addf %309, %318 : vector<4x352xf32>
    %320 = vector.extract_strided_slice %289 {offsets = [0, 6], sizes = [4, 352], strides = [1, 1]} : vector<4x358xf32> to vector<4x352xf32>
    %c0_125 = arith.constant 0 : index
    %c48_126 = arith.constant 48 : index
    %321 = vector.load %arg6[%c0_125, %c48_126] : memref<4x49xf32, #tpu.memory_space<vmem>>, vector<4x1xf32>
    %322 = vector.broadcast %321 : vector<4x1xf32> to vector<4x352xf32>
    %323 = arith.mulf %320, %322 : vector<4x352xf32>
    %324 = arith.addf %314, %323 : vector<4x352xf32>
    %325 = arith.addf %324, %319 : vector<4x352xf32>
    %c0_127 = arith.constant 0 : index
    %c0_128 = arith.constant 0 : index
    %326 = vector.load %arg7[%c0_127, %c0_128] : memref<4x1xf32, #tpu.memory_space<vmem>>, vector<4x1xf32>
    %327 = vector.broadcast %326 : vector<4x1xf32> to vector<4x352xf32>
    %328 = arith.addf %325, %327 : vector<4x352xf32>
    %c0_129 = arith.constant 0 : index
    %c0_130 = arith.constant 0 : index
    %329 = vector.load %arg3[%c0_129, %c0_130] : memref<32x1xf32, #tpu.memory_space<vmem>>, vector<32x1xf32>
    %c0_131 = arith.constant 0 : index
    %c0_132 = arith.constant 0 : index
    %330 = vector.load %arg5[%c0_131, %c0_132] : memref<4x1xf32, #tpu.memory_space<vmem>>, vector<4x1xf32>
    %331 = arith.truncf %328 : vector<4x352xf32> to vector<4x352xbf16>
    %c0_133 = arith.constant 0 : index
    %c0_134 = arith.constant 0 : index
    %332 = vector.load %arg2[%c0_133, %c0_134] : memref<32x4xbf16, #tpu.memory_space<vmem>>, vector<32x4xbf16>
    %cst_135 = arith.constant dense<0.000000e+00> : vector<32x352xf32>
    %333 = tpu.matmul %332, %331, %cst_135 {dimension_numbers = #tpu.dot_dimension_numbers<[1], [0], [0], [1], [0, 0, 1, 1], [], []>} : vector<32x4xbf16>, vector<4x352xbf16>, vector<32x352xf32> -> vector<32x352xf32>
    %334 = vector.broadcast %329 : vector<32x1xf32> to vector<32x352xf32>
    %335 = arith.addf %333, %334 : vector<32x352xf32>
    %336 = vector.extract_strided_slice %335 {offsets = [0, 0], sizes = [16, 352], strides = [1, 1]} : vector<32x352xf32> to vector<16x352xf32>
    %cst_136 = arith.constant 0.000000e+00 : f32
    %cst_137 = arith.constant 6.000000e+00 : f32
    %337 = vector.broadcast %cst_136 : f32 to vector<16x352xf32>
    %338 = arith.maximumf %337, %336 : vector<16x352xf32>
    %339 = vector.broadcast %cst_137 : f32 to vector<16x352xf32>
    %340 = arith.minimumf %339, %338 : vector<16x352xf32>
    %341 = vector.extract_strided_slice %335 {offsets = [16, 0], sizes = [16, 352], strides = [1, 1]} : vector<32x352xf32> to vector<16x352xf32>
    %342 = arith.mulf %340, %341 : vector<16x352xf32>
    %c0_138 = arith.constant 0 : index
    %c0_139 = arith.constant 0 : index
    %343 = vector.load %arg4[%c0_138, %c0_139] : memref<4x16xbf16, #tpu.memory_space<vmem>>, vector<4x16xbf16>
    %344 = arith.truncf %342 : vector<16x352xf32> to vector<16x352xbf16>
    %cst_140 = arith.constant dense<0.000000e+00> : vector<4x352xf32>
    %345 = tpu.matmul %343, %344, %cst_140 {dimension_numbers = #tpu.dot_dimension_numbers<[1], [0], [0], [1], [0, 0, 1, 1], [], []>} : vector<4x16xbf16>, vector<16x352xbf16>, vector<4x352xf32> -> vector<4x352xf32>
    %346 = vector.broadcast %330 : vector<4x1xf32> to vector<4x352xf32>
    %347 = arith.addf %345, %346 : vector<4x352xf32>
    %348 = vector.extract_strided_slice %347 {offsets = [0, 0], sizes = [4, 16], strides = [1, 1]} : vector<4x352xf32> to vector<4x16xf32>
    %349 = tpu.concatenate %0, %348, %0 in 1 : vector<4x3xf32>, vector<4x16xf32>, vector<4x3xf32> -> vector<4x22xf32>
    %c0_141 = arith.constant 0 : index
    %c66_142 = arith.constant 66 : index
    %350 = vector.load %arg12[%c0_141, %c66_142] : memref<4x506xf32, #tpu.memory_space<vmem>>, vector<4x22xf32>
    tpu.vector_store %arg12[%c0_141, %c66_142], %349 {strides = array<i32>} : memref<4x506xf32, #tpu.memory_space<vmem>>, vector<4x22xf32>,
    %351 = vector.extract_strided_slice %347 {offsets = [0, 22], sizes = [4, 16], strides = [1, 1]} : vector<4x352xf32> to vector<4x16xf32>
    %352 = tpu.concatenate %0, %351, %0 in 1 : vector<4x3xf32>, vector<4x16xf32>, vector<4x3xf32> -> vector<4x22xf32>
    %c0_143 = arith.constant 0 : index
    %c88_144 = arith.constant 88 : index
    %353 = vector.load %arg12[%c0_143, %c88_144] : memref<4x506xf32, #tpu.memory_space<vmem>>, vector<4x22xf32>
    tpu.vector_store %arg12[%c0_143, %c88_144], %352 {strides = array<i32>} : memref<4x506xf32, #tpu.memory_space<vmem>>, vector<4x22xf32>,
    %354 = vector.extract_strided_slice %347 {offsets = [0, 44], sizes = [4, 16], strides = [1, 1]} : vector<4x352xf32> to vector<4x16xf32>
    %355 = tpu.concatenate %0, %354, %0 in 1 : vector<4x3xf32>, vector<4x16xf32>, vector<4x3xf32> -> vector<4x22xf32>
    %c0_145 = arith.constant 0 : index
    %c110_146 = arith.constant 110 : index
    %356 = vector.load %arg12[%c0_145, %c110_146] : memref<4x506xf32, #tpu.memory_space<vmem>>, vector<4x22xf32>
    tpu.vector_store %arg12[%c0_145, %c110_146], %355 {strides = array<i32>} : memref<4x506xf32, #tpu.memory_space<vmem>>, vector<4x22xf32>,
    %357 = vector.extract_strided_slice %347 {offsets = [0, 66], sizes = [4, 16], strides = [1, 1]} : vector<4x352xf32> to vector<4x16xf32>
    %358 = tpu.concatenate %0, %357, %0 in 1 : vector<4x3xf32>, vector<4x16xf32>, vector<4x3xf32> -> vector<4x22xf32>
    %c0_147 = arith.constant 0 : index
    %c132_148 = arith.constant 132 : index
    %359 = vector.load %arg12[%c0_147, %c132_148] : memref<4x506xf32, #tpu.memory_space<vmem>>, vector<4x22xf32>
    tpu.vector_store %arg12[%c0_147, %c132_148], %358 {strides = array<i32>} : memref<4x506xf32, #tpu.memory_space<vmem>>, vector<4x22xf32>,
    %360 = vector.extract_strided_slice %347 {offsets = [0, 88], sizes = [4, 16], strides = [1, 1]} : vector<4x352xf32> to vector<4x16xf32>
    %361 = tpu.concatenate %0, %360, %0 in 1 : vector<4x3xf32>, vector<4x16xf32>, vector<4x3xf32> -> vector<4x22xf32>
    %c0_149 = arith.constant 0 : index
    %c154_150 = arith.constant 154 : index
    %362 = vector.load %arg12[%c0_149, %c154_150] : memref<4x506xf32, #tpu.memory_space<vmem>>, vector<4x22xf32>
    tpu.vector_store %arg12[%c0_149, %c154_150], %361 {strides = array<i32>} : memref<4x506xf32, #tpu.memory_space<vmem>>, vector<4x22xf32>,
    %363 = vector.extract_strided_slice %347 {offsets = [0, 110], sizes = [4, 16], strides = [1, 1]} : vector<4x352xf32> to vector<4x16xf32>
    %364 = tpu.concatenate %0, %363, %0 in 1 : vector<4x3xf32>, vector<4x16xf32>, vector<4x3xf32> -> vector<4x22xf32>
    %c0_151 = arith.constant 0 : index
    %c176_152 = arith.constant 176 : index
    %365 = vector.load %arg12[%c0_151, %c176_152] : memref<4x506xf32, #tpu.memory_space<vmem>>, vector<4x22xf32>
    tpu.vector_store %arg12[%c0_151, %c176_152], %364 {strides = array<i32>} : memref<4x506xf32, #tpu.memory_space<vmem>>, vector<4x22xf32>,
    %366 = vector.extract_strided_slice %347 {offsets = [0, 132], sizes = [4, 16], strides = [1, 1]} : vector<4x352xf32> to vector<4x16xf32>
    %367 = tpu.concatenate %0, %366, %0 in 1 : vector<4x3xf32>, vector<4x16xf32>, vector<4x3xf32> -> vector<4x22xf32>
    %c0_153 = arith.constant 0 : index
    %c198_154 = arith.constant 198 : index
    %368 = vector.load %arg12[%c0_153, %c198_154] : memref<4x506xf32, #tpu.memory_space<vmem>>, vector<4x22xf32>
    tpu.vector_store %arg12[%c0_153, %c198_154], %367 {strides = array<i32>} : memref<4x506xf32, #tpu.memory_space<vmem>>, vector<4x22xf32>,
    %369 = vector.extract_strided_slice %347 {offsets = [0, 154], sizes = [4, 16], strides = [1, 1]} : vector<4x352xf32> to vector<4x16xf32>
    %370 = tpu.concatenate %0, %369, %0 in 1 : vector<4x3xf32>, vector<4x16xf32>, vector<4x3xf32> -> vector<4x22xf32>
    %c0_155 = arith.constant 0 : index
    %c220_156 = arith.constant 220 : index
    %371 = vector.load %arg12[%c0_155, %c220_156] : memref<4x506xf32, #tpu.memory_space<vmem>>, vector<4x22xf32>
    tpu.vector_store %arg12[%c0_155, %c220_156], %370 {strides = array<i32>} : memref<4x506xf32, #tpu.memory_space<vmem>>, vector<4x22xf32>,
    %372 = vector.extract_strided_slice %347 {offsets = [0, 176], sizes = [4, 16], strides = [1, 1]} : vector<4x352xf32> to vector<4x16xf32>
    %373 = tpu.concatenate %0, %372, %0 in 1 : vector<4x3xf32>, vector<4x16xf32>, vector<4x3xf32> -> vector<4x22xf32>
    %c0_157 = arith.constant 0 : index
    %c242_158 = arith.constant 242 : index
    %374 = vector.load %arg12[%c0_157, %c242_158] : memref<4x506xf32, #tpu.memory_space<vmem>>, vector<4x22xf32>
    tpu.vector_store %arg12[%c0_157, %c242_158], %373 {strides = array<i32>} : memref<4x506xf32, #tpu.memory_space<vmem>>, vector<4x22xf32>,
    %375 = vector.extract_strided_slice %347 {offsets = [0, 198], sizes = [4, 16], strides = [1, 1]} : vector<4x352xf32> to vector<4x16xf32>
    %376 = tpu.concatenate %0, %375, %0 in 1 : vector<4x3xf32>, vector<4x16xf32>, vector<4x3xf32> -> vector<4x22xf32>
    %c0_159 = arith.constant 0 : index
    %c264_160 = arith.constant 264 : index
    %377 = vector.load %arg12[%c0_159, %c264_160] : memref<4x506xf32, #tpu.memory_space<vmem>>, vector<4x22xf32>
    tpu.vector_store %arg12[%c0_159, %c264_160], %376 {strides = array<i32>} : memref<4x506xf32, #tpu.memory_space<vmem>>, vector<4x22xf32>,
    %378 = vector.extract_strided_slice %347 {offsets = [0, 220], sizes = [4, 16], strides = [1, 1]} : vector<4x352xf32> to vector<4x16xf32>
    %379 = tpu.concatenate %0, %378, %0 in 1 : vector<4x3xf32>, vector<4x16xf32>, vector<4x3xf32> -> vector<4x22xf32>
    %c0_161 = arith.constant 0 : index
    %c286_162 = arith.constant 286 : index
    %380 = vector.load %arg12[%c0_161, %c286_162] : memref<4x506xf32, #tpu.memory_space<vmem>>, vector<4x22xf32>
    tpu.vector_store %arg12[%c0_161, %c286_162], %379 {strides = array<i32>} : memref<4x506xf32, #tpu.memory_space<vmem>>, vector<4x22xf32>,
    %381 = vector.extract_strided_slice %347 {offsets = [0, 242], sizes = [4, 16], strides = [1, 1]} : vector<4x352xf32> to vector<4x16xf32>
    %382 = tpu.concatenate %0, %381, %0 in 1 : vector<4x3xf32>, vector<4x16xf32>, vector<4x3xf32> -> vector<4x22xf32>
    %c0_163 = arith.constant 0 : index
    %c308_164 = arith.constant 308 : index
    %383 = vector.load %arg12[%c0_163, %c308_164] : memref<4x506xf32, #tpu.memory_space<vmem>>, vector<4x22xf32>
    tpu.vector_store %arg12[%c0_163, %c308_164], %382 {strides = array<i32>} : memref<4x506xf32, #tpu.memory_space<vmem>>, vector<4x22xf32>,
    %384 = vector.extract_strided_slice %347 {offsets = [0, 264], sizes = [4, 16], strides = [1, 1]} : vector<4x352xf32> to vector<4x16xf32>
    %385 = tpu.concatenate %0, %384, %0 in 1 : vector<4x3xf32>, vector<4x16xf32>, vector<4x3xf32> -> vector<4x22xf32>
    %c0_165 = arith.constant 0 : index
    %c330_166 = arith.constant 330 : index
    %386 = vector.load %arg12[%c0_165, %c330_166] : memref<4x506xf32, #tpu.memory_space<vmem>>, vector<4x22xf32>
    tpu.vector_store %arg12[%c0_165, %c330_166], %385 {strides = array<i32>} : memref<4x506xf32, #tpu.memory_space<vmem>>, vector<4x22xf32>,
    %387 = vector.extract_strided_slice %347 {offsets = [0, 286], sizes = [4, 16], strides = [1, 1]} : vector<4x352xf32> to vector<4x16xf32>
    %388 = tpu.concatenate %0, %387, %0 in 1 : vector<4x3xf32>, vector<4x16xf32>, vector<4x3xf32> -> vector<4x22xf32>
    %c0_167 = arith.constant 0 : index
    %c352_168 = arith.constant 352 : index
    %389 = vector.load %arg12[%c0_167, %c352_168] : memref<4x506xf32, #tpu.memory_space<vmem>>, vector<4x22xf32>
    tpu.vector_store %arg12[%c0_167, %c352_168], %388 {strides = array<i32>} : memref<4x506xf32, #tpu.memory_space<vmem>>, vector<4x22xf32>,
    %390 = vector.extract_strided_slice %347 {offsets = [0, 308], sizes = [4, 16], strides = [1, 1]} : vector<4x352xf32> to vector<4x16xf32>
    %391 = tpu.concatenate %0, %390, %0 in 1 : vector<4x3xf32>, vector<4x16xf32>, vector<4x3xf32> -> vector<4x22xf32>
    %c0_169 = arith.constant 0 : index
    %c374_170 = arith.constant 374 : index
    %392 = vector.load %arg12[%c0_169, %c374_170] : memref<4x506xf32, #tpu.memory_space<vmem>>, vector<4x22xf32>
    tpu.vector_store %arg12[%c0_169, %c374_170], %391 {strides = array<i32>} : memref<4x506xf32, #tpu.memory_space<vmem>>, vector<4x22xf32>,
    %393 = vector.extract_strided_slice %347 {offsets = [0, 330], sizes = [4, 16], strides = [1, 1]} : vector<4x352xf32> to vector<4x16xf32>
    %394 = tpu.concatenate %0, %393, %0 in 1 : vector<4x3xf32>, vector<4x16xf32>, vector<4x3xf32> -> vector<4x22xf32>
    %c0_171 = arith.constant 0 : index
    %c396_172 = arith.constant 396 : index
    %395 = vector.load %arg12[%c0_171, %c396_172] : memref<4x506xf32, #tpu.memory_space<vmem>>, vector<4x22xf32>
    tpu.vector_store %arg12[%c0_171, %c396_172], %394 {strides = array<i32>} : memref<4x506xf32, #tpu.memory_space<vmem>>, vector<4x22xf32>,
    %cst_173 = arith.constant 0.000000e+00 : f32
    %396 = vector.broadcast %cst_173 : f32 to vector<4x352xf32>
    %cst_174 = arith.constant 0.000000e+00 : f32
    %397 = vector.broadcast %cst_174 : f32 to vector<4x352xf32>
    %c0_175 = arith.constant 0 : index
    %c0_176 = arith.constant 0 : index
    %398 = vector.load %arg12[%c0_175, %c0_176] : memref<4x506xf32, #tpu.memory_space<vmem>>, vector<4x358xf32>
    %399 = vector.extract_strided_slice %398 {offsets = [0, 0], sizes = [4, 352], strides = [1, 1]} : vector<4x358xf32> to vector<4x352xf32>
    %c0_177 = arith.constant 0 : index
    %c0_178 = arith.constant 0 : index
    %400 = vector.load %arg8[%c0_177, %c0_178] : memref<4x49xf32, #tpu.memory_space<vmem>>, vector<4x1xf32>
    %401 = vector.broadcast %400 : vector<4x1xf32> to vector<4x352xf32>
    %402 = arith.mulf %399, %401 : vector<4x352xf32>
    %403 = arith.addf %396, %402 : vector<4x352xf32>
    %404 = vector.extract_strided_slice %398 {offsets = [0, 1], sizes = [4, 352], strides = [1, 1]} : vector<4x358xf32> to vector<4x352xf32>
    %c0_179 = arith.constant 0 : index
    %c1_180 = arith.constant 1 : index
    %405 = vector.load %arg8[%c0_179, %c1_180] : memref<4x49xf32, #tpu.memory_space<vmem>>, vector<4x1xf32>
    %406 = vector.broadcast %405 : vector<4x1xf32> to vector<4x352xf32>
    %407 = arith.mulf %404, %406 : vector<4x352xf32>
    %408 = arith.addf %397, %407 : vector<4x352xf32>
    %409 = vector.extract_strided_slice %398 {offsets = [0, 2], sizes = [4, 352], strides = [1, 1]} : vector<4x358xf32> to vector<4x352xf32>
    %c0_181 = arith.constant 0 : index
    %c2_182 = arith.constant 2 : index
    %410 = vector.load %arg8[%c0_181, %c2_182] : memref<4x49xf32, #tpu.memory_space<vmem>>, vector<4x1xf32>
    %411 = vector.broadcast %410 : vector<4x1xf32> to vector<4x352xf32>
    %412 = arith.mulf %409, %411 : vector<4x352xf32>
    %413 = arith.addf %403, %412 : vector<4x352xf32>
    %414 = vector.extract_strided_slice %398 {offsets = [0, 3], sizes = [4, 352], strides = [1, 1]} : vector<4x358xf32> to vector<4x352xf32>
    %c0_183 = arith.constant 0 : index
    %c3_184 = arith.constant 3 : index
    %415 = vector.load %arg8[%c0_183, %c3_184] : memref<4x49xf32, #tpu.memory_space<vmem>>, vector<4x1xf32>
    %416 = vector.broadcast %415 : vector<4x1xf32> to vector<4x352xf32>
    %417 = arith.mulf %414, %416 : vector<4x352xf32>
    %418 = arith.addf %408, %417 : vector<4x352xf32>
    %419 = vector.extract_strided_slice %398 {offsets = [0, 4], sizes = [4, 352], strides = [1, 1]} : vector<4x358xf32> to vector<4x352xf32>
    %c0_185 = arith.constant 0 : index
    %c4_186 = arith.constant 4 : index
    %420 = vector.load %arg8[%c0_185, %c4_186] : memref<4x49xf32, #tpu.memory_space<vmem>>, vector<4x1xf32>
    %421 = vector.broadcast %420 : vector<4x1xf32> to vector<4x352xf32>
    %422 = arith.mulf %419, %421 : vector<4x352xf32>
    %423 = arith.addf %413, %422 : vector<4x352xf32>
    %424 = vector.extract_strided_slice %398 {offsets = [0, 5], sizes = [4, 352], strides = [1, 1]} : vector<4x358xf32> to vector<4x352xf32>
    %c0_187 = arith.constant 0 : index
    %c5_188 = arith.constant 5 : index
    %425 = vector.load %arg8[%c0_187, %c5_188] : memref<4x49xf32, #tpu.memory_space<vmem>>, vector<4x1xf32>
    %426 = vector.broadcast %425 : vector<4x1xf32> to vector<4x352xf32>
    %427 = arith.mulf %424, %426 : vector<4x352xf32>
    %428 = arith.addf %418, %427 : vector<4x352xf32>
    %429 = vector.extract_strided_slice %398 {offsets = [0, 6], sizes = [4, 352], strides = [1, 1]} : vector<4x358xf32> to vector<4x352xf32>
    %c0_189 = arith.constant 0 : index
    %c6_190 = arith.constant 6 : index
    %430 = vector.load %arg8[%c0_189, %c6_190] : memref<4x49xf32, #tpu.memory_space<vmem>>, vector<4x1xf32>
    %431 = vector.broadcast %430 : vector<4x1xf32> to vector<4x352xf32>
    %432 = arith.mulf %429, %431 : vector<4x352xf32>
    %433 = arith.addf %423, %432 : vector<4x352xf32>
    %c0_191 = arith.constant 0 : index
    %c22_192 = arith.constant 22 : index
    %434 = vector.load %arg12[%c0_191, %c22_192] : memref<4x506xf32, #tpu.memory_space<vmem>>, vector<4x358xf32>
    %435 = vector.extract_strided_slice %434 {offsets = [0, 0], sizes = [4, 352], strides = [1, 1]} : vector<4x358xf32> to vector<4x352xf32>
    %c0_193 = arith.constant 0 : index
    %c7_194 = arith.constant 7 : index
    %436 = vector.load %arg8[%c0_193, %c7_194] : memref<4x49xf32, #tpu.memory_space<vmem>>, vector<4x1xf32>
    %437 = vector.broadcast %436 : vector<4x1xf32> to vector<4x352xf32>
    %438 = arith.mulf %435, %437 : vector<4x352xf32>
    %439 = arith.addf %428, %438 : vector<4x352xf32>
    %440 = vector.extract_strided_slice %434 {offsets = [0, 1], sizes = [4, 352], strides = [1, 1]} : vector<4x358xf32> to vector<4x352xf32>
    %c0_195 = arith.constant 0 : index
    %c8_196 = arith.constant 8 : index
    %441 = vector.load %arg8[%c0_195, %c8_196] : memref<4x49xf32, #tpu.memory_space<vmem>>, vector<4x1xf32>
    %442 = vector.broadcast %441 : vector<4x1xf32> to vector<4x352xf32>
    %443 = arith.mulf %440, %442 : vector<4x352xf32>
    %444 = arith.addf %433, %443 : vector<4x352xf32>
    %445 = vector.extract_strided_slice %434 {offsets = [0, 2], sizes = [4, 352], strides = [1, 1]} : vector<4x358xf32> to vector<4x352xf32>
    %c0_197 = arith.constant 0 : index
    %c9_198 = arith.constant 9 : index
    %446 = vector.load %arg8[%c0_197, %c9_198] : memref<4x49xf32, #tpu.memory_space<vmem>>, vector<4x1xf32>
    %447 = vector.broadcast %446 : vector<4x1xf32> to vector<4x352xf32>
    %448 = arith.mulf %445, %447 : vector<4x352xf32>
    %449 = arith.addf %439, %448 : vector<4x352xf32>
    %450 = vector.extract_strided_slice %434 {offsets = [0, 3], sizes = [4, 352], strides = [1, 1]} : vector<4x358xf32> to vector<4x352xf32>
    %c0_199 = arith.constant 0 : index
    %c10_200 = arith.constant 10 : index
    %451 = vector.load %arg8[%c0_199, %c10_200] : memref<4x49xf32, #tpu.memory_space<vmem>>, vector<4x1xf32>
    %452 = vector.broadcast %451 : vector<4x1xf32> to vector<4x352xf32>
    %453 = arith.mulf %450, %452 : vector<4x352xf32>
    %454 = arith.addf %444, %453 : vector<4x352xf32>
    %455 = vector.extract_strided_slice %434 {offsets = [0, 4], sizes = [4, 352], strides = [1, 1]} : vector<4x358xf32> to vector<4x352xf32>
    %c0_201 = arith.constant 0 : index
    %c11_202 = arith.constant 11 : index
    %456 = vector.load %arg8[%c0_201, %c11_202] : memref<4x49xf32, #tpu.memory_space<vmem>>, vector<4x1xf32>
    %457 = vector.broadcast %456 : vector<4x1xf32> to vector<4x352xf32>
    %458 = arith.mulf %455, %457 : vector<4x352xf32>
    %459 = arith.addf %449, %458 : vector<4x352xf32>
    %460 = vector.extract_strided_slice %434 {offsets = [0, 5], sizes = [4, 352], strides = [1, 1]} : vector<4x358xf32> to vector<4x352xf32>
    %c0_203 = arith.constant 0 : index
    %c12_204 = arith.constant 12 : index
    %461 = vector.load %arg8[%c0_203, %c12_204] : memref<4x49xf32, #tpu.memory_space<vmem>>, vector<4x1xf32>
    %462 = vector.broadcast %461 : vector<4x1xf32> to vector<4x352xf32>
    %463 = arith.mulf %460, %462 : vector<4x352xf32>
    %464 = arith.addf %454, %463 : vector<4x352xf32>
    %465 = vector.extract_strided_slice %434 {offsets = [0, 6], sizes = [4, 352], strides = [1, 1]} : vector<4x358xf32> to vector<4x352xf32>
    %c0_205 = arith.constant 0 : index
    %c13_206 = arith.constant 13 : index
    %466 = vector.load %arg8[%c0_205, %c13_206] : memref<4x49xf32, #tpu.memory_space<vmem>>, vector<4x1xf32>
    %467 = vector.broadcast %466 : vector<4x1xf32> to vector<4x352xf32>
    %468 = arith.mulf %465, %467 : vector<4x352xf32>
    %469 = arith.addf %459, %468 : vector<4x352xf32>
    %c0_207 = arith.constant 0 : index
    %c44_208 = arith.constant 44 : index
    %470 = vector.load %arg12[%c0_207, %c44_208] : memref<4x506xf32, #tpu.memory_space<vmem>>, vector<4x358xf32>
    %471 = vector.extract_strided_slice %470 {offsets = [0, 0], sizes = [4, 352], strides = [1, 1]} : vector<4x358xf32> to vector<4x352xf32>
    %c0_209 = arith.constant 0 : index
    %c14_210 = arith.constant 14 : index
    %472 = vector.load %arg8[%c0_209, %c14_210] : memref<4x49xf32, #tpu.memory_space<vmem>>, vector<4x1xf32>
    %473 = vector.broadcast %472 : vector<4x1xf32> to vector<4x352xf32>
    %474 = arith.mulf %471, %473 : vector<4x352xf32>
    %475 = arith.addf %464, %474 : vector<4x352xf32>
    %476 = vector.extract_strided_slice %470 {offsets = [0, 1], sizes = [4, 352], strides = [1, 1]} : vector<4x358xf32> to vector<4x352xf32>
    %c0_211 = arith.constant 0 : index
    %c15_212 = arith.constant 15 : index
    %477 = vector.load %arg8[%c0_211, %c15_212] : memref<4x49xf32, #tpu.memory_space<vmem>>, vector<4x1xf32>
    %478 = vector.broadcast %477 : vector<4x1xf32> to vector<4x352xf32>
    %479 = arith.mulf %476, %478 : vector<4x352xf32>
    %480 = arith.addf %469, %479 : vector<4x352xf32>
    %481 = vector.extract_strided_slice %470 {offsets = [0, 2], sizes = [4, 352], strides = [1, 1]} : vector<4x358xf32> to vector<4x352xf32>
    %c0_213 = arith.constant 0 : index
    %c16_214 = arith.constant 16 : index
    %482 = vector.load %arg8[%c0_213, %c16_214] : memref<4x49xf32, #tpu.memory_space<vmem>>, vector<4x1xf32>
    %483 = vector.broadcast %482 : vector<4x1xf32> to vector<4x352xf32>
    %484 = arith.mulf %481, %483 : vector<4x352xf32>
    %485 = arith.addf %475, %484 : vector<4x352xf32>
    %486 = vector.extract_strided_slice %470 {offsets = [0, 3], sizes = [4, 352], strides = [1, 1]} : vector<4x358xf32> to vector<4x352xf32>
    %c0_215 = arith.constant 0 : index
    %c17_216 = arith.constant 17 : index
    %487 = vector.load %arg8[%c0_215, %c17_216] : memref<4x49xf32, #tpu.memory_space<vmem>>, vector<4x1xf32>
    %488 = vector.broadcast %487 : vector<4x1xf32> to vector<4x352xf32>
    %489 = arith.mulf %486, %488 : vector<4x352xf32>
    %490 = arith.addf %480, %489 : vector<4x352xf32>
    %491 = vector.extract_strided_slice %470 {offsets = [0, 4], sizes = [4, 352], strides = [1, 1]} : vector<4x358xf32> to vector<4x352xf32>
    %c0_217 = arith.constant 0 : index
    %c18_218 = arith.constant 18 : index
    %492 = vector.load %arg8[%c0_217, %c18_218] : memref<4x49xf32, #tpu.memory_space<vmem>>, vector<4x1xf32>
    %493 = vector.broadcast %492 : vector<4x1xf32> to vector<4x352xf32>
    %494 = arith.mulf %491, %493 : vector<4x352xf32>
    %495 = arith.addf %485, %494 : vector<4x352xf32>
    %496 = vector.extract_strided_slice %470 {offsets = [0, 5], sizes = [4, 352], strides = [1, 1]} : vector<4x358xf32> to vector<4x352xf32>
    %c0_219 = arith.constant 0 : index
    %c19_220 = arith.constant 19 : index
    %497 = vector.load %arg8[%c0_219, %c19_220] : memref<4x49xf32, #tpu.memory_space<vmem>>, vector<4x1xf32>
    %498 = vector.broadcast %497 : vector<4x1xf32> to vector<4x352xf32>
    %499 = arith.mulf %496, %498 : vector<4x352xf32>
    %500 = arith.addf %490, %499 : vector<4x352xf32>
    %501 = vector.extract_strided_slice %470 {offsets = [0, 6], sizes = [4, 352], strides = [1, 1]} : vector<4x358xf32> to vector<4x352xf32>
    %c0_221 = arith.constant 0 : index
    %c20_222 = arith.constant 20 : index
    %502 = vector.load %arg8[%c0_221, %c20_222] : memref<4x49xf32, #tpu.memory_space<vmem>>, vector<4x1xf32>
    %503 = vector.broadcast %502 : vector<4x1xf32> to vector<4x352xf32>
    %504 = arith.mulf %501, %503 : vector<4x352xf32>
    %505 = arith.addf %495, %504 : vector<4x352xf32>
    %c0_223 = arith.constant 0 : index
    %c66_224 = arith.constant 66 : index
    %506 = vector.load %arg12[%c0_223, %c66_224] : memref<4x506xf32, #tpu.memory_space<vmem>>, vector<4x358xf32>
    %507 = vector.extract_strided_slice %506 {offsets = [0, 0], sizes = [4, 352], strides = [1, 1]} : vector<4x358xf32> to vector<4x352xf32>
    %c0_225 = arith.constant 0 : index
    %c21_226 = arith.constant 21 : index
    %508 = vector.load %arg8[%c0_225, %c21_226] : memref<4x49xf32, #tpu.memory_space<vmem>>, vector<4x1xf32>
    %509 = vector.broadcast %508 : vector<4x1xf32> to vector<4x352xf32>
    %510 = arith.mulf %507, %509 : vector<4x352xf32>
    %511 = arith.addf %500, %510 : vector<4x352xf32>
    %512 = vector.extract_strided_slice %506 {offsets = [0, 1], sizes = [4, 352], strides = [1, 1]} : vector<4x358xf32> to vector<4x352xf32>
    %c0_227 = arith.constant 0 : index
    %c22_228 = arith.constant 22 : index
    %513 = vector.load %arg8[%c0_227, %c22_228] : memref<4x49xf32, #tpu.memory_space<vmem>>, vector<4x1xf32>
    %514 = vector.broadcast %513 : vector<4x1xf32> to vector<4x352xf32>
    %515 = arith.mulf %512, %514 : vector<4x352xf32>
    %516 = arith.addf %505, %515 : vector<4x352xf32>
    %517 = vector.extract_strided_slice %506 {offsets = [0, 2], sizes = [4, 352], strides = [1, 1]} : vector<4x358xf32> to vector<4x352xf32>
    %c0_229 = arith.constant 0 : index
    %c23_230 = arith.constant 23 : index
    %518 = vector.load %arg8[%c0_229, %c23_230] : memref<4x49xf32, #tpu.memory_space<vmem>>, vector<4x1xf32>
    %519 = vector.broadcast %518 : vector<4x1xf32> to vector<4x352xf32>
    %520 = arith.mulf %517, %519 : vector<4x352xf32>
    %521 = arith.addf %511, %520 : vector<4x352xf32>
    %522 = vector.extract_strided_slice %506 {offsets = [0, 3], sizes = [4, 352], strides = [1, 1]} : vector<4x358xf32> to vector<4x352xf32>
    %c0_231 = arith.constant 0 : index
    %c24_232 = arith.constant 24 : index
    %523 = vector.load %arg8[%c0_231, %c24_232] : memref<4x49xf32, #tpu.memory_space<vmem>>, vector<4x1xf32>
    %524 = vector.broadcast %523 : vector<4x1xf32> to vector<4x352xf32>
    %525 = arith.mulf %522, %524 : vector<4x352xf32>
    %526 = arith.addf %516, %525 : vector<4x352xf32>
    %527 = vector.extract_strided_slice %506 {offsets = [0, 4], sizes = [4, 352], strides = [1, 1]} : vector<4x358xf32> to vector<4x352xf32>
    %c0_233 = arith.constant 0 : index
    %c25_234 = arith.constant 25 : index
    %528 = vector.load %arg8[%c0_233, %c25_234] : memref<4x49xf32, #tpu.memory_space<vmem>>, vector<4x1xf32>
    %529 = vector.broadcast %528 : vector<4x1xf32> to vector<4x352xf32>
    %530 = arith.mulf %527, %529 : vector<4x352xf32>
    %531 = arith.addf %521, %530 : vector<4x352xf32>
    %532 = vector.extract_strided_slice %506 {offsets = [0, 5], sizes = [4, 352], strides = [1, 1]} : vector<4x358xf32> to vector<4x352xf32>
    %c0_235 = arith.constant 0 : index
    %c26_236 = arith.constant 26 : index
    %533 = vector.load %arg8[%c0_235, %c26_236] : memref<4x49xf32, #tpu.memory_space<vmem>>, vector<4x1xf32>
    %534 = vector.broadcast %533 : vector<4x1xf32> to vector<4x352xf32>
    %535 = arith.mulf %532, %534 : vector<4x352xf32>
    %536 = arith.addf %526, %535 : vector<4x352xf32>
    %537 = vector.extract_strided_slice %506 {offsets = [0, 6], sizes = [4, 352], strides = [1, 1]} : vector<4x358xf32> to vector<4x352xf32>
    %c0_237 = arith.constant 0 : index
    %c27_238 = arith.constant 27 : index
    %538 = vector.load %arg8[%c0_237, %c27_238] : memref<4x49xf32, #tpu.memory_space<vmem>>, vector<4x1xf32>
    %539 = vector.broadcast %538 : vector<4x1xf32> to vector<4x352xf32>
    %540 = arith.mulf %537, %539 : vector<4x352xf32>
    %541 = arith.addf %531, %540 : vector<4x352xf32>
    %c0_239 = arith.constant 0 : index
    %c88_240 = arith.constant 88 : index
    %542 = vector.load %arg12[%c0_239, %c88_240] : memref<4x506xf32, #tpu.memory_space<vmem>>, vector<4x358xf32>
    %543 = vector.extract_strided_slice %542 {offsets = [0, 0], sizes = [4, 352], strides = [1, 1]} : vector<4x358xf32> to vector<4x352xf32>
    %c0_241 = arith.constant 0 : index
    %c28_242 = arith.constant 28 : index
    %544 = vector.load %arg8[%c0_241, %c28_242] : memref<4x49xf32, #tpu.memory_space<vmem>>, vector<4x1xf32>
    %545 = vector.broadcast %544 : vector<4x1xf32> to vector<4x352xf32>
    %546 = arith.mulf %543, %545 : vector<4x352xf32>
    %547 = arith.addf %536, %546 : vector<4x352xf32>
    %548 = vector.extract_strided_slice %542 {offsets = [0, 1], sizes = [4, 352], strides = [1, 1]} : vector<4x358xf32> to vector<4x352xf32>
    %c0_243 = arith.constant 0 : index
    %c29_244 = arith.constant 29 : index
    %549 = vector.load %arg8[%c0_243, %c29_244] : memref<4x49xf32, #tpu.memory_space<vmem>>, vector<4x1xf32>
    %550 = vector.broadcast %549 : vector<4x1xf32> to vector<4x352xf32>
    %551 = arith.mulf %548, %550 : vector<4x352xf32>
    %552 = arith.addf %541, %551 : vector<4x352xf32>
    %553 = vector.extract_strided_slice %542 {offsets = [0, 2], sizes = [4, 352], strides = [1, 1]} : vector<4x358xf32> to vector<4x352xf32>
    %c0_245 = arith.constant 0 : index
    %c30_246 = arith.constant 30 : index
    %554 = vector.load %arg8[%c0_245, %c30_246] : memref<4x49xf32, #tpu.memory_space<vmem>>, vector<4x1xf32>
    %555 = vector.broadcast %554 : vector<4x1xf32> to vector<4x352xf32>
    %556 = arith.mulf %553, %555 : vector<4x352xf32>
    %557 = arith.addf %547, %556 : vector<4x352xf32>
    %558 = vector.extract_strided_slice %542 {offsets = [0, 3], sizes = [4, 352], strides = [1, 1]} : vector<4x358xf32> to vector<4x352xf32>
    %c0_247 = arith.constant 0 : index
    %c31_248 = arith.constant 31 : index
    %559 = vector.load %arg8[%c0_247, %c31_248] : memref<4x49xf32, #tpu.memory_space<vmem>>, vector<4x1xf32>
    %560 = vector.broadcast %559 : vector<4x1xf32> to vector<4x352xf32>
    %561 = arith.mulf %558, %560 : vector<4x352xf32>
    %562 = arith.addf %552, %561 : vector<4x352xf32>
    %563 = vector.extract_strided_slice %542 {offsets = [0, 4], sizes = [4, 352], strides = [1, 1]} : vector<4x358xf32> to vector<4x352xf32>
    %c0_249 = arith.constant 0 : index
    %c32_250 = arith.constant 32 : index
    %564 = vector.load %arg8[%c0_249, %c32_250] : memref<4x49xf32, #tpu.memory_space<vmem>>, vector<4x1xf32>
    %565 = vector.broadcast %564 : vector<4x1xf32> to vector<4x352xf32>
    %566 = arith.mulf %563, %565 : vector<4x352xf32>
    %567 = arith.addf %557, %566 : vector<4x352xf32>
    %568 = vector.extract_strided_slice %542 {offsets = [0, 5], sizes = [4, 352], strides = [1, 1]} : vector<4x358xf32> to vector<4x352xf32>
    %c0_251 = arith.constant 0 : index
    %c33_252 = arith.constant 33 : index
    %569 = vector.load %arg8[%c0_251, %c33_252] : memref<4x49xf32, #tpu.memory_space<vmem>>, vector<4x1xf32>
    %570 = vector.broadcast %569 : vector<4x1xf32> to vector<4x352xf32>
    %571 = arith.mulf %568, %570 : vector<4x352xf32>
    %572 = arith.addf %562, %571 : vector<4x352xf32>
    %573 = vector.extract_strided_slice %542 {offsets = [0, 6], sizes = [4, 352], strides = [1, 1]} : vector<4x358xf32> to vector<4x352xf32>
    %c0_253 = arith.constant 0 : index
    %c34_254 = arith.constant 34 : index
    %574 = vector.load %arg8[%c0_253, %c34_254] : memref<4x49xf32, #tpu.memory_space<vmem>>, vector<4x1xf32>
    %575 = vector.broadcast %574 : vector<4x1xf32> to vector<4x352xf32>
    %576 = arith.mulf %573, %575 : vector<4x352xf32>
    %577 = arith.addf %567, %576 : vector<4x352xf32>
    %c0_255 = arith.constant 0 : index
    %c110_256 = arith.constant 110 : index
    %578 = vector.load %arg12[%c0_255, %c110_256] : memref<4x506xf32, #tpu.memory_space<vmem>>, vector<4x358xf32>
    %579 = vector.extract_strided_slice %578 {offsets = [0, 0], sizes = [4, 352], strides = [1, 1]} : vector<4x358xf32> to vector<4x352xf32>
    %c0_257 = arith.constant 0 : index
    %c35_258 = arith.constant 35 : index
    %580 = vector.load %arg8[%c0_257, %c35_258] : memref<4x49xf32, #tpu.memory_space<vmem>>, vector<4x1xf32>
    %581 = vector.broadcast %580 : vector<4x1xf32> to vector<4x352xf32>
    %582 = arith.mulf %579, %581 : vector<4x352xf32>
    %583 = arith.addf %572, %582 : vector<4x352xf32>
    %584 = vector.extract_strided_slice %578 {offsets = [0, 1], sizes = [4, 352], strides = [1, 1]} : vector<4x358xf32> to vector<4x352xf32>
    %c0_259 = arith.constant 0 : index
    %c36_260 = arith.constant 36 : index
    %585 = vector.load %arg8[%c0_259, %c36_260] : memref<4x49xf32, #tpu.memory_space<vmem>>, vector<4x1xf32>
    %586 = vector.broadcast %585 : vector<4x1xf32> to vector<4x352xf32>
    %587 = arith.mulf %584, %586 : vector<4x352xf32>
    %588 = arith.addf %577, %587 : vector<4x352xf32>
    %589 = vector.extract_strided_slice %578 {offsets = [0, 2], sizes = [4, 352], strides = [1, 1]} : vector<4x358xf32> to vector<4x352xf32>
    %c0_261 = arith.constant 0 : index
    %c37_262 = arith.constant 37 : index
    %590 = vector.load %arg8[%c0_261, %c37_262] : memref<4x49xf32, #tpu.memory_space<vmem>>, vector<4x1xf32>
    %591 = vector.broadcast %590 : vector<4x1xf32> to vector<4x352xf32>
    %592 = arith.mulf %589, %591 : vector<4x352xf32>
    %593 = arith.addf %583, %592 : vector<4x352xf32>
    %594 = vector.extract_strided_slice %578 {offsets = [0, 3], sizes = [4, 352], strides = [1, 1]} : vector<4x358xf32> to vector<4x352xf32>
    %c0_263 = arith.constant 0 : index
    %c38_264 = arith.constant 38 : index
    %595 = vector.load %arg8[%c0_263, %c38_264] : memref<4x49xf32, #tpu.memory_space<vmem>>, vector<4x1xf32>
    %596 = vector.broadcast %595 : vector<4x1xf32> to vector<4x352xf32>
    %597 = arith.mulf %594, %596 : vector<4x352xf32>
    %598 = arith.addf %588, %597 : vector<4x352xf32>
    %599 = vector.extract_strided_slice %578 {offsets = [0, 4], sizes = [4, 352], strides = [1, 1]} : vector<4x358xf32> to vector<4x352xf32>
    %c0_265 = arith.constant 0 : index
    %c39_266 = arith.constant 39 : index
    %600 = vector.load %arg8[%c0_265, %c39_266] : memref<4x49xf32, #tpu.memory_space<vmem>>, vector<4x1xf32>
    %601 = vector.broadcast %600 : vector<4x1xf32> to vector<4x352xf32>
    %602 = arith.mulf %599, %601 : vector<4x352xf32>
    %603 = arith.addf %593, %602 : vector<4x352xf32>
    %604 = vector.extract_strided_slice %578 {offsets = [0, 5], sizes = [4, 352], strides = [1, 1]} : vector<4x358xf32> to vector<4x352xf32>
    %c0_267 = arith.constant 0 : index
    %c40_268 = arith.constant 40 : index
    %605 = vector.load %arg8[%c0_267, %c40_268] : memref<4x49xf32, #tpu.memory_space<vmem>>, vector<4x1xf32>
    %606 = vector.broadcast %605 : vector<4x1xf32> to vector<4x352xf32>
    %607 = arith.mulf %604, %606 : vector<4x352xf32>
    %608 = arith.addf %598, %607 : vector<4x352xf32>
    %609 = vector.extract_strided_slice %578 {offsets = [0, 6], sizes = [4, 352], strides = [1, 1]} : vector<4x358xf32> to vector<4x352xf32>
    %c0_269 = arith.constant 0 : index
    %c41_270 = arith.constant 41 : index
    %610 = vector.load %arg8[%c0_269, %c41_270] : memref<4x49xf32, #tpu.memory_space<vmem>>, vector<4x1xf32>
    %611 = vector.broadcast %610 : vector<4x1xf32> to vector<4x352xf32>
    %612 = arith.mulf %609, %611 : vector<4x352xf32>
    %613 = arith.addf %603, %612 : vector<4x352xf32>
    %c0_271 = arith.constant 0 : index
    %c132_272 = arith.constant 132 : index
    %614 = vector.load %arg12[%c0_271, %c132_272] : memref<4x506xf32, #tpu.memory_space<vmem>>, vector<4x358xf32>
    %615 = vector.extract_strided_slice %614 {offsets = [0, 0], sizes = [4, 352], strides = [1, 1]} : vector<4x358xf32> to vector<4x352xf32>
    %c0_273 = arith.constant 0 : index
    %c42_274 = arith.constant 42 : index
    %616 = vector.load %arg8[%c0_273, %c42_274] : memref<4x49xf32, #tpu.memory_space<vmem>>, vector<4x1xf32>
    %617 = vector.broadcast %616 : vector<4x1xf32> to vector<4x352xf32>
    %618 = arith.mulf %615, %617 : vector<4x352xf32>
    %619 = arith.addf %608, %618 : vector<4x352xf32>
    %620 = vector.extract_strided_slice %614 {offsets = [0, 1], sizes = [4, 352], strides = [1, 1]} : vector<4x358xf32> to vector<4x352xf32>
    %c0_275 = arith.constant 0 : index
    %c43_276 = arith.constant 43 : index
    %621 = vector.load %arg8[%c0_275, %c43_276] : memref<4x49xf32, #tpu.memory_space<vmem>>, vector<4x1xf32>
    %622 = vector.broadcast %621 : vector<4x1xf32> to vector<4x352xf32>
    %623 = arith.mulf %620, %622 : vector<4x352xf32>
    %624 = arith.addf %613, %623 : vector<4x352xf32>
    %625 = vector.extract_strided_slice %614 {offsets = [0, 2], sizes = [4, 352], strides = [1, 1]} : vector<4x358xf32> to vector<4x352xf32>
    %c0_277 = arith.constant 0 : index
    %c44_278 = arith.constant 44 : index
    %626 = vector.load %arg8[%c0_277, %c44_278] : memref<4x49xf32, #tpu.memory_space<vmem>>, vector<4x1xf32>
    %627 = vector.broadcast %626 : vector<4x1xf32> to vector<4x352xf32>
    %628 = arith.mulf %625, %627 : vector<4x352xf32>
    %629 = arith.addf %619, %628 : vector<4x352xf32>
    %630 = vector.extract_strided_slice %614 {offsets = [0, 3], sizes = [4, 352], strides = [1, 1]} : vector<4x358xf32> to vector<4x352xf32>
    %c0_279 = arith.constant 0 : index
    %c45_280 = arith.constant 45 : index
    %631 = vector.load %arg8[%c0_279, %c45_280] : memref<4x49xf32, #tpu.memory_space<vmem>>, vector<4x1xf32>
    %632 = vector.broadcast %631 : vector<4x1xf32> to vector<4x352xf32>
    %633 = arith.mulf %630, %632 : vector<4x352xf32>
    %634 = arith.addf %624, %633 : vector<4x352xf32>
    %635 = vector.extract_strided_slice %614 {offsets = [0, 4], sizes = [4, 352], strides = [1, 1]} : vector<4x358xf32> to vector<4x352xf32>
    %c0_281 = arith.constant 0 : index
    %c46_282 = arith.constant 46 : index
    %636 = vector.load %arg8[%c0_281, %c46_282] : memref<4x49xf32, #tpu.memory_space<vmem>>, vector<4x1xf32>
    %637 = vector.broadcast %636 : vector<4x1xf32> to vector<4x352xf32>
    %638 = arith.mulf %635, %637 : vector<4x352xf32>
    %639 = arith.addf %629, %638 : vector<4x352xf32>
    %640 = vector.extract_strided_slice %614 {offsets = [0, 5], sizes = [4, 352], strides = [1, 1]} : vector<4x358xf32> to vector<4x352xf32>
    %c0_283 = arith.constant 0 : index
    %c47_284 = arith.constant 47 : index
    %641 = vector.load %arg8[%c0_283, %c47_284] : memref<4x49xf32, #tpu.memory_space<vmem>>, vector<4x1xf32>
    %642 = vector.broadcast %641 : vector<4x1xf32> to vector<4x352xf32>
    %643 = arith.mulf %640, %642 : vector<4x352xf32>
    %644 = arith.addf %634, %643 : vector<4x352xf32>
    %645 = vector.extract_strided_slice %614 {offsets = [0, 6], sizes = [4, 352], strides = [1, 1]} : vector<4x358xf32> to vector<4x352xf32>
    %c0_285 = arith.constant 0 : index
    %c48_286 = arith.constant 48 : index
    %646 = vector.load %arg8[%c0_285, %c48_286] : memref<4x49xf32, #tpu.memory_space<vmem>>, vector<4x1xf32>
    %647 = vector.broadcast %646 : vector<4x1xf32> to vector<4x352xf32>
    %648 = arith.mulf %645, %647 : vector<4x352xf32>
    %649 = arith.addf %639, %648 : vector<4x352xf32>
    %650 = arith.addf %649, %644 : vector<4x352xf32>
    %c0_287 = arith.constant 0 : index
    %c0_288 = arith.constant 0 : index
    %651 = vector.load %arg9[%c0_287, %c0_288] : memref<4x1xf32, #tpu.memory_space<vmem>>, vector<4x1xf32>
    %652 = vector.broadcast %651 : vector<4x1xf32> to vector<4x352xf32>
    %653 = arith.addf %650, %652 : vector<4x352xf32>
    %654 = vector.extract_strided_slice %653 {offsets = [0, 0], sizes = [4, 16], strides = [1, 1]} : vector<4x352xf32> to vector<4x16xf32>
    %655 = vector.extract_strided_slice %653 {offsets = [0, 22], sizes = [4, 16], strides = [1, 1]} : vector<4x352xf32> to vector<4x16xf32>
    %656 = vector.extract_strided_slice %653 {offsets = [0, 44], sizes = [4, 16], strides = [1, 1]} : vector<4x352xf32> to vector<4x16xf32>
    %657 = vector.extract_strided_slice %653 {offsets = [0, 66], sizes = [4, 16], strides = [1, 1]} : vector<4x352xf32> to vector<4x16xf32>
    %658 = vector.extract_strided_slice %653 {offsets = [0, 88], sizes = [4, 16], strides = [1, 1]} : vector<4x352xf32> to vector<4x16xf32>
    %659 = vector.extract_strided_slice %653 {offsets = [0, 110], sizes = [4, 16], strides = [1, 1]} : vector<4x352xf32> to vector<4x16xf32>
    %660 = vector.extract_strided_slice %653 {offsets = [0, 132], sizes = [4, 16], strides = [1, 1]} : vector<4x352xf32> to vector<4x16xf32>
    %661 = vector.extract_strided_slice %653 {offsets = [0, 154], sizes = [4, 16], strides = [1, 1]} : vector<4x352xf32> to vector<4x16xf32>
    %662 = vector.extract_strided_slice %653 {offsets = [0, 176], sizes = [4, 16], strides = [1, 1]} : vector<4x352xf32> to vector<4x16xf32>
    %663 = vector.extract_strided_slice %653 {offsets = [0, 198], sizes = [4, 16], strides = [1, 1]} : vector<4x352xf32> to vector<4x16xf32>
    %664 = vector.extract_strided_slice %653 {offsets = [0, 220], sizes = [4, 16], strides = [1, 1]} : vector<4x352xf32> to vector<4x16xf32>
    %665 = vector.extract_strided_slice %653 {offsets = [0, 242], sizes = [4, 16], strides = [1, 1]} : vector<4x352xf32> to vector<4x16xf32>
    %666 = vector.extract_strided_slice %653 {offsets = [0, 264], sizes = [4, 16], strides = [1, 1]} : vector<4x352xf32> to vector<4x16xf32>
    %667 = vector.extract_strided_slice %653 {offsets = [0, 286], sizes = [4, 16], strides = [1, 1]} : vector<4x352xf32> to vector<4x16xf32>
    %668 = vector.extract_strided_slice %653 {offsets = [0, 308], sizes = [4, 16], strides = [1, 1]} : vector<4x352xf32> to vector<4x16xf32>
    %669 = vector.extract_strided_slice %653 {offsets = [0, 330], sizes = [4, 16], strides = [1, 1]} : vector<4x352xf32> to vector<4x16xf32>
    %670 = tpu.concatenate %654, %655, %656, %657, %658, %659, %660, %661, %662, %663, %664, %665, %666, %667, %668, %669 in 1 : vector<4x16xf32>, vector<4x16xf32>, vector<4x16xf32>, vector<4x16xf32>, vector<4x16xf32>, vector<4x16xf32>, vector<4x16xf32>, vector<4x16xf32>, vector<4x16xf32>, vector<4x16xf32>, vector<4x16xf32>, vector<4x16xf32>, vector<4x16xf32>, vector<4x16xf32>, vector<4x16xf32>, vector<4x16xf32> -> vector<4x256xf32>
    %c0_289 = arith.constant 0 : index
    %c0_290 = arith.constant 0 : index
    %c0_291 = arith.constant 0 : index
    %671 = vector.load %arg1[%c0_289, %c0_290, %c0_291] : memref<1x4x256xf32, #tpu.memory_space<vmem>>, vector<1x4x256xf32>
    %672 = vector.shape_cast %671 : vector<1x4x256xf32> to vector<4x256xf32>
    %673 = arith.addf %672, %670 : vector<4x256xf32>
    %c0_292 = arith.constant 0 : index
    %c0_293 = arith.constant 0 : index
    %c0_294 = arith.constant 0 : index
    %674 = vector.load %arg10[%c0_292, %c0_293, %c0_294] : memref<1x4x256xf32, #tpu.memory_space<vmem>>, vector<1x4x256xf32>
    %675 = vector.shape_cast %674 : vector<1x4x256xf32> to vector<4x256xf32>
    %676 = vector.shape_cast %673 : vector<4x256xf32> to vector<1x4x256xf32>
    tpu.vector_store %arg10[%c0_292, %c0_293, %c0_294], %676 {strides = array<i32>} : memref<1x4x256xf32, #tpu.memory_space<vmem>>, vector<1x4x256xf32>,
    return
  }
  func.func @transform_0(%arg0: i32) -> (i32, i32, i32) {
    %c0_i32 = arith.constant 0 : i32
    %c0_i32_0 = arith.constant 0 : i32
    %c0_i32_1 = arith.constant 0 : i32
    return %arg0, %c0_i32, %c0_i32_0 : i32, i32, i32
  }
  func.func @transform_1(%arg0: i32) -> (i32, i32) {
    %c0_i32 = arith.constant 0 : i32
    %c0_i32_0 = arith.constant 0 : i32
    %c0_i32_1 = arith.constant 0 : i32
    return %c0_i32, %c0_i32_0 : i32, i32
  }
  func.func @transform_2(%arg0: i32) -> (i32, i32) {
    %c0_i32 = arith.constant 0 : i32
    %c0_i32_0 = arith.constant 0 : i32
    %c0_i32_1 = arith.constant 0 : i32
    return %c0_i32, %c0_i32_0 : i32, i32
  }
  func.func @transform_3(%arg0: i32) -> (i32, i32) {
    %c0_i32 = arith.constant 0 : i32
    %c0_i32_0 = arith.constant 0 : i32
    %c0_i32_1 = arith.constant 0 : i32
    return %c0_i32, %c0_i32_0 : i32, i32
  }
  func.func @transform_4(%arg0: i32) -> (i32, i32) {
    %c0_i32 = arith.constant 0 : i32
    %c0_i32_0 = arith.constant 0 : i32
    %c0_i32_1 = arith.constant 0 : i32
    return %c0_i32, %c0_i32_0 : i32, i32
  }
  func.func @transform_5(%arg0: i32) -> (i32, i32) {
    %c0_i32 = arith.constant 0 : i32
    %c0_i32_0 = arith.constant 0 : i32
    %c0_i32_1 = arith.constant 0 : i32
    return %c0_i32, %c0_i32_0 : i32, i32
  }
  func.func @transform_6(%arg0: i32) -> (i32, i32) {
    %c0_i32 = arith.constant 0 : i32
    %c0_i32_0 = arith.constant 0 : i32
    %c0_i32_1 = arith.constant 0 : i32
    return %c0_i32, %c0_i32_0 : i32, i32
  }
  func.func @transform_7(%arg0: i32) -> (i32, i32) {
    %c0_i32 = arith.constant 0 : i32
    %c0_i32_0 = arith.constant 0 : i32
    %c0_i32_1 = arith.constant 0 : i32
    return %c0_i32, %c0_i32_0 : i32, i32
  }
  func.func @transform_8(%arg0: i32) -> (i32, i32) {
    %c0_i32 = arith.constant 0 : i32
    %c0_i32_0 = arith.constant 0 : i32
    %c0_i32_1 = arith.constant 0 : i32
    return %c0_i32, %c0_i32_0 : i32, i32
  }
  func.func @transform_9(%arg0: i32) -> (i32, i32, i32) {
    %c0_i32 = arith.constant 0 : i32
    %c0_i32_0 = arith.constant 0 : i32
    %c0_i32_1 = arith.constant 0 : i32
    return %arg0, %c0_i32, %c0_i32_0 : i32, i32, i32
  }
}

</mosaic_0001>

<llo_original>
// kernel: tpu_custom_call.1
$region0: #{tpu_custom_call.1}
  #allocation0 [shape = 'u32[]', space=smem, size = 0x4, offset = 0x4, fixed_abs, tag = 'smem constant byte address 0x4 - core index']
  #allocation1 [shape = 'u32[144,128]{1,0:T(1,128)}', space=vmem, size = 0x12000, scoped, tag = 'internal scratch']
  #allocation2 [shape = 'f32[4,506]{1,0:T(4,128)}', space=vmem, size = 0x2000, scoped, tag = 'scratch operand']
  #allocation3 [shape = 'f32[4,506]{1,0:T(4,128)}', space=vmem, size = 0x2000, scoped, tag = 'scratch operand']
  %s0 = inlined_call_operand.vmem [shape: f32[2,4,256], index: 0, kind: input, shape index: {}]
  %s1 = inlined_call_operand.vmem [shape: bf16[32,4], index: 1, kind: input, shape index: {}]
  %s2 = inlined_call_operand.vmem [shape: f32[32,1], index: 2, kind: input, shape index: {}]
  %s3 = inlined_call_operand.vmem [shape: bf16[4,16], index: 3, kind: input, shape index: {}]
  %s4 = inlined_call_operand.vmem [shape: f32[4,1], index: 4, kind: input, shape index: {}]
  %s5 = inlined_call_operand.vmem [shape: f32[4,49], index: 5, kind: input, shape index: {}]
  %s6 = inlined_call_operand.vmem [shape: f32[4,1], index: 6, kind: input, shape index: {}]
  %s7 = inlined_call_operand.vmem [shape: f32[4,49], index: 7, kind: input, shape index: {}]
  %s8 = inlined_call_operand.vmem [shape: f32[4,1], index: 8, kind: input, shape index: {}]
  %s9 = inlined_call_operand.hbm [shape: f32[2,4,256], index: 9, kind: output, shape index: {}]
  %s10 = sld [smem:[#allocation0]]
  $region69: #{tpu_custom_call.1} parent=0
    _
  %s12 = ssub.s32 1, %s10
  %s13 = scalar_select 0, %s12, %s10
  $region1: #{tpu_custom_call.1} parent=0
    #allocation4 [shape = 'u8[8192]{0}', space=vmem, size = 0x2000, scoped, tag = 'output window, operand 0']
    #allocation5 [shape = 's32[2]{0}', space=sflag, size = 0x8, scoped, tag = 'scoped memory for tpu_custom_call.1']
    %14 = vsyncpa [#allocation5], 0
    %s15 = scalar_lea.sflag [#allocation5], 1
    %16 = vsyncpa %s15, 0
    loop: start=0, step=1, limit=4
    $region2: #{tpu_custom_call.1} parent=1 // loop_pre_header
      _
    $region3: #{tpu_custom_call.1} parent=1 // loop_header
      %s18 = sphi 0, %s22
      %p19 = scmp.ge.s32.totalorder %s18, 4
      %s28 = sphi 0, %s30
      %s31 = sphi 0, %s28
      %s32 = sphi 0, %s31
      %s48 = sphi 0, %s32
      %s52 = sphi 0, %s52
      %s54 = sphi 0, %s52
      %s55 = sphi 0, %s54
      %s69 = sphi 0, %s55
      %s73 = sphi 0, %s73
      %s75 = sphi 0, %s73
      %s76 = sphi 0, %s75
      %s90 = sphi 0, %s76
      %s94 = sphi 0, %s94
      %s96 = sphi 0, %s94
      %s97 = sphi 0, %s96
      %s111 = sphi 0, %s97
      %s115 = sphi 0, %s115
      %s117 = sphi 0, %s115
      %s118 = sphi 0, %s117
      %s132 = sphi 0, %s118
      %s136 = sphi 0, %s136
      %s138 = sphi 0, %s136
      %s139 = sphi 0, %s138
      %s153 = sphi 0, %s139
      %s157 = sphi 0, %s157
      %s159 = sphi 0, %s157
      %s160 = sphi 0, %s159
      %s174 = sphi 0, %s160
      %s178 = sphi 0, %s178
      %s180 = sphi 0, %s178
      %s181 = sphi 0, %s180
      %s195 = sphi 0, %s181
      %s199 = sphi 0, %s199
      %s201 = sphi 0, %s199
      %s202 = sphi 0, %s201
      %s216 = sphi 0, %s202
      %s222 = sphi 0, %s224
      %s225 = sphi 0, %s222
      %s226 = sphi 0, %s225
      %s242 = sphi 0, %s226
    $region4: #{tpu_custom_call.1} parent=1 // loop_header_branch
      %21 = sbr.rel (%p19) target = $region8
    $region5: #{tpu_custom_call.1} parent=1 // loop_body
      %s23 = ssub.s32 %s18, 1
      %s24 = ssub.s32 %s18, 2
      %s25 = sadd.s32 %s18, 1
      %s26 = ssub.s32 %s18, %s25
      %p27 = scmp.eq.s32.totalorder %s26, 0
      %s29 = sadd.s32 %s28, 1
      %s30 = scalar_select %p27, %s28, %s29
      %p33 = pneg %p27
      %p34 = scmp.eq.s32.totalorder %s18, 1
      %p35 = por %p33, %p34
      %p36 = scmp.ne.s32.totalorder %s28, %s31
      %p37 = scmp.eq.s32.totalorder %s18, 0
      %p38 = por %p36, %p37
      %p39 = scmp.ne.s32.totalorder %s28, %s31
      %p40 = scmp.eq.s32.totalorder %s23, 1
      %p41 = por %p39, %p40
      %p42 = scmp.ne.s32.totalorder %s31, %s32
      %p43 = scmp.eq.s32.totalorder %s23, 0
      %p44 = por %p42, %p43
      %p45 = scmp.ne.s32.totalorder %s31, %s32
      %p46 = scmp.eq.s32.totalorder %s24, 1
      %p47 = por %p45, %p46
      %p49 = scmp.ne.s32.totalorder %s32, %s48
      %p50 = scmp.eq.s32.totalorder %s24, 0
      %p51 = por %p49, %p50
      %s53 = sadd.s32 %s52, 1
      %p56 = scmp.eq.s32.totalorder %s18, 1
      %p57 = scmp.ne.s32.totalorder %s52, %s54
      %p58 = scmp.eq.s32.totalorder %s18, 0
      %p59 = por %p57, %p58
      %p60 = scmp.ne.s32.totalorder %s52, %s54
      %p61 = scmp.eq.s32.totalorder %s23, 1
      %p62 = por %p60, %p61
      %p63 = scmp.ne.s32.totalorder %s54, %s55
      %p64 = scmp.eq.s32.totalorder %s23, 0
      %p65 = por %p63, %p64
      %p66 = scmp.ne.s32.totalorder %s54, %s55
      %p67 = scmp.eq.s32.totalorder %s24, 1
      %p68 = por %p66, %p67
      %p70 = scmp.ne.s32.totalorder %s55, %s69
      %p71 = scmp.eq.s32.totalorder %s24, 0
      %p72 = por %p70, %p71
      %s74 = sadd.s32 %s73, 1
      %p77 = scmp.eq.s32.totalorder %s18, 1
      %p78 = scmp.ne.s32.totalorder %s73, %s75
      %p79 = scmp.eq.s32.totalorder %s18, 0
      %p80 = por %p78, %p79
      %p81 = scmp.ne.s32.totalorder %s73, %s75
      %p82 = scmp.eq.s32.totalorder %s23, 1
      %p83 = por %p81, %p82
      %p84 = scmp.ne.s32.totalorder %s75, %s76
      %p85 = scmp.eq.s32.totalorder %s23, 0
      %p86 = por %p84, %p85
      %p87 = scmp.ne.s32.totalorder %s75, %s76
      %p88 = scmp.eq.s32.totalorder %s24, 1
      %p89 = por %p87, %p88
      %p91 = scmp.ne.s32.totalorder %s76, %s90
      %p92 = scmp.eq.s32.totalorder %s24, 0
      %p93 = por %p91, %p92
      %s95 = sadd.s32 %s94, 1
      %p98 = scmp.eq.s32.totalorder %s18, 1
      %p99 = scmp.ne.s32.totalorder %s94, %s96
      %p100 = scmp.eq.s32.totalorder %s18, 0
      %p101 = por %p99, %p100
      %p102 = scmp.ne.s32.totalorder %s94, %s96
      %p103 = scmp.eq.s32.totalorder %s23, 1
      %p104 = por %p102, %p103
      %p105 = scmp.ne.s32.totalorder %s96, %s97
      %p106 = scmp.eq.s32.totalorder %s23, 0
      %p107 = por %p105, %p106
      %p108 = scmp.ne.s32.totalorder %s96, %s97
      %p109 = scmp.eq.s32.totalorder %s24, 1
      %p110 = por %p108, %p109
      %p112 = scmp.ne.s32.totalorder %s97, %s111
      %p113 = scmp.eq.s32.totalorder %s24, 0
      %p114 = por %p112, %p113
      %s116 = sadd.s32 %s115, 1
      %p119 = scmp.eq.s32.totalorder %s18, 1
      %p120 = scmp.ne.s32.totalorder %s115, %s117
      %p121 = scmp.eq.s32.totalorder %s18, 0
      %p122 = por %p120, %p121
      %p123 = scmp.ne.s32.totalorder %s115, %s117
      %p124 = scmp.eq.s32.totalorder %s23, 1
      %p125 = por %p123, %p124
      %p126 = scmp.ne.s32.totalorder %s117, %s118
      %p127 = scmp.eq.s32.totalorder %s23, 0
      %p128 = por %p126, %p127
      %p129 = scmp.ne.s32.totalorder %s117, %s118
      %p130 = scmp.eq.s32.totalorder %s24, 1
      %p131 = por %p129, %p130
      %p133 = scmp.ne.s32.totalorder %s118, %s132
      %p134 = scmp.eq.s32.totalorder %s24, 0
      %p135 = por %p133, %p134
      %s137 = sadd.s32 %s136, 1
      %p140 = scmp.eq.s32.totalorder %s18, 1
      %p141 = scmp.ne.s32.totalorder %s136, %s138
      %p142 = scmp.eq.s32.totalorder %s18, 0
      %p143 = por %p141, %p142
      %p144 = scmp.ne.s32.totalorder %s136, %s138
      %p145 = scmp.eq.s32.totalorder %s23, 1
      %p146 = por %p144, %p145
      %p147 = scmp.ne.s32.totalorder %s138, %s139
      %p148 = scmp.eq.s32.totalorder %s23, 0
      %p149 = por %p147, %p148
      %p150 = scmp.ne.s32.totalorder %s138, %s139
      %p151 = scmp.eq.s32.totalorder %s24, 1
      %p152 = por %p150, %p151
      %p154 = scmp.ne.s32.totalorder %s139, %s153
      %p155 = scmp.eq.s32.totalorder %s24, 0
      %p156 = por %p154, %p155
      %s158 = sadd.s32 %s157, 1
      %p161 = scmp.eq.s32.totalorder %s18, 1
      %p162 = scmp.ne.s32.totalorder %s157, %s159
      %p163 = scmp.eq.s32.totalorder %s18, 0
      %p164 = por %p162, %p163
      %p165 = scmp.ne.s32.totalorder %s157, %s159
      %p166 = scmp.eq.s32.totalorder %s23, 1
      %p167 = por %p165, %p166
      %p168 = scmp.ne.s32.totalorder %s159, %s160
      %p169 = scmp.eq.s32.totalorder %s23, 0
      %p170 = por %p168, %p169
      %p171 = scmp.ne.s32.totalorder %s159, %s160
      %p172 = scmp.eq.s32.totalorder %s24, 1
      %p173 = por %p171, %p172
      %p175 = scmp.ne.s32.totalorder %s160, %s174
      %p176 = scmp.eq.s32.totalorder %s24, 0
      %p177 = por %p175, %p176
      %s179 = sadd.s32 %s178, 1
      %p182 = scmp.eq.s32.totalorder %s18, 1
      %p183 = scmp.ne.s32.totalorder %s178, %s180
      %p184 = scmp.eq.s32.totalorder %s18, 0
      %p185 = por %p183, %p184
      %p186 = scmp.ne.s32.totalorder %s178, %s180
      %p187 = scmp.eq.s32.totalorder %s23, 1
      %p188 = por %p186, %p187
      %p189 = scmp.ne.s32.totalorder %s180, %s181
      %p190 = scmp.eq.s32.totalorder %s23, 0
      %p191 = por %p189, %p190
      %p192 = scmp.ne.s32.totalorder %s180, %s181
      %p193 = scmp.eq.s32.totalorder %s24, 1
      %p194 = por %p192, %p193
      %p196 = scmp.ne.s32.totalorder %s181, %s195
      %p197 = scmp.eq.s32.totalorder %s24, 0
      %p198 = por %p196, %p197
      %s200 = sadd.s32 %s199, 1
      %p203 = scmp.eq.s32.totalorder %s18, 1
      %p204 = scmp.ne.s32.totalorder %s199, %s201
      %p205 = scmp.eq.s32.totalorder %s18, 0
      %p206 = por %p204, %p205
      %p207 = scmp.ne.s32.totalorder %s199, %s201
      %p208 = scmp.eq.s32.totalorder %s23, 1
      %p209 = por %p207, %p208
      %p210 = scmp.ne.s32.totalorder %s201, %s202
      %p211 = scmp.eq.s32.totalorder %s23, 0
      %p212 = por %p210, %p211
      %p213 = scmp.ne.s32.totalorder %s201, %s202
      %p214 = scmp.eq.s32.totalorder %s24, 1
      %p215 = por %p213, %p214
      %p217 = scmp.ne.s32.totalorder %s202, %s216
      %p218 = scmp.eq.s32.totalorder %s24, 0
      %p219 = por %p217, %p218
      %s220 = ssub.s32 %s18, %s25
      %p221 = scmp.eq.s32.totalorder %s220, 0
      %s223 = sadd.s32 %s222, 1
      %s224 = scalar_select %p221, %s222, %s223
      %p227 = pneg %p221
      %p228 = scmp.eq.s32.totalorder %s18, 1
      %p229 = por %p227, %p228
      %p230 = scmp.ne.s32.totalorder %s222, %s225
      %p231 = scmp.eq.s32.totalorder %s18, 0
      %p232 = por %p230, %p231
      %p233 = scmp.ne.s32.totalorder %s222, %s225
      %p234 = scmp.eq.s32.totalorder %s23, 1
      %p235 = por %p233, %p234
      %p236 = scmp.ne.s32.totalorder %s225, %s226
      %p237 = scmp.eq.s32.totalorder %s23, 0
      %p238 = por %p236, %p237
      %p239 = scmp.ne.s32.totalorder %s225, %s226
      %p240 = scmp.eq.s32.totalorder %s24, 1
      %p241 = por %p239, %p240
      %p243 = scmp.ne.s32.totalorder %s226, %s242
      %p244 = scmp.eq.s32.totalorder %s24, 0
      %p245 = por %p243, %p244
      %p246 = scmp.le.s32.totalorder 1, %s18
      %p247 = scmp.lt.s32.totalorder %s18, 3
      %p248 = pnand %p246, %p247
      %p249 = pneg %p248
      // Predicated region
      $region9: #{tpu_custom_call.1} parent=5 // pred_check
        _
      $region10: #{tpu_custom_call.1} parent=5 // pred_check_branch
        %251 = sbr.rel (%p248) target = $region12
      $region11: #{tpu_custom_call.1} parent=5 // pred_region
        %s252 = ssub.s32 %s18, 1
        // Predicated region
        $region13: #{tpu_custom_call.1} parent=11 // pred_check
          %p253 = pneg %p65
        $region14: #{tpu_custom_call.1} parent=11 // pred_check_branch
          %255 = sbr.rel (%p253) target = $region16
        $region15: #{tpu_custom_call.1} parent=11 // pred_region
          _
        $region16: #{tpu_custom_call.1} parent=11 // pred_fallthru
          _
        // Predicated region
        $region17: #{tpu_custom_call.1} parent=11 // pred_check
          %p256 = pneg %p86
        $region18: #{tpu_custom_call.1} parent=11 // pred_check_branch
          %258 = sbr.rel (%p256) target = $region20
        $region19: #{tpu_custom_call.1} parent=11 // pred_region
          _
        $region20: #{tpu_custom_call.1} parent=11 // pred_fallthru
          _
        // Predicated region
        $region21: #{tpu_custom_call.1} parent=11 // pred_check
          %p259 = pneg %p107
        $region22: #{tpu_custom_call.1} parent=11 // pred_check_branch
          %261 = sbr.rel (%p259) target = $region24
        $region23: #{tpu_custom_call.1} parent=11 // pred_region
          _
        $region24: #{tpu_custom_call.1} parent=11 // pred_fallthru
          _
        // Predicated region
        $region25: #{tpu_custom_call.1} parent=11 // pred_check
          %p262 = pneg %p128
        $region26: #{tpu_custom_call.1} parent=11 // pred_check_branch
          %264 = sbr.rel (%p262) target = $region28
        $region27: #{tpu_custom_call.1} parent=11 // pred_region
          _
        $region28: #{tpu_custom_call.1} parent=11 // pred_fallthru
          _
        // Predicated region
        $region29: #{tpu_custom_call.1} parent=11 // pred_check
          %p265 = pneg %p149
        $region30: #{tpu_custom_call.1} parent=11 // pred_check_branch
          %267 = sbr.rel (%p265) target = $region32
        $region31: #{tpu_custom_call.1} parent=11 // pred_region
          _
        $region32: #{tpu_custom_call.1} parent=11 // pred_fallthru
          _
        // Predicated region
        $region33: #{tpu_custom_call.1} parent=11 // pred_check
          %p268 = pneg %p170
        $region34: #{tpu_custom_call.1} parent=11 // pred_check_branch
          %270 = sbr.rel (%p268) target = $region36
        $region35: #{tpu_custom_call.1} parent=11 // pred_region
          _
        $region36: #{tpu_custom_call.1} parent=11 // pred_fallthru
          _
        // Predicated region
        $region37: #{tpu_custom_call.1} parent=11 // pred_check
          %p271 = pneg %p191
        $region38: #{tpu_custom_call.1} parent=11 // pred_check_branch
          %273 = sbr.rel (%p271) target = $region40
        $region39: #{tpu_custom_call.1} parent=11 // pred_region
          _
        $region40: #{tpu_custom_call.1} parent=11 // pred_fallthru
          _
        // Predicated region
        $region41: #{tpu_custom_call.1} parent=11 // pred_check
          %p274 = pneg %p212
        $region42: #{tpu_custom_call.1} parent=11 // pred_check_branch
          %276 = sbr.rel (%p274) target = $region44
        $region43: #{tpu_custom_call.1} parent=11 // pred_region
          _
        $region44: #{tpu_custom_call.1} parent=11 // pred_fallthru
          _
      $region12: #{tpu_custom_call.1} parent=5 // pred_fallthru
        _
      %p277 = scmp.lt.s32.totalorder %s18, 2
      // Predicated region
      $region45: #{tpu_custom_call.1} parent=5 // pred_check
        %p278 = pneg %p277
      $region46: #{tpu_custom_call.1} parent=5 // pred_check_branch
        %280 = sbr.rel (%p278) target = $region48
      $region47: #{tpu_custom_call.1} parent=5 // pred_region
        // Predicated region
        $region49: #{tpu_custom_call.1} parent=47 // pred_check
          %p281 = pneg %p38
        $region50: #{tpu_custom_call.1} parent=47 // pred_check_branch
          %283 = sbr.rel (%p281) target = $region52
        $region51: #{tpu_custom_call.1} parent=47 // pred_region
          %p284 = scmp.lt.s32.totalorder %s18, 1
          %s285 = scalar_select %p284, %s18, 1
          %s286 = smul.addr %s285, 2
          %s287 = smul.addr %s286, 4
          %s288 = scalar_lea.vmem %s0, %s287
        $region52: #{tpu_custom_call.1} parent=47 // pred_fallthru
          _
      $region48: #{tpu_custom_call.1} parent=5 // pred_fallthru
        _
      %p289 = scmp.le.s32.totalorder 1, %s18
      %p290 = scmp.lt.s32.totalorder %s18, 3
      %p291 = pnand %p289, %p290
      %p292 = pneg %p291
      // Predicated region
      $region53: #{tpu_custom_call.1} parent=5 // pred_check
        _
      $region54: #{tpu_custom_call.1} parent=5 // pred_check_branch
        %294 = sbr.rel (%p291) target = $region56
      $region55: #{tpu_custom_call.1} parent=5 // pred_region
        %s295 = ssub.s32 %s18, 1
        %p296 = scmp.lt.s32.totalorder %s23, 1
        %s297 = scalar_select %p296, %s23, 1
        %s298 = smul.addr %s297, 2
        %s299 = smul.addr %s298, 4
        %s300 = scalar_lea.vmem %s0, %s299
        %p301 = pneg %p44
        %p302 = pneg %p41
        %p303 = pneg %p65
        %p304 = pneg %p62
        %p305 = pneg %p86
        %p306 = pneg %p83
        %p307 = pneg %p107
        %p308 = pneg %p104
        %p309 = pneg %p128
        %p310 = pneg %p125
        %p311 = pneg %p149
        %p312 = pneg %p146
        %p313 = pneg %p170
        %p314 = pneg %p167
        %p315 = pneg %p191
        %p316 = pneg %p188
        %p317 = pneg %p212
        %p318 = pneg %p209
        %p319 = pneg %p238
        %p320 = pneg %p235
        %s321 = sand.u32 %s225, 1
        %s322 = scalar_lea.sflag [#allocation5], %s321
        %s323 = sand.u32 %s225, 1
        %s324 = smul.addr %s323, 8
        %s325 = scalar_lea.vmem [#allocation4], %s324
        %p326 = scmp.lt.s32.totalorder %s23, 1
        %s327 = scalar_select %p326, %s23, 1
        %s328 = smul.addr %s327, 2
        %s329 = smul.addr %s328, 4
        %s330 = scalar_lea.vmem %s0, %s329
        %vm332 = vcmask 535552
        %333 = vst.msk [vmem:[#allocation2] sm:$0xf] %vm332, 0.0
        %vm334 = vcmask 994576
        %335 = vst.msk [vmem:[#allocation2 + $0xc] sm:$0xf] %vm334, 0.0
        %336 = vst.msk [vmem:[#allocation3] sm:$0xf] %vm332, 0.0
        %337 = vst.msk [vmem:[#allocation3 + $0xc] sm:$0xf] %vm334, 0.0
        %v338 = vld [vmem:[%s330] sm:$0xf]
        %340 = vrot.lane.b32.xlu0 %v338, 3
        %v341 = vpop.permute.xlu0 %340
        %vm343 = vcmask 23552
        %v344 = vsel %vm343, 0.0, %v341
        %vm345 = vcmask 154624
        %v346 = vsel %vm345, %v344, 0.0
        %348 = vrot.lane.b32.xlu0 %v346, 66
        %v349 = vpop.permute.xlu0 %348
        %vm351 = vcmask 716304
        %352 = vst.msk [vmem:[#allocation2] sm:$0xf] %vm351, %v349
        %v353 = vld [vmem:[%s330] sm:$0xf]
        %355 = vrot.lane.b32.xlu0 %v353, 115
        %v356 = vpop.permute.xlu0 %355
        %v358 = vsel %vm343, 0.0, %v356
        %v359 = vsel %vm345, %v358, 0.0
        %361 = vrot.lane.b32.xlu0 %v359, 88
        %v362 = vpop.permute.xlu0 %361
        %vm364 = vcmask 896704
        %365 = vst.msk [vmem:[#allocation2] sm:$0xf] %vm364, %v362
        %v366 = vld [vmem:[%s330] sm:$0xf]
        %368 = vrot.lane.b32.xlu0 %v366, 99
        %v369 = vpop.permute.xlu0 %368
        %v371 = vsel %vm343, 0.0, %v369
        %v372 = vsel %vm345, %v371, 0.0
        %374 = vrot.lane.b32.xlu0 %v372, 110
        %v375 = vpop.permute.xlu0 %374
        %v376 = vrot.slane %v375, 4
        %vm377 = vcmask 900096
        %v378 = vsel %vm377, %v376, %v375
        %vm380 = vcmask 1044336
        %vm381 = vcmask 31748
        %vm382 = vmor %vm381, %vm380
        %383 = vst.msk [vmem:[#allocation2] sm:$0xff] %vm382, %v378
        %v384 = vld [vmem:[%s330] sm:$0xf]
        %386 = vrot.lane.b32.xlu0 %v384, 83
        %v387 = vpop.permute.xlu0 %386
        %v389 = vsel %vm343, 0.0, %v387
        %v390 = vsel %vm345, %v389, 0.0
        %392 = vrot.lane.b32.xlu0 %v390, 4
        %v393 = vpop.permute.xlu0 %392
        %vm395 = vcmask 207904
        %396 = vst.msk [vmem:[#allocation2 + $0x4] sm:$0xf] %vm395, %v393
        %v397 = vld [vmem:[%s330] sm:$0xf]
        %399 = vrot.lane.b32.xlu0 %v397, 67
        %v400 = vpop.permute.xlu0 %399
        %v402 = vsel %vm343, 0.0, %v400
        %v403 = vsel %vm345, %v402, 0.0
        %405 = vrot.lane.b32.xlu0 %v403, 26
        %v406 = vpop.permute.xlu0 %405
        %vm408 = vcmask 388304
        %409 = vst.msk [vmem:[#allocation2 + $0x4] sm:$0xf] %vm408, %v406
        %v410 = vld [vmem:[%s330] sm:$0xf]
        %412 = vrot.lane.b32.xlu0 %v410, 51
        %v413 = vpop.permute.xlu0 %412
        %v415 = vsel %vm343, 0.0, %v413
        %v416 = vsel %vm345, %v415, 0.0
        %418 = vrot.lane.b32.xlu0 %v416, 48
        %v419 = vpop.permute.xlu0 %418
        %vm421 = vcmask 568704
        %422 = vst.msk [vmem:[#allocation2 + $0x4] sm:$0xf] %vm421, %v419
        %v423 = vld [vmem:[%s330] sm:$0xf]
        %425 = vrot.lane.b32.xlu0 %v423, 35
        %v426 = vpop.permute.xlu0 %425
        %v428 = vsel %vm343, 0.0, %v426
        %v429 = vsel %vm345, %v428, 0.0
        %431 = vrot.lane.b32.xlu0 %v429, 70
        %v432 = vpop.permute.xlu0 %431
        %vm434 = vcmask 749104
        %435 = vst.msk [vmem:[#allocation2 + $0x4] sm:$0xf] %vm434, %v432
        %v436 = vld [vmem:[%s330] sm:$0xf]
        %438 = vrot.lane.b32.xlu0 %v436, 19
        %v439 = vpop.permute.xlu0 %438
        %v441 = vsel %vm343, 0.0, %v439
        %v442 = vsel %vm345, %v441, 0.0
        %444 = vrot.lane.b32.xlu0 %v442, 92
        %v445 = vpop.permute.xlu0 %444
        %vm447 = vcmask 929504
        %448 = vst.msk [vmem:[#allocation2 + $0x4] sm:$0xf] %vm447, %v445
        %v449 = vld [vmem:[%s330 + $0x4] sm:$0xf]
        %451 = vrot.lane.b32.xlu0 %v449, 3
        %v452 = vpop.permute.xlu0 %451
        %v454 = vsel %vm343, 0.0, %v452
        %v455 = vsel %vm345, %v454, 0.0
        %457 = vrot.lane.b32.xlu0 %v455, 114
        %v458 = vpop.permute.xlu0 %457
        %v459 = vrot.slane %v458, 4
        %vm460 = vcmask 932864
        %v461 = vsel %vm460, %v459, %v458
        %vm463 = vcmask 1044368
        %vm464 = vcmask 64516
        %vm465 = vmor %vm464, %vm463
        %466 = vst.msk [vmem:[#allocation2 + $0x4] sm:$0xff] %vm465, %v461
        %v467 = vld [vmem:[%s330 + $0x4] sm:$0xf]
        %469 = vrot.lane.b32.xlu0 %v467, 115
        %v470 = vpop.permute.xlu0 %469
        %v472 = vsel %vm343, 0.0, %v470
        %v473 = vsel %vm345, %v472, 0.0
        %475 = vrot.lane.b32.xlu0 %v473, 8
        %v476 = vpop.permute.xlu0 %475
        %vm478 = vcmask 240704
        %479 = vst.msk [vmem:[#allocation2 + $0x8] sm:$0xf] %vm478, %v476
        %v480 = vld [vmem:[%s330 + $0x4] sm:$0xf]
        %482 = vrot.lane.b32.xlu0 %v480, 99
        %v483 = vpop.permute.xlu0 %482
        %v485 = vsel %vm343, 0.0, %v483
        %v486 = vsel %vm345, %v485, 0.0
        %488 = vrot.lane.b32.xlu0 %v486, 30
        %v489 = vpop.permute.xlu0 %488
        %vm491 = vcmask 421104
        %492 = vst.msk [vmem:[#allocation2 + $0x8] sm:$0xf] %vm491, %v489
        %v493 = vld [vmem:[%s330 + $0x4] sm:$0xf]
        %495 = vrot.lane.b32.xlu0 %v493, 83
        %v496 = vpop.permute.xlu0 %495
        %v498 = vsel %vm343, 0.0, %v496
        %v499 = vsel %vm345, %v498, 0.0
        %501 = vrot.lane.b32.xlu0 %v499, 52
        %v502 = vpop.permute.xlu0 %501
        %vm504 = vcmask 601504
        %505 = vst.msk [vmem:[#allocation2 + $0x8] sm:$0xf] %vm504, %v502
        %v506 = vld [vmem:[%s330 + $0x4] sm:$0xf]
        %508 = vrot.lane.b32.xlu0 %v506, 67
        %v509 = vpop.permute.xlu0 %508
        %v511 = vsel %vm343, 0.0, %v509
        %v512 = vsel %vm345, %v511, 0.0
        %514 = vrot.lane.b32.xlu0 %v512, 74
        %v515 = vpop.permute.xlu0 %514
        %vm517 = vcmask 781904
        %518 = vst.msk [vmem:[#allocation2 + $0x8] sm:$0xf] %vm517, %v515
        %v519 = vld [vmem:[%s330 + $0x4] sm:$0xf]
        %521 = vrot.lane.b32.xlu0 %v519, 51
        %v522 = vpop.permute.xlu0 %521
        %v524 = vsel %vm343, 0.0, %v522
        %v525 = vsel %vm345, %v524, 0.0
        %527 = vrot.lane.b32.xlu0 %v525, 96
        %v528 = vpop.permute.xlu0 %527
        %vm530 = vcmask 962304
        %531 = vst.msk [vmem:[#allocation2 + $0x8] sm:$0xf] %vm530, %v528
        %v532 = vld [vmem:[%s330 + $0x4] sm:$0xf]
        %534 = vrot.lane.b32.xlu0 %v532, 35
        %v535 = vpop.permute.xlu0 %534
        %v537 = vsel %vm343, 0.0, %v535
        %v538 = vsel %vm345, %v537, 0.0
        %540 = vrot.lane.b32.xlu0 %v538, 118
        %v541 = vpop.permute.xlu0 %540
        %v542 = vrot.slane %v541, 4
        %vm543 = vcmask 965632
        %v544 = vsel %vm543, %v542, %v541
        %vm546 = vcmask 1044400
        %vm547 = vcmask 97284
        %vm548 = vmor %vm547, %vm546
        %549 = vst.msk [vmem:[#allocation2 + $0x8] sm:$0xff] %vm548, %v544
        %v550 = vld [vmem:[%s330 + $0x4] sm:$0xf]
        %552 = vrot.lane.b32.xlu0 %v550, 19
        %v553 = vpop.permute.xlu0 %552
        %v555 = vsel %vm343, 0.0, %v553
        %v556 = vsel %vm345, %v555, 0.0
        %558 = vrot.lane.b32.xlu0 %v556, 12
        %v559 = vpop.permute.xlu0 %558
        %vm561 = vcmask 273504
        %562 = vst.msk [vmem:[#allocation2 + $0xc] sm:$0xf] %vm561, %v559
        %v563 = vld [vmem:[#allocation2] sm:$0xff]
        %v564 = vld [vmem:[#allocation2 + $0x8] sm:$0xf]
        %v565 = vld [vmem:[%s5] sm:$0xf]
        %567 = vset.pattern.permute.xlu0 0
        %568 = vperm.xlu0 %567, %v565
        %v569 = vpop.permute.xlu0 %568
        %v571 = vunpack.c.l.s4 839922192
        %v572 = vunpack.c.0.s8 %v571
        %v573 = vlaneseq
        %v574 = vshrl.u32 %v573, 7
        %v575 = vsub.s32 %v572, %v574
        %v576 = vrot.slane %v569, %v575
        %v578 = vmul.f32 %v563, %v576
        %v579 = vmul.f32 %v564, %v576
        %v580 = vadd.f32 %v578, 0.0
        %v581 = vadd.f32 %v579, 0.0
        %582 = vset.pattern.permute.xlu0 1
        %583 = vperm.xlu0 %582, %v565
        %v584 = vpop.permute.xlu0 %583
        %v586 = vunpack.c.l.s4 839922192
        %v587 = vunpack.c.0.s8 %v586
        %v588 = vlaneseq
        %v589 = vshrl.u32 %v588, 7
        %v590 = vsub.s32 %v587, %v589
        %v591 = vrot.slane %v584, %v590
        %v593 = vmul.f32 %v563, %v591
        %v594 = vmul.f32 %v564, %v591
        %v595 = vadd.f32 %v593, 0.0
        %v596 = vadd.f32 %v594, 0.0
        %597 = vset.pattern.permute.xlu0 2
        %598 = vperm.xlu0 %597, %v565
        %v599 = vpop.permute.xlu0 %598
        %v601 = vunpack.c.l.s4 839922192
        %v602 = vunpack.c.0.s8 %v601
        %v603 = vlaneseq
        %v604 = vshrl.u32 %v603, 7
        %v605 = vsub.s32 %v602, %v604
        %v606 = vrot.slane %v599, %v605
        %v608 = vmul.f32 %v563, %v606
        %v609 = vmul.f32 %v564, %v606
        %612 = vrot.lane.b32.xlu0 %v608, 126
        %v613 = vpop.permute.xlu0 %612
        %614 = vrot.lane.b32.xlu0 %v609, 126
        %v615 = vpop.permute.xlu0 %614
        %v616 = vrot.slane %v613, 4
        %v617 = vrot.slane %v615, 4
        %vm618 = vcmask 1043456
        %v619 = vsel %vm618, %v616, %v617
        %vm620 = vcmask 1031168
        %v621 = vsel %vm620, %v613, %v619
        %v624 = vadd.f32 %v580, %v621
        %v625 = vadd.f32 %v581, %v615
        %626 = vset.pattern.permute.xlu0 3
        %627 = vperm.xlu0 %626, %v565
        %v628 = vpop.permute.xlu0 %627
        %v630 = vunpack.c.l.s4 839922192
        %v631 = vunpack.c.0.s8 %v630
        %v632 = vlaneseq
        %v633 = vshrl.u32 %v632, 7
        %v634 = vsub.s32 %v631, %v633
        %v635 = vrot.slane %v628, %v634
        %v637 = vmul.f32 %v563, %v635
        %v638 = vmul.f32 %v564, %v635
        %641 = vrot.lane.b32.xlu0 %v637, 126
        %v642 = vpop.permute.xlu0 %641
        %643 = vrot.lane.b32.xlu0 %v638, 126
        %v644 = vpop.permute.xlu0 %643
        %v645 = vrot.slane %v642, 4
        %v646 = vrot.slane %v644, 4
        %v647 = vsel %vm618, %v645, %v646
        %v648 = vsel %vm620, %v642, %v647
        %v651 = vadd.f32 %v595, %v648
        %v652 = vadd.f32 %v596, %v644
        %653 = vset.pattern.permute.xlu0 4
        %654 = vperm.xlu0 %653, %v565
        %v655 = vpop.permute.xlu0 %654
        %v657 = vunpack.c.l.s4 839922192
        %v658 = vunpack.c.0.s8 %v657
        %v659 = vlaneseq
        %v660 = vshrl.u32 %v659, 7
        %v661 = vsub.s32 %v658, %v660
        %v662 = vrot.slane %v655, %v661
        %v664 = vmul.f32 %v563, %v662
        %v665 = vmul.f32 %v564, %v662
        %668 = vrot.lane.b32.xlu0 %v664, 124
        %v669 = vpop.permute.xlu0 %668
        %670 = vrot.lane.b32.xlu0 %v665, 124
        %v671 = vpop.permute.xlu0 %670
        %v672 = vrot.slane %v669, 4
        %v673 = vrot.slane %v671, 4
        %v674 = vsel %vm618, %v672, %v673
        %vm675 = vcmask 1014784
        %v676 = vsel %vm675, %v669, %v674
        %v679 = vadd.f32 %v624, %v676
        %v680 = vadd.f32 %v625, %v671
        %681 = vset.pattern.permute.xlu0 5
        %682 = vperm.xlu0 %681, %v565
        %v683 = vpop.permute.xlu0 %682
        %v685 = vunpack.c.l.s4 839922192
        %v686 = vunpack.c.0.s8 %v685
        %v687 = vlaneseq
        %v688 = vshrl.u32 %v687, 7
        %v689 = vsub.s32 %v686, %v688
        %v690 = vrot.slane %v683, %v689
        %v692 = vmul.f32 %v563, %v690
        %v693 = vmul.f32 %v564, %v690
        %696 = vrot.lane.b32.xlu0 %v692, 124
        %v697 = vpop.permute.xlu0 %696
        %698 = vrot.lane.b32.xlu0 %v693, 124
        %v699 = vpop.permute.xlu0 %698
        %v700 = vrot.slane %v697, 4
        %v701 = vrot.slane %v699, 4
        %v702 = vsel %vm618, %v700, %v701
        %v703 = vsel %vm675, %v697, %v702
        %v706 = vadd.f32 %v651, %v703
        %v707 = vadd.f32 %v652, %v699
        %708 = vset.pattern.permute.xlu0 6
        %709 = vperm.xlu0 %708, %v565
        %v710 = vpop.permute.xlu0 %709
        %v712 = vunpack.c.l.s4 839922192
        %v713 = vunpack.c.0.s8 %v712
        %v714 = vlaneseq
        %v715 = vshrl.u32 %v714, 7
        %v716 = vsub.s32 %v713, %v715
        %v717 = vrot.slane %v710, %v716
        %v719 = vmul.f32 %v563, %v717
        %v720 = vmul.f32 %v564, %v717
        %723 = vrot.lane.b32.xlu0 %v719, 122
        %v724 = vpop.permute.xlu0 %723
        %725 = vrot.lane.b32.xlu0 %v720, 122
        %v726 = vpop.permute.xlu0 %725
        %v727 = vrot.slane %v724, 4
        %v728 = vrot.slane %v726, 4
        %v729 = vsel %vm618, %v727, %v728
        %vm730 = vcmask 998400
        %v731 = vsel %vm730, %v724, %v729
        %v734 = vadd.f32 %v679, %v731
        %v735 = vadd.f32 %v680, %v726
        %736 = vset.pattern.permute.xlu0 7
        %737 = vperm.xlu0 %736, %v565
        %v738 = vpop.permute.xlu0 %737
        %v740 = vunpack.c.l.s4 839922192
        %v741 = vunpack.c.0.s8 %v740
        %v742 = vlaneseq
        %v743 = vshrl.u32 %v742, 7
        %v744 = vsub.s32 %v741, %v743
        %v745 = vrot.slane %v738, %v744
        %v747 = vmul.f32 %v563, %v745
        %v748 = vmul.f32 %v564, %v745
        %751 = vrot.lane.b32.xlu0 %v747, 107
        %v752 = vpop.permute.xlu0 %751
        %753 = vrot.lane.b32.xlu0 %v748, 107
        %v754 = vpop.permute.xlu0 %753
        %v755 = vrot.slane %v752, 4
        %v756 = vrot.slane %v754, 4
        %v757 = vsel %vm618, %v755, %v756
        %vm758 = vcmask 875520
        %v759 = vsel %vm758, %v752, %v757
        %v762 = vadd.f32 %v706, %v759
        %v763 = vadd.f32 %v707, %v754
        %764 = vset.pattern.permute.xlu0 8
        %765 = vperm.xlu0 %764, %v565
        %v766 = vpop.permute.xlu0 %765
        %v768 = vunpack.c.l.s4 839922192
        %v769 = vunpack.c.0.s8 %v768
        %v770 = vlaneseq
        %v771 = vshrl.u32 %v770, 7
        %v772 = vsub.s32 %v769, %v771
        %v773 = vrot.slane %v766, %v772
        %v775 = vmul.f32 %v563, %v773
        %v776 = vmul.f32 %v564, %v773
        %779 = vrot.lane.b32.xlu0 %v775, 105
        %v780 = vpop.permute.xlu0 %779
        %781 = vrot.lane.b32.xlu0 %v776, 105
        %v782 = vpop.permute.xlu0 %781
        %v783 = vrot.slane %v780, 4
        %v784 = vrot.slane %v782, 4
        %v785 = vsel %vm618, %v783, %v784
        %vm786 = vcmask 859136
        %v787 = vsel %vm786, %v780, %v785
        %v790 = vadd.f32 %v734, %v787
        %v791 = vadd.f32 %v735, %v782
        %792 = vset.pattern.permute.xlu0 9
        %793 = vperm.xlu0 %792, %v565
        %v794 = vpop.permute.xlu0 %793
        %v796 = vunpack.c.l.s4 839922192
        %v797 = vunpack.c.0.s8 %v796
        %v798 = vlaneseq
        %v799 = vshrl.u32 %v798, 7
        %v800 = vsub.s32 %v797, %v799
        %v801 = vrot.slane %v794, %v800
        %v803 = vmul.f32 %v563, %v801
        %v804 = vmul.f32 %v564, %v801
        %807 = vrot.lane.b32.xlu0 %v803, 105
        %v808 = vpop.permute.xlu0 %807
        %809 = vrot.lane.b32.xlu0 %v804, 105
        %v810 = vpop.permute.xlu0 %809
        %v811 = vrot.slane %v808, 4
        %v812 = vrot.slane %v810, 4
        %v813 = vsel %vm618, %v811, %v812
        %v814 = vsel %vm786, %v808, %v813
        %v817 = vadd.f32 %v762, %v814
        %v818 = vadd.f32 %v763, %v810
        %819 = vset.pattern.permute.xlu0 10
        %820 = vperm.xlu0 %819, %v565
        %v821 = vpop.permute.xlu0 %820
        %v823 = vunpack.c.l.s4 839922192
        %v824 = vunpack.c.0.s8 %v823
        %v825 = vlaneseq
        %v826 = vshrl.u32 %v825, 7
        %v827 = vsub.s32 %v824, %v826
        %v828 = vrot.slane %v821, %v827
        %v830 = vmul.f32 %v563, %v828
        %v831 = vmul.f32 %v564, %v828
        %834 = vrot.lane.b32.xlu0 %v830, 103
        %v835 = vpop.permute.xlu0 %834
        %836 = vrot.lane.b32.xlu0 %v831, 103
        %v837 = vpop.permute.xlu0 %836
        %v838 = vrot.slane %v835, 4
        %v839 = vrot.slane %v837, 4
        %v840 = vsel %vm618, %v838, %v839
        %vm841 = vcmask 842752
        %v842 = vsel %vm841, %v835, %v840
        %v845 = vadd.f32 %v790, %v842
        %v846 = vadd.f32 %v791, %v837
        %847 = vset.pattern.permute.xlu0 11
        %848 = vperm.xlu0 %847, %v565
        %v849 = vpop.permute.xlu0 %848
        %v851 = vunpack.c.l.s4 839922192
        %v852 = vunpack.c.0.s8 %v851
        %v853 = vlaneseq
        %v854 = vshrl.u32 %v853, 7
        %v855 = vsub.s32 %v852, %v854
        %v856 = vrot.slane %v849, %v855
        %v858 = vmul.f32 %v563, %v856
        %v859 = vmul.f32 %v564, %v856
        %862 = vrot.lane.b32.xlu0 %v858, 103
        %v863 = vpop.permute.xlu0 %862
        %864 = vrot.lane.b32.xlu0 %v859, 103
        %v865 = vpop.permute.xlu0 %864
        %v866 = vrot.slane %v863, 4
        %v867 = vrot.slane %v865, 4
        %v868 = vsel %vm618, %v866, %v867
        %v869 = vsel %vm841, %v863, %v868
        %v872 = vadd.f32 %v817, %v869
        %v873 = vadd.f32 %v818, %v865
        %874 = vset.pattern.permute.xlu0 12
        %875 = vperm.xlu0 %874, %v565
        %v876 = vpop.permute.xlu0 %875
        %v878 = vunpack.c.l.s4 839922192
        %v879 = vunpack.c.0.s8 %v878
        %v880 = vlaneseq
        %v881 = vshrl.u32 %v880, 7
        %v882 = vsub.s32 %v879, %v881
        %v883 = vrot.slane %v876, %v882
        %v885 = vmul.f32 %v563, %v883
        %v886 = vmul.f32 %v564, %v883
        %889 = vrot.lane.b32.xlu0 %v885, 101
        %v890 = vpop.permute.xlu0 %889
        %891 = vrot.lane.b32.xlu0 %v886, 101
        %v892 = vpop.permute.xlu0 %891
        %v893 = vrot.slane %v890, 4
        %v894 = vrot.slane %v892, 4
        %v895 = vsel %vm618, %v893, %v894
        %vm896 = vcmask 826368
        %v897 = vsel %vm896, %v890, %v895
        %v900 = vadd.f32 %v845, %v897
        %v901 = vadd.f32 %v846, %v892
        %902 = vset.pattern.permute.xlu0 13
        %903 = vperm.xlu0 %902, %v565
        %v904 = vpop.permute.xlu0 %903
        %v906 = vunpack.c.l.s4 839922192
        %v907 = vunpack.c.0.s8 %v906
        %v908 = vlaneseq
        %v909 = vshrl.u32 %v908, 7
        %v910 = vsub.s32 %v907, %v909
        %v911 = vrot.slane %v904, %v910
        %v913 = vmul.f32 %v563, %v911
        %v914 = vmul.f32 %v564, %v911
        %917 = vrot.lane.b32.xlu0 %v913, 101
        %v918 = vpop.permute.xlu0 %917
        %919 = vrot.lane.b32.xlu0 %v914, 101
        %v920 = vpop.permute.xlu0 %919
        %v921 = vrot.slane %v918, 4
        %v922 = vrot.slane %v920, 4
        %v923 = vsel %vm618, %v921, %v922
        %v924 = vsel %vm896, %v918, %v923
        %v927 = vadd.f32 %v872, %v924
        %v928 = vadd.f32 %v873, %v920
        %v929 = vld [vmem:[#allocation2] sm:$0xff]
        %v930 = vld [vmem:[#allocation2 + $0x8] sm:$0xff]
        %931 = vset.pattern.permute.xlu0 14
        %932 = vperm.xlu0 %931, %v565
        %v933 = vpop.permute.xlu0 %932
        %v935 = vunpack.c.l.s4 839922192
        %v936 = vunpack.c.0.s8 %v935
        %v937 = vlaneseq
        %v938 = vshrl.u32 %v937, 7
        %v939 = vsub.s32 %v936, %v938
        %v940 = vrot.slane %v933, %v939
        %v942 = vmul.f32 %v929, %v940
        %v943 = vmul.f32 %v930, %v940
        %946 = vrot.lane.b32.xlu0 %v942, 84
        %v947 = vpop.permute.xlu0 %946
        %948 = vrot.lane.b32.xlu0 %v943, 84
        %v949 = vpop.permute.xlu0 %948
        %v950 = vrot.slane %v947, 4
        %v951 = vrot.slane %v949, 4
        %v952 = vsel %vm618, %v950, %v951
        %vm953 = vcmask 687104
        %v954 = vsel %vm953, %v947, %v952
        %v955 = vsel %vm953, %v949, %v951
        %v958 = vadd.f32 %v900, %v954
        %v959 = vadd.f32 %v901, %v955
        %960 = vset.pattern.permute.xlu0 15
        %961 = vperm.xlu0 %960, %v565
        %v962 = vpop.permute.xlu0 %961
        %v964 = vunpack.c.l.s4 839922192
        %v965 = vunpack.c.0.s8 %v964
        %v966 = vlaneseq
        %v967 = vshrl.u32 %v966, 7
        %v968 = vsub.s32 %v965, %v967
        %v969 = vrot.slane %v962, %v968
        %v971 = vmul.f32 %v929, %v969
        %v972 = vmul.f32 %v930, %v969
        %975 = vrot.lane.b32.xlu0 %v971, 84
        %v976 = vpop.permute.xlu0 %975
        %977 = vrot.lane.b32.xlu0 %v972, 84
        %v978 = vpop.permute.xlu0 %977
        %v979 = vrot.slane %v976, 4
        %v980 = vrot.slane %v978, 4
        %v981 = vsel %vm618, %v979, %v980
        %v982 = vsel %vm953, %v976, %v981
        %v983 = vsel %vm953, %v978, %v980
        %v986 = vadd.f32 %v927, %v982
        %v987 = vadd.f32 %v928, %v983
        %988 = vset.pattern.permute.xlu0 16
        %989 = vperm.xlu0 %988, %v565
        %v990 = vpop.permute.xlu0 %989
        %v992 = vunpack.c.l.s4 839922192
        %v993 = vunpack.c.0.s8 %v992
        %v994 = vlaneseq
        %v995 = vshrl.u32 %v994, 7
        %v996 = vsub.s32 %v993, %v995
        %v997 = vrot.slane %v990, %v996
        %v999 = vmul.f32 %v929, %v997
        %v1000 = vmul.f32 %v930, %v997
        %1003 = vrot.lane.b32.xlu0 %v999, 82
        %v1004 = vpop.permute.xlu0 %1003
        %1005 = vrot.lane.b32.xlu0 %v1000, 82
        %v1006 = vpop.permute.xlu0 %1005
        %v1007 = vrot.slane %v1004, 4
        %v1008 = vrot.slane %v1006, 4
        %v1009 = vsel %vm618, %v1007, %v1008
        %vm1010 = vcmask 670720
        %v1011 = vsel %vm1010, %v1004, %v1009
        %v1012 = vsel %vm1010, %v1006, %v1008
        %v1015 = vadd.f32 %v958, %v1011
        %v1016 = vadd.f32 %v959, %v1012
        %1017 = vset.pattern.permute.xlu0 17
        %1018 = vperm.xlu0 %1017, %v565
        %v1019 = vpop.permute.xlu0 %1018
        %v1021 = vunpack.c.l.s4 839922192
        %v1022 = vunpack.c.0.s8 %v1021
        %v1023 = vlaneseq
        %v1024 = vshrl.u32 %v1023, 7
        %v1025 = vsub.s32 %v1022, %v1024
        %v1026 = vrot.slane %v1019, %v1025
        %v1028 = vmul.f32 %v929, %v1026
        %v1029 = vmul.f32 %v930, %v1026
        %1032 = vrot.lane.b32.xlu0 %v1028, 82
        %v1033 = vpop.permute.xlu0 %1032
        %1034 = vrot.lane.b32.xlu0 %v1029, 82
        %v1035 = vpop.permute.xlu0 %1034
        %v1036 = vrot.slane %v1033, 4
        %v1037 = vrot.slane %v1035, 4
        %v1038 = vsel %vm618, %v1036, %v1037
        %v1039 = vsel %vm1010, %v1033, %v1038
        %v1040 = vsel %vm1010, %v1035, %v1037
        %v1043 = vadd.f32 %v986, %v1039
        %v1044 = vadd.f32 %v987, %v1040
        %1045 = vset.pattern.permute.xlu0 18
        %1046 = vperm.xlu0 %1045, %v565
        %v1047 = vpop.permute.xlu0 %1046
        %v1049 = vunpack.c.l.s4 839922192
        %v1050 = vunpack.c.0.s8 %v1049
        %v1051 = vlaneseq
        %v1052 = vshrl.u32 %v1051, 7
        %v1053 = vsub.s32 %v1050, %v1052
        %v1054 = vrot.slane %v1047, %v1053
        %v1056 = vmul.f32 %v929, %v1054
        %v1057 = vmul.f32 %v930, %v1054
        %1060 = vrot.lane.b32.xlu0 %v1056, 80
        %v1061 = vpop.permute.xlu0 %1060
        %1062 = vrot.lane.b32.xlu0 %v1057, 80
        %v1063 = vpop.permute.xlu0 %1062
        %v1064 = vrot.slane %v1061, 4
        %v1065 = vrot.slane %v1063, 4
        %v1066 = vsel %vm618, %v1064, %v1065
        %vm1067 = vcmask 654336
        %v1068 = vsel %vm1067, %v1061, %v1066
        %v1069 = vsel %vm1067, %v1063, %v1065
        %v1072 = vadd.f32 %v1015, %v1068
        %v1073 = vadd.f32 %v1016, %v1069
        %1074 = vset.pattern.permute.xlu0 19
        %1075 = vperm.xlu0 %1074, %v565
        %v1076 = vpop.permute.xlu0 %1075
        %v1078 = vunpack.c.l.s4 839922192
        %v1079 = vunpack.c.0.s8 %v1078
        %v1080 = vlaneseq
        %v1081 = vshrl.u32 %v1080, 7
        %v1082 = vsub.s32 %v1079, %v1081
        %v1083 = vrot.slane %v1076, %v1082
        %v1085 = vmul.f32 %v929, %v1083
        %v1086 = vmul.f32 %v930, %v1083
        %1089 = vrot.lane.b32.xlu0 %v1085, 80
        %v1090 = vpop.permute.xlu0 %1089
        %1091 = vrot.lane.b32.xlu0 %v1086, 80
        %v1092 = vpop.permute.xlu0 %1091
        %v1093 = vrot.slane %v1090, 4
        %v1094 = vrot.slane %v1092, 4
        %v1095 = vsel %vm618, %v1093, %v1094
        %v1096 = vsel %vm1067, %v1090, %v1095
        %v1097 = vsel %vm1067, %v1092, %v1094
        %v1100 = vadd.f32 %v1043, %v1096
        %v1101 = vadd.f32 %v1044, %v1097
        %1102 = vset.pattern.permute.xlu0 20
        %1103 = vperm.xlu0 %1102, %v565
        %v1104 = vpop.permute.xlu0 %1103
        %v1106 = vunpack.c.l.s4 839922192
        %v1107 = vunpack.c.0.s8 %v1106
        %v1108 = vlaneseq
        %v1109 = vshrl.u32 %v1108, 7
        %v1110 = vsub.s32 %v1107, %v1109
        %v1111 = vrot.slane %v1104, %v1110
        %v1113 = vmul.f32 %v929, %v1111
        %v1114 = vmul.f32 %v930, %v1111
        %1117 = vrot.lane.b32.xlu0 %v1113, 78
        %v1118 = vpop.permute.xlu0 %1117
        %1119 = vrot.lane.b32.xlu0 %v1114, 78
        %v1120 = vpop.permute.xlu0 %1119
        %v1121 = vrot.slane %v1118, 4
        %v1122 = vrot.slane %v1120, 4
        %v1123 = vsel %vm618, %v1121, %v1122
        %vm1124 = vcmask 637952
        %v1125 = vsel %vm1124, %v1118, %v1123
        %v1126 = vsel %vm1124, %v1120, %v1122
        %v1129 = vadd.f32 %v1072, %v1125
        %v1130 = vadd.f32 %v1073, %v1126
        %1131 = vset.pattern.permute.xlu0 21
        %1132 = vperm.xlu0 %1131, %v565
        %v1133 = vpop.permute.xlu0 %1132
        %v1135 = vunpack.c.l.s4 839922192
        %v1136 = vunpack.c.0.s8 %v1135
        %v1137 = vlaneseq
        %v1138 = vshrl.u32 %v1137, 7
        %v1139 = vsub.s32 %v1136, %v1138
        %v1140 = vrot.slane %v1133, %v1139
        %v1142 = vmul.f32 %v929, %v1140
        %v1143 = vmul.f32 %v930, %v1140
        %1146 = vrot.lane.b32.xlu0 %v1142, 63
        %v1147 = vpop.permute.xlu0 %1146
        %1148 = vrot.lane.b32.xlu0 %v1143, 63
        %v1149 = vpop.permute.xlu0 %1148
        %v1150 = vrot.slane %v1147, 4
        %v1151 = vrot.slane %v1149, 4
        %v1152 = vsel %vm618, %v1150, %v1151
        %vm1153 = vcmask 515072
        %v1154 = vsel %vm1153, %v1147, %v1152
        %v1155 = vsel %vm1153, %v1149, %v1151
        %v1158 = vadd.f32 %v1100, %v1154
        %v1159 = vadd.f32 %v1101, %v1155
        %1160 = vset.pattern.permute.xlu0 22
        %1161 = vperm.xlu0 %1160, %v565
        %v1162 = vpop.permute.xlu0 %1161
        %v1164 = vunpack.c.l.s4 839922192
        %v1165 = vunpack.c.0.s8 %v1164
        %v1166 = vlaneseq
        %v1167 = vshrl.u32 %v1166, 7
        %v1168 = vsub.s32 %v1165, %v1167
        %v1169 = vrot.slane %v1162, %v1168
        %v1171 = vmul.f32 %v929, %v1169
        %v1172 = vmul.f32 %v930, %v1169
        %1175 = vrot.lane.b32.xlu0 %v1171, 61
        %v1176 = vpop.permute.xlu0 %1175
        %1177 = vrot.lane.b32.xlu0 %v1172, 61
        %v1178 = vpop.permute.xlu0 %1177
        %v1179 = vrot.slane %v1176, 4
        %v1180 = vrot.slane %v1178, 4
        %v1181 = vsel %vm618, %v1179, %v1180
        %vm1182 = vcmask 498688
        %v1183 = vsel %vm1182, %v1176, %v1181
        %v1184 = vsel %vm1182, %v1178, %v1180
        %v1187 = vadd.f32 %v1129, %v1183
        %v1188 = vadd.f32 %v1130, %v1184
        %1189 = vset.pattern.permute.xlu0 23
        %1190 = vperm.xlu0 %1189, %v565
        %v1191 = vpop.permute.xlu0 %1190
        %v1193 = vunpack.c.l.s4 839922192
        %v1194 = vunpack.c.0.s8 %v1193
        %v1195 = vlaneseq
        %v1196 = vshrl.u32 %v1195, 7
        %v1197 = vsub.s32 %v1194, %v1196
        %v1198 = vrot.slane %v1191, %v1197
        %v1200 = vmul.f32 %v929, %v1198
        %v1201 = vmul.f32 %v930, %v1198
        %1204 = vrot.lane.b32.xlu0 %v1200, 61
        %v1205 = vpop.permute.xlu0 %1204
        %1206 = vrot.lane.b32.xlu0 %v1201, 61
        %v1207 = vpop.permute.xlu0 %1206
        %v1208 = vrot.slane %v1205, 4
        %v1209 = vrot.slane %v1207, 4
        %v1210 = vsel %vm618, %v1208, %v1209
        %v1211 = vsel %vm1182, %v1205, %v1210
        %v1212 = vsel %vm1182, %v1207, %v1209
        %v1215 = vadd.f32 %v1158, %v1211
        %v1216 = vadd.f32 %v1159, %v1212
        %1217 = vset.pattern.permute.xlu0 24
        %1218 = vperm.xlu0 %1217, %v565
        %v1219 = vpop.permute.xlu0 %1218
        %v1221 = vunpack.c.l.s4 839922192
        %v1222 = vunpack.c.0.s8 %v1221
        %v1223 = vlaneseq
        %v1224 = vshrl.u32 %v1223, 7
        %v1225 = vsub.s32 %v1222, %v1224
        %v1226 = vrot.slane %v1219, %v1225
        %v1228 = vmul.f32 %v929, %v1226
        %v1229 = vmul.f32 %v930, %v1226
        %1232 = vrot.lane.b32.xlu0 %v1228, 59
        %v1233 = vpop.permute.xlu0 %1232
        %1234 = vrot.lane.b32.xlu0 %v1229, 59
        %v1235 = vpop.permute.xlu0 %1234
        %v1236 = vrot.slane %v1233, 4
        %v1237 = vrot.slane %v1235, 4
        %v1238 = vsel %vm618, %v1236, %v1237
        %vm1239 = vcmask 482304
        %v1240 = vsel %vm1239, %v1233, %v1238
        %v1241 = vsel %vm1239, %v1235, %v1237
        %v1244 = vadd.f32 %v1187, %v1240
        %v1245 = vadd.f32 %v1188, %v1241
        %1246 = vset.pattern.permute.xlu0 25
        %1247 = vperm.xlu0 %1246, %v565
        %v1248 = vpop.permute.xlu0 %1247
        %v1250 = vunpack.c.l.s4 839922192
        %v1251 = vunpack.c.0.s8 %v1250
        %v1252 = vlaneseq
        %v1253 = vshrl.u32 %v1252, 7
        %v1254 = vsub.s32 %v1251, %v1253
        %v1255 = vrot.slane %v1248, %v1254
        %v1257 = vmul.f32 %v929, %v1255
        %v1258 = vmul.f32 %v930, %v1255
        %1261 = vrot.lane.b32.xlu0 %v1257, 59
        %v1262 = vpop.permute.xlu0 %1261
        %1263 = vrot.lane.b32.xlu0 %v1258, 59
        %v1264 = vpop.permute.xlu0 %1263
        %v1265 = vrot.slane %v1262, 4
        %v1266 = vrot.slane %v1264, 4
        %v1267 = vsel %vm618, %v1265, %v1266
        %v1268 = vsel %vm1239, %v1262, %v1267
        %v1269 = vsel %vm1239, %v1264, %v1266
        %v1272 = vadd.f32 %v1215, %v1268
        %v1273 = vadd.f32 %v1216, %v1269
        %1274 = vset.pattern.permute.xlu0 26
        %1275 = vperm.xlu0 %1274, %v565
        %v1276 = vpop.permute.xlu0 %1275
        %v1278 = vunpack.c.l.s4 839922192
        %v1279 = vunpack.c.0.s8 %v1278
        %v1280 = vlaneseq
        %v1281 = vshrl.u32 %v1280, 7
        %v1282 = vsub.s32 %v1279, %v1281
        %v1283 = vrot.slane %v1276, %v1282
        %v1285 = vmul.f32 %v929, %v1283
        %v1286 = vmul.f32 %v930, %v1283
        %1289 = vrot.lane.b32.xlu0 %v1285, 57
        %v1290 = vpop.permute.xlu0 %1289
        %1291 = vrot.lane.b32.xlu0 %v1286, 57
        %v1292 = vpop.permute.xlu0 %1291
        %v1293 = vrot.slane %v1290, 4
        %v1294 = vrot.slane %v1292, 4
        %v1295 = vsel %vm618, %v1293, %v1294
        %vm1296 = vcmask 465920
        %v1297 = vsel %vm1296, %v1290, %v1295
        %v1298 = vsel %vm1296, %v1292, %v1294
        %v1301 = vadd.f32 %v1244, %v1297
        %v1302 = vadd.f32 %v1245, %v1298
        %1303 = vset.pattern.permute.xlu0 27
        %1304 = vperm.xlu0 %1303, %v565
        %v1305 = vpop.permute.xlu0 %1304
        %v1307 = vunpack.c.l.s4 839922192
        %v1308 = vunpack.c.0.s8 %v1307
        %v1309 = vlaneseq
        %v1310 = vshrl.u32 %v1309, 7
        %v1311 = vsub.s32 %v1308, %v1310
        %v1312 = vrot.slane %v1305, %v1311
        %v1314 = vmul.f32 %v929, %v1312
        %v1315 = vmul.f32 %v930, %v1312
        %1318 = vrot.lane.b32.xlu0 %v1314, 57
        %v1319 = vpop.permute.xlu0 %1318
        %1320 = vrot.lane.b32.xlu0 %v1315, 57
        %v1321 = vpop.permute.xlu0 %1320
        %v1322 = vrot.slane %v1319, 4
        %v1323 = vrot.slane %v1321, 4
        %v1324 = vsel %vm618, %v1322, %v1323
        %v1325 = vsel %vm1296, %v1319, %v1324
        %v1326 = vsel %vm1296, %v1321, %v1323
        %v1329 = vadd.f32 %v1272, %v1325
        %v1330 = vadd.f32 %v1273, %v1326
        %1331 = vset.pattern.permute.xlu0 28
        %1332 = vperm.xlu0 %1331, %v565
        %v1333 = vpop.permute.xlu0 %1332
        %v1335 = vunpack.c.l.s4 839922192
        %v1336 = vunpack.c.0.s8 %v1335
        %v1337 = vlaneseq
        %v1338 = vshrl.u32 %v1337, 7
        %v1339 = vsub.s32 %v1336, %v1338
        %v1340 = vrot.slane %v1333, %v1339
        %v1342 = vmul.f32 %v929, %v1340
        %v1343 = vmul.f32 %v930, %v1340
        %1346 = vrot.lane.b32.xlu0 %v1342, 40
        %v1347 = vpop.permute.xlu0 %1346
        %1348 = vrot.lane.b32.xlu0 %v1343, 40
        %v1349 = vpop.permute.xlu0 %1348
        %v1350 = vrot.slane %v1347, 4
        %v1351 = vrot.slane %v1349, 4
        %v1352 = vsel %vm618, %v1350, %v1351
        %vm1353 = vcmask 326656
        %v1354 = vsel %vm1353, %v1347, %v1352
        %v1355 = vsel %vm1353, %v1349, %v1351
        %v1358 = vadd.f32 %v1301, %v1354
        %v1359 = vadd.f32 %v1302, %v1355
        %1360 = vset.pattern.permute.xlu0 29
        %1361 = vperm.xlu0 %1360, %v565
        %v1362 = vpop.permute.xlu0 %1361
        %v1364 = vunpack.c.l.s4 839922192
        %v1365 = vunpack.c.0.s8 %v1364
        %v1366 = vlaneseq
        %v1367 = vshrl.u32 %v1366, 7
        %v1368 = vsub.s32 %v1365, %v1367
        %v1369 = vrot.slane %v1362, %v1368
        %v1371 = vmul.f32 %v929, %v1369
        %v1372 = vmul.f32 %v930, %v1369
        %1375 = vrot.lane.b32.xlu0 %v1371, 40
        %v1376 = vpop.permute.xlu0 %1375
        %1377 = vrot.lane.b32.xlu0 %v1372, 40
        %v1378 = vpop.permute.xlu0 %1377
        %v1379 = vrot.slane %v1376, 4
        %v1380 = vrot.slane %v1378, 4
        %v1381 = vsel %vm618, %v1379, %v1380
        %v1382 = vsel %vm1353, %v1376, %v1381
        %v1383 = vsel %vm1353, %v1378, %v1380
        %v1386 = vadd.f32 %v1329, %v1382
        %v1387 = vadd.f32 %v1330, %v1383
        %1388 = vset.pattern.permute.xlu0 30
        %1389 = vperm.xlu0 %1388, %v565
        %v1390 = vpop.permute.xlu0 %1389
        %v1392 = vunpack.c.l.s4 839922192
        %v1393 = vunpack.c.0.s8 %v1392
        %v1394 = vlaneseq
        %v1395 = vshrl.u32 %v1394, 7
        %v1396 = vsub.s32 %v1393, %v1395
        %v1397 = vrot.slane %v1390, %v1396
        %v1399 = vmul.f32 %v929, %v1397
        %v1400 = vmul.f32 %v930, %v1397
        %1403 = vrot.lane.b32.xlu0 %v1399, 38
        %v1404 = vpop.permute.xlu0 %1403
        %1405 = vrot.lane.b32.xlu0 %v1400, 38
        %v1406 = vpop.permute.xlu0 %1405
        %v1407 = vrot.slane %v1404, 4
        %v1408 = vrot.slane %v1406, 4
        %v1409 = vsel %vm618, %v1407, %v1408
        %vm1410 = vcmask 310272
        %v1411 = vsel %vm1410, %v1404, %v1409
        %v1412 = vsel %vm1410, %v1406, %v1408
        %v1415 = vadd.f32 %v1358, %v1411
        %v1416 = vadd.f32 %v1359, %v1412
        %1417 = vset.pattern.permute.xlu0 31
        %1418 = vperm.xlu0 %1417, %v565
        %v1419 = vpop.permute.xlu0 %1418
        %v1421 = vunpack.c.l.s4 839922192
        %v1422 = vunpack.c.0.s8 %v1421
        %v1423 = vlaneseq
        %v1424 = vshrl.u32 %v1423, 7
        %v1425 = vsub.s32 %v1422, %v1424
        %v1426 = vrot.slane %v1419, %v1425
        %v1428 = vmul.f32 %v929, %v1426
        %v1429 = vmul.f32 %v930, %v1426
        %1432 = vrot.lane.b32.xlu0 %v1428, 38
        %v1433 = vpop.permute.xlu0 %1432
        %1434 = vrot.lane.b32.xlu0 %v1429, 38
        %v1435 = vpop.permute.xlu0 %1434
        %v1436 = vrot.slane %v1433, 4
        %v1437 = vrot.slane %v1435, 4
        %v1438 = vsel %vm618, %v1436, %v1437
        %v1439 = vsel %vm1410, %v1433, %v1438
        %v1440 = vsel %vm1410, %v1435, %v1437
        %v1443 = vadd.f32 %v1386, %v1439
        %v1444 = vadd.f32 %v1387, %v1440
        %1445 = vset.pattern.permute.xlu0 32
        %1446 = vperm.xlu0 %1445, %v565
        %v1447 = vpop.permute.xlu0 %1446
        %v1449 = vunpack.c.l.s4 839922192
        %v1450 = vunpack.c.0.s8 %v1449
        %v1451 = vlaneseq
        %v1452 = vshrl.u32 %v1451, 7
        %v1453 = vsub.s32 %v1450, %v1452
        %v1454 = vrot.slane %v1447, %v1453
        %v1456 = vmul.f32 %v929, %v1454
        %v1457 = vmul.f32 %v930, %v1454
        %1460 = vrot.lane.b32.xlu0 %v1456, 36
        %v1461 = vpop.permute.xlu0 %1460
        %1462 = vrot.lane.b32.xlu0 %v1457, 36
        %v1463 = vpop.permute.xlu0 %1462
        %v1464 = vrot.slane %v1461, 4
        %v1465 = vrot.slane %v1463, 4
        %v1466 = vsel %vm618, %v1464, %v1465
        %vm1467 = vcmask 293888
        %v1468 = vsel %vm1467, %v1461, %v1466
        %v1469 = vsel %vm1467, %v1463, %v1465
        %v1472 = vadd.f32 %v1415, %v1468
        %v1473 = vadd.f32 %v1416, %v1469
        %1474 = vset.pattern.permute.xlu0 33
        %1475 = vperm.xlu0 %1474, %v565
        %v1476 = vpop.permute.xlu0 %1475
        %v1478 = vunpack.c.l.s4 839922192
        %v1479 = vunpack.c.0.s8 %v1478
        %v1480 = vlaneseq
        %v1481 = vshrl.u32 %v1480, 7
        %v1482 = vsub.s32 %v1479, %v1481
        %v1483 = vrot.slane %v1476, %v1482
        %v1485 = vmul.f32 %v929, %v1483
        %v1486 = vmul.f32 %v930, %v1483
        %1489 = vrot.lane.b32.xlu0 %v1485, 36
        %v1490 = vpop.permute.xlu0 %1489
        %1491 = vrot.lane.b32.xlu0 %v1486, 36
        %v1492 = vpop.permute.xlu0 %1491
        %v1493 = vrot.slane %v1490, 4
        %v1494 = vrot.slane %v1492, 4
        %v1495 = vsel %vm618, %v1493, %v1494
        %v1496 = vsel %vm1467, %v1490, %v1495
        %v1497 = vsel %vm1467, %v1492, %v1494
        %v1500 = vadd.f32 %v1443, %v1496
        %v1501 = vadd.f32 %v1444, %v1497
        %1502 = vset.pattern.permute.xlu0 34
        %1503 = vperm.xlu0 %1502, %v565
        %v1504 = vpop.permute.xlu0 %1503
        %v1506 = vunpack.c.l.s4 839922192
        %v1507 = vunpack.c.0.s8 %v1506
        %v1508 = vlaneseq
        %v1509 = vshrl.u32 %v1508, 7
        %v1510 = vsub.s32 %v1507, %v1509
        %v1511 = vrot.slane %v1504, %v1510
        %v1513 = vmul.f32 %v929, %v1511
        %v1514 = vmul.f32 %v930, %v1511
        %1517 = vrot.lane.b32.xlu0 %v1513, 34
        %v1518 = vpop.permute.xlu0 %1517
        %1519 = vrot.lane.b32.xlu0 %v1514, 34
        %v1520 = vpop.permute.xlu0 %1519
        %v1521 = vrot.slane %v1518, 4
        %v1522 = vrot.slane %v1520, 4
        %v1523 = vsel %vm618, %v1521, %v1522
        %vm1524 = vcmask 277504
        %v1525 = vsel %vm1524, %v1518, %v1523
        %v1526 = vsel %vm1524, %v1520, %v1522
        %v1529 = vadd.f32 %v1472, %v1525
        %v1530 = vadd.f32 %v1473, %v1526
        %1531 = vset.pattern.permute.xlu0 35
        %1532 = vperm.xlu0 %1531, %v565
        %v1533 = vpop.permute.xlu0 %1532
        %v1535 = vunpack.c.l.s4 839922192
        %v1536 = vunpack.c.0.s8 %v1535
        %v1537 = vlaneseq
        %v1538 = vshrl.u32 %v1537, 7
        %v1539 = vsub.s32 %v1536, %v1538
        %v1540 = vrot.slane %v1533, %v1539
        %v1542 = vmul.f32 %v929, %v1540
        %v1543 = vmul.f32 %v930, %v1540
        %1546 = vrot.lane.b32.xlu0 %v1542, 19
        %v1547 = vpop.permute.xlu0 %1546
        %1548 = vrot.lane.b32.xlu0 %v1543, 19
        %v1549 = vpop.permute.xlu0 %1548
        %v1550 = vrot.slane %v1547, 4
        %v1551 = vrot.slane %v1549, 4
        %v1552 = vsel %vm618, %v1550, %v1551
        %v1553 = vsel %vm345, %v1547, %v1552
        %v1554 = vsel %vm345, %v1549, %v1551
        %v1557 = vadd.f32 %v1500, %v1553
        %v1558 = vadd.f32 %v1501, %v1554
        %1559 = vset.pattern.permute.xlu0 36
        %1560 = vperm.xlu0 %1559, %v565
        %v1561 = vpop.permute.xlu0 %1560
        %v1563 = vunpack.c.l.s4 839922192
        %v1564 = vunpack.c.0.s8 %v1563
        %v1565 = vlaneseq
        %v1566 = vshrl.u32 %v1565, 7
        %v1567 = vsub.s32 %v1564, %v1566
        %v1568 = vrot.slane %v1561, %v1567
        %v1570 = vmul.f32 %v929, %v1568
        %v1571 = vmul.f32 %v930, %v1568
        %1574 = vrot.lane.b32.xlu0 %v1570, 17
        %v1575 = vpop.permute.xlu0 %1574
        %1576 = vrot.lane.b32.xlu0 %v1571, 17
        %v1577 = vpop.permute.xlu0 %1576
        %v1578 = vrot.slane %v1575, 4
        %v1579 = vrot.slane %v1577, 4
        %v1580 = vsel %vm618, %v1578, %v1579
        %vm1581 = vcmask 138240
        %v1582 = vsel %vm1581, %v1575, %v1580
        %v1583 = vsel %vm1581, %v1577, %v1579
        %v1586 = vadd.f32 %v1529, %v1582
        %v1587 = vadd.f32 %v1530, %v1583
        %1588 = vset.pattern.permute.xlu0 37
        %1589 = vperm.xlu0 %1588, %v565
        %v1590 = vpop.permute.xlu0 %1589
        %v1592 = vunpack.c.l.s4 839922192
        %v1593 = vunpack.c.0.s8 %v1592
        %v1594 = vlaneseq
        %v1595 = vshrl.u32 %v1594, 7
        %v1596 = vsub.s32 %v1593, %v1595
        %v1597 = vrot.slane %v1590, %v1596
        %v1599 = vmul.f32 %v929, %v1597
        %v1600 = vmul.f32 %v930, %v1597
        %1603 = vrot.lane.b32.xlu0 %v1599, 17
        %v1604 = vpop.permute.xlu0 %1603
        %1605 = vrot.lane.b32.xlu0 %v1600, 17
        %v1606 = vpop.permute.xlu0 %1605
        %v1607 = vrot.slane %v1604, 4
        %v1608 = vrot.slane %v1606, 4
        %v1609 = vsel %vm618, %v1607, %v1608
        %v1610 = vsel %vm1581, %v1604, %v1609
        %v1611 = vsel %vm1581, %v1606, %v1608
        %v1614 = vadd.f32 %v1557, %v1610
        %v1615 = vadd.f32 %v1558, %v1611
        %1616 = vset.pattern.permute.xlu0 38
        %1617 = vperm.xlu0 %1616, %v565
        %v1618 = vpop.permute.xlu0 %1617
        %v1620 = vunpack.c.l.s4 839922192
        %v1621 = vunpack.c.0.s8 %v1620
        %v1622 = vlaneseq
        %v1623 = vshrl.u32 %v1622, 7
        %v1624 = vsub.s32 %v1621, %v1623
        %v1625 = vrot.slane %v1618, %v1624
        %v1627 = vmul.f32 %v929, %v1625
        %v1628 = vmul.f32 %v930, %v1625
        %1631 = vrot.lane.b32.xlu0 %v1627, 15
        %v1632 = vpop.permute.xlu0 %1631
        %1633 = vrot.lane.b32.xlu0 %v1628, 15
        %v1634 = vpop.permute.xlu0 %1633
        %v1635 = vrot.slane %v1632, 4
        %v1636 = vrot.slane %v1634, 4
        %v1637 = vsel %vm618, %v1635, %v1636
        %vm1638 = vcmask 121856
        %v1639 = vsel %vm1638, %v1632, %v1637
        %v1640 = vsel %vm1638, %v1634, %v1636
        %v1643 = vadd.f32 %v1586, %v1639
        %v1644 = vadd.f32 %v1587, %v1640
        %1645 = vset.pattern.permute.xlu0 39
        %1646 = vperm.xlu0 %1645, %v565
        %v1647 = vpop.permute.xlu0 %1646
        %v1649 = vunpack.c.l.s4 839922192
        %v1650 = vunpack.c.0.s8 %v1649
        %v1651 = vlaneseq
        %v1652 = vshrl.u32 %v1651, 7
        %v1653 = vsub.s32 %v1650, %v1652
        %v1654 = vrot.slane %v1647, %v1653
        %v1656 = vmul.f32 %v929, %v1654
        %v1657 = vmul.f32 %v930, %v1654
        %1660 = vrot.lane.b32.xlu0 %v1656, 15
        %v1661 = vpop.permute.xlu0 %1660
        %1662 = vrot.lane.b32.xlu0 %v1657, 15
        %v1663 = vpop.permute.xlu0 %1662
        %v1664 = vrot.slane %v1661, 4
        %v1665 = vrot.slane %v1663, 4
        %v1666 = vsel %vm618, %v1664, %v1665
        %v1667 = vsel %vm1638, %v1661, %v1666
        %v1668 = vsel %vm1638, %v1663, %v1665
        %v1671 = vadd.f32 %v1614, %v1667
        %v1672 = vadd.f32 %v1615, %v1668
        %1673 = vset.pattern.permute.xlu0 40
        %1674 = vperm.xlu0 %1673, %v565
        %v1675 = vpop.permute.xlu0 %1674
        %v1677 = vunpack.c.l.s4 839922192
        %v1678 = vunpack.c.0.s8 %v1677
        %v1679 = vlaneseq
        %v1680 = vshrl.u32 %v1679, 7
        %v1681 = vsub.s32 %v1678, %v1680
        %v1682 = vrot.slane %v1675, %v1681
        %v1684 = vmul.f32 %v929, %v1682
        %v1685 = vmul.f32 %v930, %v1682
        %1688 = vrot.lane.b32.xlu0 %v1684, 13
        %v1689 = vpop.permute.xlu0 %1688
        %1690 = vrot.lane.b32.xlu0 %v1685, 13
        %v1691 = vpop.permute.xlu0 %1690
        %v1692 = vrot.slane %v1689, 4
        %v1693 = vrot.slane %v1691, 4
        %v1694 = vsel %vm618, %v1692, %v1693
        %vm1695 = vcmask 105472
        %v1696 = vsel %vm1695, %v1689, %v1694
        %v1697 = vsel %vm1695, %v1691, %v1693
        %v1700 = vadd.f32 %v1643, %v1696
        %v1701 = vadd.f32 %v1644, %v1697
        %1702 = vset.pattern.permute.xlu0 41
        %1703 = vperm.xlu0 %1702, %v565
        %v1704 = vpop.permute.xlu0 %1703
        %v1706 = vunpack.c.l.s4 839922192
        %v1707 = vunpack.c.0.s8 %v1706
        %v1708 = vlaneseq
        %v1709 = vshrl.u32 %v1708, 7
        %v1710 = vsub.s32 %v1707, %v1709
        %v1711 = vrot.slane %v1704, %v1710
        %v1713 = vmul.f32 %v929, %v1711
        %v1714 = vmul.f32 %v930, %v1711
        %1717 = vrot.lane.b32.xlu0 %v1713, 13
        %v1718 = vpop.permute.xlu0 %1717
        %1719 = vrot.lane.b32.xlu0 %v1714, 13
        %v1720 = vpop.permute.xlu0 %1719
        %v1721 = vrot.slane %v1718, 4
        %v1722 = vrot.slane %v1720, 4
        %v1723 = vsel %vm618, %v1721, %v1722
        %v1724 = vsel %vm1695, %v1718, %v1723
        %v1725 = vsel %vm1695, %v1720, %v1722
        %v1728 = vadd.f32 %v1671, %v1724
        %v1729 = vadd.f32 %v1672, %v1725
        %v1730 = vld [vmem:[#allocation2 + $0x4] sm:$0xff]
        %v1731 = vld [vmem:[#allocation2 + $0xc] sm:$0xf]
        %1732 = vset.pattern.permute.xlu0 42
        %1733 = vperm.xlu0 %1732, %v565
        %v1734 = vpop.permute.xlu0 %1733
        %v1736 = vunpack.c.l.s4 839922192
        %v1737 = vunpack.c.0.s8 %v1736
        %v1738 = vlaneseq
        %v1739 = vshrl.u32 %v1738, 7
        %v1740 = vsub.s32 %v1737, %v1739
        %v1741 = vrot.slane %v1734, %v1740
        %v1743 = vmul.f32 %v1730, %v1741
        %v1744 = vmul.f32 %v1731, %v1741
        %1747 = vrot.lane.b32.xlu0 %v1743, 124
        %v1748 = vpop.permute.xlu0 %1747
        %1749 = vrot.lane.b32.xlu0 %v1744, 124
        %v1750 = vpop.permute.xlu0 %1749
        %v1751 = vrot.slane %v1748, 4
        %v1752 = vrot.slane %v1750, 4
        %v1753 = vsel %vm618, %v1751, %v1752
        %v1754 = vsel %vm675, %v1748, %v1753
        %v1757 = vadd.f32 %v1700, %v1754
        %v1758 = vadd.f32 %v1701, %v1750
        %1759 = vset.pattern.permute.xlu0 43
        %1760 = vperm.xlu0 %1759, %v565
        %v1761 = vpop.permute.xlu0 %1760
        %v1763 = vunpack.c.l.s4 839922192
        %v1764 = vunpack.c.0.s8 %v1763
        %v1765 = vlaneseq
        %v1766 = vshrl.u32 %v1765, 7
        %v1767 = vsub.s32 %v1764, %v1766
        %v1768 = vrot.slane %v1761, %v1767
        %v1770 = vmul.f32 %v1730, %v1768
        %v1771 = vmul.f32 %v1731, %v1768
        %1774 = vrot.lane.b32.xlu0 %v1770, 124
        %v1775 = vpop.permute.xlu0 %1774
        %1776 = vrot.lane.b32.xlu0 %v1771, 124
        %v1777 = vpop.permute.xlu0 %1776
        %v1778 = vrot.slane %v1775, 4
        %v1779 = vrot.slane %v1777, 4
        %v1780 = vsel %vm618, %v1778, %v1779
        %v1781 = vsel %vm675, %v1775, %v1780
        %v1784 = vadd.f32 %v1728, %v1781
        %v1785 = vadd.f32 %v1729, %v1777
        %1786 = vset.pattern.permute.xlu0 44
        %1787 = vperm.xlu0 %1786, %v565
        %v1788 = vpop.permute.xlu0 %1787
        %v1790 = vunpack.c.l.s4 839922192
        %v1791 = vunpack.c.0.s8 %v1790
        %v1792 = vlaneseq
        %v1793 = vshrl.u32 %v1792, 7
        %v1794 = vsub.s32 %v1791, %v1793
        %v1795 = vrot.slane %v1788, %v1794
        %v1797 = vmul.f32 %v1730, %v1795
        %v1798 = vmul.f32 %v1731, %v1795
        %1801 = vrot.lane.b32.xlu0 %v1797, 122
        %v1802 = vpop.permute.xlu0 %1801
        %1803 = vrot.lane.b32.xlu0 %v1798, 122
        %v1804 = vpop.permute.xlu0 %1803
        %v1805 = vrot.slane %v1802, 4
        %v1806 = vrot.slane %v1804, 4
        %v1807 = vsel %vm618, %v1805, %v1806
        %v1808 = vsel %vm730, %v1802, %v1807
        %v1811 = vadd.f32 %v1757, %v1808
        %v1812 = vadd.f32 %v1758, %v1804
        %1813 = vset.pattern.permute.xlu0 45
        %1814 = vperm.xlu0 %1813, %v565
        %v1815 = vpop.permute.xlu0 %1814
        %v1817 = vunpack.c.l.s4 839922192
        %v1818 = vunpack.c.0.s8 %v1817
        %v1819 = vlaneseq
        %v1820 = vshrl.u32 %v1819, 7
        %v1821 = vsub.s32 %v1818, %v1820
        %v1822 = vrot.slane %v1815, %v1821
        %v1824 = vmul.f32 %v1730, %v1822
        %v1825 = vmul.f32 %v1731, %v1822
        %1828 = vrot.lane.b32.xlu0 %v1824, 122
        %v1829 = vpop.permute.xlu0 %1828
        %1830 = vrot.lane.b32.xlu0 %v1825, 122
        %v1831 = vpop.permute.xlu0 %1830
        %v1832 = vrot.slane %v1829, 4
        %v1833 = vrot.slane %v1831, 4
        %v1834 = vsel %vm618, %v1832, %v1833
        %v1835 = vsel %vm730, %v1829, %v1834
        %v1838 = vadd.f32 %v1784, %v1835
        %v1839 = vadd.f32 %v1785, %v1831
        %1840 = vset.pattern.permute.xlu0 46
        %1841 = vperm.xlu0 %1840, %v565
        %v1842 = vpop.permute.xlu0 %1841
        %v1844 = vunpack.c.l.s4 839922192
        %v1845 = vunpack.c.0.s8 %v1844
        %v1846 = vlaneseq
        %v1847 = vshrl.u32 %v1846, 7
        %v1848 = vsub.s32 %v1845, %v1847
        %v1849 = vrot.slane %v1842, %v1848
        %v1851 = vmul.f32 %v1730, %v1849
        %v1852 = vmul.f32 %v1731, %v1849
        %1855 = vrot.lane.b32.xlu0 %v1851, 120
        %v1856 = vpop.permute.xlu0 %1855
        %1857 = vrot.lane.b32.xlu0 %v1852, 120
        %v1858 = vpop.permute.xlu0 %1857
        %v1859 = vrot.slane %v1856, 4
        %v1860 = vrot.slane %v1858, 4
        %v1861 = vsel %vm618, %v1859, %v1860
        %vm1862 = vcmask 982016
        %v1863 = vsel %vm1862, %v1856, %v1861
        %v1866 = vadd.f32 %v1811, %v1863
        %v1867 = vadd.f32 %v1812, %v1858
        %1868 = vset.pattern.permute.xlu0 47
        %1869 = vperm.xlu0 %1868, %v565
        %v1870 = vpop.permute.xlu0 %1869
        %v1872 = vunpack.c.l.s4 839922192
        %v1873 = vunpack.c.0.s8 %v1872
        %v1874 = vlaneseq
        %v1875 = vshrl.u32 %v1874, 7
        %v1876 = vsub.s32 %v1873, %v1875
        %v1877 = vrot.slane %v1870, %v1876
        %v1879 = vmul.f32 %v1730, %v1877
        %v1880 = vmul.f32 %v1731, %v1877
        %1883 = vrot.lane.b32.xlu0 %v1879, 120
        %v1884 = vpop.permute.xlu0 %1883
        %1885 = vrot.lane.b32.xlu0 %v1880, 120
        %v1886 = vpop.permute.xlu0 %1885
        %v1887 = vrot.slane %v1884, 4
        %v1888 = vrot.slane %v1886, 4
        %v1889 = vsel %vm618, %v1887, %v1888
        %v1890 = vsel %vm1862, %v1884, %v1889
        %v1893 = vadd.f32 %v1838, %v1890
        %v1894 = vadd.f32 %v1839, %v1886
        %1895 = vset.pattern.permute.xlu0 48
        %1896 = vperm.xlu0 %1895, %v565
        %v1897 = vpop.permute.xlu0 %1896
        %v1899 = vunpack.c.l.s4 839922192
        %v1900 = vunpack.c.0.s8 %v1899
        %v1901 = vlaneseq
        %v1902 = vshrl.u32 %v1901, 7
        %v1903 = vsub.s32 %v1900, %v1902
        %v1904 = vrot.slane %v1897, %v1903
        %v1906 = vmul.f32 %v1730, %v1904
        %v1907 = vmul.f32 %v1731, %v1904
        %1910 = vrot.lane.b32.xlu0 %v1906, 118
        %v1911 = vpop.permute.xlu0 %1910
        %1912 = vrot.lane.b32.xlu0 %v1907, 118
        %v1913 = vpop.permute.xlu0 %1912
        %v1914 = vrot.slane %v1911, 4
        %v1915 = vrot.slane %v1913, 4
        %v1916 = vsel %vm618, %v1914, %v1915
        %v1917 = vsel %vm543, %v1911, %v1916
        %v1920 = vadd.f32 %v1866, %v1917
        %v1921 = vadd.f32 %v1867, %v1913
        %1924 = vrot.lane.b32.xlu0 %v1893, 127
        %v1925 = vpop.permute.xlu0 %1924
        %1926 = vrot.lane.b32.xlu0 %v1894, 127
        %v1927 = vpop.permute.xlu0 %1926
        %v1928 = vrot.slane %v1925, 4
        %v1929 = vrot.slane %v1927, 4
        %v1930 = vsel %vm618, %v1928, %v1929
        %vm1931 = vcmask 1039360
        %v1932 = vsel %vm1931, %v1925, %v1930
        %v1935 = vadd.f32 %v1920, %v1932
        %v1936 = vadd.f32 %v1921, %v1927
        %v1937 = vld [vmem:[%s6] sm:$0xf]
        %1939 = vset.pattern.permute.xlu0 0
        %1940 = vperm.xlu0 %1939, %v1937
        %v1941 = vpop.permute.xlu0 %1940
        %v1943 = vunpack.c.l.s4 839922192
        %v1944 = vunpack.c.0.s8 %v1943
        %v1945 = vlaneseq
        %v1946 = vshrl.u32 %v1945, 7
        %v1947 = vsub.s32 %v1944, %v1946
        %v1948 = vrot.slane %v1941, %v1947
        %v1950 = vadd.f32 %v1935, %v1948
        %v1951 = vadd.f32 %v1936, %v1948
        %v1952 = vld [vmem:[%s2] sm:$0xff]
        %v1953 = vld [vmem:[%s2 + $0x8] sm:$0xff]
        %v1954 = vld [vmem:[%s2 + $0x10] sm:$0xff]
        %v1955 = vld [vmem:[%s2 + $0x18] sm:$0xff]
        %v1956 = vld [vmem:[%s4] sm:$0xf]
        %v1958 = vcombine.high %v1950, %v1950
        %v1960 = vpack.c.bf16 %v1950, %v1950
        %v1961 = vpack.c.bf16 %v1958, %v1958
        %v1962 = vpack.c.bf16 %v1951, %v1951
        %v1963 = vld [vmem:[%s1] sm:$0xf]
        %v1964 = vld [vmem:[%s1 + $0x4] sm:$0xf]
        %v1965 = vld [vmem:[%s1 + $0x8] sm:$0xf]
        %v1966 = vld [vmem:[%s1 + $0xc] sm:$0xf]
        %1968 = vset.pattern.permute.xlu0 0
        %1969 = vperm.xlu0 %1968, %v1952
        %v1970 = vpop.permute.xlu0 %1969
        %1973 = vset.pattern.permute.xlu0 0
        %1974 = vperm.xlu0 %1973, %v1953
        %v1975 = vpop.permute.xlu0 %1974
        %1978 = vset.pattern.permute.xlu0 0
        %1979 = vperm.xlu0 %1978, %v1954
        %v1980 = vpop.permute.xlu0 %1979
        %1983 = vset.pattern.permute.xlu0 0
        %1984 = vperm.xlu0 %1983, %v1955
        %v1985 = vpop.permute.xlu0 %1984
        %v1991 = vunpack.c.l.b16 %v1963
        %v1992 = vunpack.c.l.b16 %v1964
        %v1993 = vunpack.c.l.b16 %v1965
        %v1994 = vunpack.c.l.b16 %v1966
        %v1995 = vpack.c.b16 %v1992, %v1991
        %v1996 = vpack.c.b16 %v1994, %v1993
        %vm1997 = vcmask 31744
        %v1999 = vsel %vm1997, %v1995, 0
        %v2002 = vsel %vm1997, %v1996, 0
        %vm2004 = vcmask 1041408
        %v2006 = vsel %vm2004, %v1960, 0
        %v2009 = vsel %vm2004, %v1961, 0
        %v2012 = vsel %vm2004, %v1962, 0
        %2014 = vmatprep.subr.bf16.mxu0 0
        %2015 = vmatpush1.bf16.msra.mxu0 0
        %2016 = vmatprep.subr.bf16.mxu0 0
        %2017 = vmatpush1.bf16.msra.mxu0 0
        %2018 = vmatprep.subr.bf16.mxu0 0
        %2019 = vmatpush1.bf16.msra.mxu0 0
        %2020 = vmatprep.subr.bf16.mxu0 0
        %2021 = vmatpush1.bf16.msra.mxu0 0
        %2022 = vmatprep.subr.bf16.mxu0 0
        %2023 = vmatpush1.bf16.msra.mxu0 0
        %2024 = vmatprep.subr.bf16.mxu0 0
        %2025 = vmatpush1.bf16.msra.mxu0 0
        %2026 = vmatprep.subr.bf16.mxu0 0
        %2027 = vmatpush1.bf16.msra.mxu0 0
        %2028 = vmatprep.subr.bf16.mxu0 %v2009
        %2029 = vmatpush1.bf16.msra.mxu0 %v2006
        %2030 = vmatprep.subr.bf16.mxu0 0
        %2031 = vmatpush2.bf16.msra.mxu0 0
        %2032 = vmatprep.subr.bf16.mxu0 0
        %2033 = vmatpush2.bf16.msra.mxu0 0
        %2034 = vmatprep.subr.bf16.mxu0 0
        %2035 = vmatpush2.bf16.msra.mxu0 0
        %2036 = vmatprep.subr.bf16.mxu0 0
        %2037 = vmatpush2.bf16.msra.mxu0 0
        %2038 = vmatprep.subr.bf16.mxu0 0
        %2039 = vmatpush2.bf16.msra.mxu0 0
        %2040 = vmatprep.subr.bf16.mxu0 0
        %2041 = vmatpush2.bf16.msra.mxu0 0
        %2042 = vmatprep.subr.bf16.mxu0 0
        %2043 = vmatpush2.bf16.msra.mxu0 0
        %2044 = vmatprep.subr.bf16.mxu0 0
        %2045 = vmatpush2.bf16.msra.mxu0 0
        %2046 = vmatprep.mubr.bf16.mxu0 0
        %2047 = vmatmul.mubr.bf16.gmra.mxu0 %v1999
        %v2048 = vpop.f32.mrf.mxu0
        %v2049 = vadd.f32 %v1970, %v2048
        %v2050 = vpop.f32.mrf.mxu0
        %v2051 = vadd.f32 %v1970, %v2050
        %v2052 = vpop.f32.mrf.mxu0
        %v2053 = vadd.f32 %v1975, %v2052
        %v2054 = vpop.f32.mrf.mxu0
        %v2055 = vadd.f32 %v1975, %v2054
        %2056 = vmatprep.mubr.bf16.mxu0 0
        %2057 = vmatmul.mubr.bf16.gmra.mxu0 %v2002
        %v2058 = vpop.f32.mrf.mxu0
        %v2059 = vadd.f32 %v1980, %v2058
        %v2060 = vpop.f32.mrf.mxu0
        %v2061 = vadd.f32 %v1980, %v2060
        %v2062 = vpop.f32.mrf.mxu0
        %v2063 = vadd.f32 %v1985, %v2062
        %v2064 = vpop.f32.mrf.mxu0
        %v2065 = vadd.f32 %v1985, %v2064
        %2066 = vdwg.mxu0
        %2067 = vmatprep.subr.bf16.mxu0 0
        %2068 = vmatpush1.bf16.msra.mxu0 0
        %2069 = vmatprep.subr.bf16.mxu0 0
        %2070 = vmatpush1.bf16.msra.mxu0 0
        %2071 = vmatprep.subr.bf16.mxu0 0
        %2072 = vmatpush1.bf16.msra.mxu0 0
        %2073 = vmatprep.subr.bf16.mxu0 0
        %2074 = vmatpush1.bf16.msra.mxu0 0
        %2075 = vmatprep.subr.bf16.mxu0 0
        %2076 = vmatpush1.bf16.msra.mxu0 0
        %2077 = vmatprep.subr.bf16.mxu0 0
        %2078 = vmatpush1.bf16.msra.mxu0 0
        %2079 = vmatprep.subr.bf16.mxu0 0
        %2080 = vmatpush1.bf16.msra.mxu0 0
        %2081 = vmatprep.subr.bf16.mxu0 0
        %2082 = vmatpush1.bf16.msra.mxu0 %v2012
        %2083 = vmatprep.subr.bf16.mxu0 0
        %2084 = vmatpush2.bf16.msra.mxu0 0
        %2085 = vmatprep.subr.bf16.mxu0 0
        %2086 = vmatpush2.bf16.msra.mxu0 0
        %2087 = vmatprep.subr.bf16.mxu0 0
        %2088 = vmatpush2.bf16.msra.mxu0 0
        %2089 = vmatprep.subr.bf16.mxu0 0
        %2090 = vmatpush2.bf16.msra.mxu0 0
        %2091 = vmatprep.subr.bf16.mxu0 0
        %2092 = vmatpush2.bf16.msra.mxu0 0
        %2093 = vmatprep.subr.bf16.mxu0 0
        %2094 = vmatpush2.bf16.msra.mxu0 0
        %2095 = vmatprep.subr.bf16.mxu0 0
        %2096 = vmatpush2.bf16.msra.mxu0 0
        %2097 = vmatprep.subr.bf16.mxu0 0
        %2098 = vmatpush2.bf16.msra.mxu0 0
        %2099 = vmatprep.mubr.bf16.mxu0 0
        %2100 = vmatmul.mubr.bf16.gmra.mxu0 %v1999
        %v2101 = vpop.f32.mrf.mxu0
        %v2102 = vadd.f32 %v1970, %v2101
        %v2103 = vpop.f32.mrf.mxu0
        %v2104 = vpop.f32.mrf.mxu0
        %v2105 = vadd.f32 %v1975, %v2104
        %v2106 = vpop.f32.mrf.mxu0
        %2107 = vmatprep.mubr.bf16.mxu0 0
        %2108 = vmatmul.mubr.bf16.gmra.mxu0 %v2002
        %v2109 = vpop.f32.mrf.mxu0
        %v2110 = vadd.f32 %v1980, %v2109
        %v2111 = vpop.f32.mrf.mxu0
        %v2112 = vpop.f32.mrf.mxu0
        %v2113 = vadd.f32 %v1985, %v2112
        %v2114 = vpop.f32.mrf.mxu0
        %2115 = vdwg.mxu0
        %v2116 = vmax.f32 %v2049, 0.0
        %v2117 = vmax.f32 %v2051, 0.0
        %v2118 = vmax.f32 %v2102, 0.0
        %v2119 = vmax.f32 %v2053, 0.0
        %v2120 = vmax.f32 %v2055, 0.0
        %v2121 = vmax.f32 %v2105, 0.0
        %v2122 = vmin.f32 %v2116, 6.0
        %v2123 = vmin.f32 %v2117, 6.0
        %v2124 = vmin.f32 %v2118, 6.0
        %v2125 = vmin.f32 %v2119, 6.0
        %v2126 = vmin.f32 %v2120, 6.0
        %v2127 = vmin.f32 %v2121, 6.0
        %v2128 = vmul.f32 %v2122, %v2059
        %v2129 = vmul.f32 %v2123, %v2061
        %v2130 = vmul.f32 %v2124, %v2110
        %v2131 = vmul.f32 %v2125, %v2063
        %v2132 = vmul.f32 %v2126, %v2065
        %v2133 = vmul.f32 %v2127, %v2113
        %v2134 = vld [vmem:[%s3] sm:$0x3]
        %v2135 = vpack.c.bf16 %v2131, %v2128
        %v2136 = vpack.c.bf16 %v2132, %v2129
        %v2137 = vpack.c.bf16 %v2133, %v2130
        %2139 = vset.pattern.permute.xlu0 0
        %2140 = vperm.xlu0 %2139, %v1956
        %v2141 = vpop.permute.xlu0 %2140
        %vm2143 = vcmask 130048
        %v2145 = vsel %vm2143, %v2134, 0
        %2147 = vmatprep.subr.bf16.mxu0 0
        %2148 = vmatpush1.bf16.msra.mxu0 0
        %2149 = vmatprep.subr.bf16.mxu0 0
        %2150 = vmatpush1.bf16.msra.mxu0 0
        %2151 = vmatprep.subr.bf16.mxu0 0
        %2152 = vmatpush1.bf16.msra.mxu0 0
        %2153 = vmatprep.subr.bf16.mxu0 0
        %2154 = vmatpush1.bf16.msra.mxu0 0
        %2155 = vmatprep.subr.bf16.mxu0 0
        %2156 = vmatpush1.bf16.msra.mxu0 0
        %2157 = vmatprep.subr.bf16.mxu0 0
        %2158 = vmatpush1.bf16.msra.mxu0 0
        %2159 = vmatprep.subr.bf16.mxu0 0
        %2160 = vmatpush1.bf16.msra.mxu0 0
        %2161 = vmatprep.subr.bf16.mxu0 %v2136
        %2162 = vmatpush1.bf16.msra.mxu0 %v2135
        %2163 = vmatprep.subr.bf16.mxu0 0
        %2164 = vmatpush2.bf16.msra.mxu0 0
        %2165 = vmatprep.subr.bf16.mxu0 0
        %2166 = vmatpush2.bf16.msra.mxu0 0
        %2167 = vmatprep.subr.bf16.mxu0 0
        %2168 = vmatpush2.bf16.msra.mxu0 0
        %2169 = vmatprep.subr.bf16.mxu0 0
        %2170 = vmatpush2.bf16.msra.mxu0 0
        %2171 = vmatprep.subr.bf16.mxu0 0
        %2172 = vmatpush2.bf16.msra.mxu0 0
        %2173 = vmatprep.subr.bf16.mxu0 0
        %2174 = vmatpush2.bf16.msra.mxu0 0
        %2175 = vmatprep.subr.bf16.mxu0 0
        %2176 = vmatpush2.bf16.msra.mxu0 0
        %2177 = vmatprep.subr.bf16.mxu0 0
        %2178 = vmatpush2.bf16.msra.mxu0 0
        %2179 = vmatprep.mubr.bf16.mxu0 0
        %2180 = vmatmul.mubr.bf16.gmra.mxu0 %v2145
        %v2181 = vpop.f32.mrf.mxu0
        %v2182 = vadd.f32 %v2141, %v2181
        %v2183 = vpop.f32.mrf.mxu0
        %v2184 = vadd.f32 %v2141, %v2183
        %v2185 = vpop.f32.mrf.mxu0
        %v2186 = vpop.f32.mrf.mxu0
        %2187 = vdwg.mxu0
        %2188 = vmatprep.subr.bf16.mxu0 0
        %2189 = vmatpush1.bf16.msra.mxu0 0
        %2190 = vmatprep.subr.bf16.mxu0 0
        %2191 = vmatpush1.bf16.msra.mxu0 0
        %2192 = vmatprep.subr.bf16.mxu0 0
        %2193 = vmatpush1.bf16.msra.mxu0 0
        %2194 = vmatprep.subr.bf16.mxu0 0
        %2195 = vmatpush1.bf16.msra.mxu0 0
        %2196 = vmatprep.subr.bf16.mxu0 0
        %2197 = vmatpush1.bf16.msra.mxu0 0
        %2198 = vmatprep.subr.bf16.mxu0 0
        %2199 = vmatpush1.bf16.msra.mxu0 0
        %2200 = vmatprep.subr.bf16.mxu0 0
        %2201 = vmatpush1.bf16.msra.mxu0 0
        %2202 = vmatprep.subr.bf16.mxu0 0
        %2203 = vmatpush1.bf16.msra.mxu0 %v2137
        %2204 = vmatprep.subr.bf16.mxu0 0
        %2205 = vmatpush2.bf16.msra.mxu0 0
        %2206 = vmatprep.subr.bf16.mxu0 0
        %2207 = vmatpush2.bf16.msra.mxu0 0
        %2208 = vmatprep.subr.bf16.mxu0 0
        %2209 = vmatpush2.bf16.msra.mxu0 0
        %2210 = vmatprep.subr.bf16.mxu0 0
        %2211 = vmatpush2.bf16.msra.mxu0 0
        %2212 = vmatprep.subr.bf16.mxu0 0
        %2213 = vmatpush2.bf16.msra.mxu0 0
        %2214 = vmatprep.subr.bf16.mxu0 0
        %2215 = vmatpush2.bf16.msra.mxu0 0
        %2216 = vmatprep.subr.bf16.mxu0 0
        %2217 = vmatpush2.bf16.msra.mxu0 0
        %2218 = vmatprep.subr.bf16.mxu0 0
        %2219 = vmatpush2.bf16.msra.mxu0 0
        %2220 = vmatprep.mubr.bf16.mxu0 0
        %2221 = vmatmul.mubr.bf16.gmra.mxu0 %v2145
        %v2222 = vpop.f32.mrf.mxu0
        %v2223 = vadd.f32 %v2141, %v2222
        %v2224 = vpop.f32.mrf.mxu0
        %v2225 = vpop.f32.mrf.mxu0
        %v2226 = vpop.f32.mrf.mxu0
        %2227 = vdwg.mxu0
        %2229 = vrot.lane.b32.xlu0 %v2182, 3
        %v2230 = vpop.permute.xlu0 %2229
        %v2232 = vsel %vm343, 0.0, %v2230
        %v2233 = vsel %vm345, %v2232, 0.0
        %2235 = vrot.lane.b32.xlu0 %v2233, 66
        %v2236 = vpop.permute.xlu0 %2235
        %2238 = vst.msk [vmem:[#allocation3] sm:$0xf] %vm351, %v2236
        %2239 = vrot.lane.b32.xlu0 %v2182, 109
        %v2240 = vpop.permute.xlu0 %2239
        %v2242 = vsel %vm343, 0.0, %v2240
        %v2243 = vsel %vm345, %v2242, 0.0
        %2245 = vrot.lane.b32.xlu0 %v2243, 88
        %v2246 = vpop.permute.xlu0 %2245
        %2248 = vst.msk [vmem:[#allocation3] sm:$0xf] %vm364, %v2246
        %2249 = vrot.lane.b32.xlu0 %v2182, 87
        %v2250 = vpop.permute.xlu0 %2249
        %v2252 = vsel %vm343, 0.0, %v2250
        %v2253 = vsel %vm345, %v2252, 0.0
        %2255 = vrot.lane.b32.xlu0 %v2253, 110
        %v2256 = vpop.permute.xlu0 %2255
        %v2257 = vrot.slane %v2256, 4
        %v2258 = vsel %vm377, %v2257, %v2256
        %2260 = vst.msk [vmem:[#allocation3] sm:$0xff] %vm382, %v2258
        %2261 = vrot.lane.b32.xlu0 %v2182, 65
        %v2262 = vpop.permute.xlu0 %2261
        %v2264 = vsel %vm343, 0.0, %v2262
        %v2265 = vsel %vm345, %v2264, 0.0
        %2267 = vrot.lane.b32.xlu0 %v2265, 4
        %v2268 = vpop.permute.xlu0 %2267
        %2270 = vst.msk [vmem:[#allocation3 + $0x4] sm:$0xf] %vm395, %v2268
        %2271 = vrot.lane.b32.xlu0 %v2182, 43
        %v2272 = vpop.permute.xlu0 %2271
        %v2274 = vsel %vm343, 0.0, %v2272
        %v2275 = vsel %vm345, %v2274, 0.0
        %2277 = vrot.lane.b32.xlu0 %v2275, 26
        %v2278 = vpop.permute.xlu0 %2277
        %2280 = vst.msk [vmem:[#allocation3 + $0x4] sm:$0xf] %vm408, %v2278
        %2281 = vrot.lane.b32.xlu0 %v2182, 21
        %v2282 = vpop.permute.xlu0 %2281
        %v2284 = vsel %vm343, 0.0, %v2282
        %v2285 = vsel %vm345, %v2284, 0.0
        %2287 = vrot.lane.b32.xlu0 %v2285, 48
        %v2288 = vpop.permute.xlu0 %2287
        %2290 = vst.msk [vmem:[#allocation3 + $0x4] sm:$0xf] %vm421, %v2288
        %2292 = vrot.lane.b32.xlu0 %v2184, 127
        %v2293 = vpop.permute.xlu0 %2292
        %v2295 = vsel %vm343, 0.0, %v2293
        %v2296 = vsel %vm345, %v2295, 0.0
        %2298 = vrot.lane.b32.xlu0 %v2296, 70
        %v2299 = vpop.permute.xlu0 %2298
        %2301 = vst.msk [vmem:[#allocation3 + $0x4] sm:$0xf] %vm434, %v2299
        %2302 = vrot.lane.b32.xlu0 %v2184, 105
        %v2303 = vpop.permute.xlu0 %2302
        %v2305 = vsel %vm343, 0.0, %v2303
        %v2306 = vsel %vm345, %v2305, 0.0
        %2308 = vrot.lane.b32.xlu0 %v2306, 92
        %v2309 = vpop.permute.xlu0 %2308
        %2311 = vst.msk [vmem:[#allocation3 + $0x4] sm:$0xf] %vm447, %v2309
        %2312 = vrot.lane.b32.xlu0 %v2184, 83
        %v2313 = vpop.permute.xlu0 %2312
        %v2315 = vsel %vm343, 0.0, %v2313
        %v2316 = vsel %vm345, %v2315, 0.0
        %2318 = vrot.lane.b32.xlu0 %v2316, 114
        %v2319 = vpop.permute.xlu0 %2318
        %v2320 = vrot.slane %v2319, 4
        %v2321 = vsel %vm460, %v2320, %v2319
        %2323 = vst.msk [vmem:[#allocation3 + $0x4] sm:$0xff] %vm465, %v2321
        %2324 = vrot.lane.b32.xlu0 %v2184, 61
        %v2325 = vpop.permute.xlu0 %2324
        %v2327 = vsel %vm343, 0.0, %v2325
        %v2328 = vsel %vm345, %v2327, 0.0
        %2330 = vrot.lane.b32.xlu0 %v2328, 8
        %v2331 = vpop.permute.xlu0 %2330
        %2333 = vst.msk [vmem:[#allocation3 + $0x8] sm:$0xf] %vm478, %v2331
        %2334 = vrot.lane.b32.xlu0 %v2184, 39
        %v2335 = vpop.permute.xlu0 %2334
        %v2337 = vsel %vm343, 0.0, %v2335
        %v2338 = vsel %vm345, %v2337, 0.0
        %2340 = vrot.lane.b32.xlu0 %v2338, 30
        %v2341 = vpop.permute.xlu0 %2340
        %2343 = vst.msk [vmem:[#allocation3 + $0x8] sm:$0xf] %vm491, %v2341
        %2345 = vrot.lane.b32.xlu0 %v2184, 17
        %v2346 = vpop.permute.xlu0 %2345
        %2347 = vrot.lane.b32.xlu0 %v2223, 17
        %v2348 = vpop.permute.xlu0 %2347
        %v2349 = vsel %vm1581, %v2346, %v2348
        %v2351 = vsel %vm343, 0.0, %v2349
        %v2352 = vsel %vm345, %v2351, 0.0
        %2354 = vrot.lane.b32.xlu0 %v2352, 52
        %v2355 = vpop.permute.xlu0 %2354
        %2357 = vst.msk [vmem:[#allocation3 + $0x8] sm:$0xf] %vm504, %v2355
        %2358 = vrot.lane.b32.xlu0 %v2223, 123
        %v2359 = vpop.permute.xlu0 %2358
        %v2361 = vsel %vm343, 0.0, %v2359
        %v2362 = vsel %vm345, %v2361, 0.0
        %2364 = vrot.lane.b32.xlu0 %v2362, 74
        %v2365 = vpop.permute.xlu0 %2364
        %2367 = vst.msk [vmem:[#allocation3 + $0x8] sm:$0xf] %vm517, %v2365
        %2368 = vrot.lane.b32.xlu0 %v2223, 101
        %v2369 = vpop.permute.xlu0 %2368
        %v2371 = vsel %vm343, 0.0, %v2369
        %v2372 = vsel %vm345, %v2371, 0.0
        %2374 = vrot.lane.b32.xlu0 %v2372, 96
        %v2375 = vpop.permute.xlu0 %2374
        %2377 = vst.msk [vmem:[#allocation3 + $0x8] sm:$0xf] %vm530, %v2375
        %2378 = vrot.lane.b32.xlu0 %v2223, 79
        %v2379 = vpop.permute.xlu0 %2378
        %v2381 = vsel %vm343, 0.0, %v2379
        %v2382 = vsel %vm345, %v2381, 0.0
        %2384 = vrot.lane.b32.xlu0 %v2382, 118
        %v2385 = vpop.permute.xlu0 %2384
        %v2386 = vrot.slane %v2385, 4
        %v2387 = vsel %vm543, %v2386, %v2385
        %2389 = vst.msk [vmem:[#allocation3 + $0x8] sm:$0xff] %vm548, %v2387
        %2390 = vrot.lane.b32.xlu0 %v2223, 57
        %v2391 = vpop.permute.xlu0 %2390
        %v2393 = vsel %vm343, 0.0, %v2391
        %v2394 = vsel %vm345, %v2393, 0.0
        %2396 = vrot.lane.b32.xlu0 %v2394, 12
        %v2397 = vpop.permute.xlu0 %2396
        %2399 = vst.msk [vmem:[#allocation3 + $0xc] sm:$0xf] %vm561, %v2397
        %v2400 = vld [vmem:[#allocation3] sm:$0xff]
        %v2401 = vld [vmem:[#allocation3 + $0x8] sm:$0xf]
        %v2402 = vld [vmem:[%s7] sm:$0xf]
        %2404 = vset.pattern.permute.xlu0 0
        %2405 = vperm.xlu0 %2404, %v2402
        %v2406 = vpop.permute.xlu0 %2405
        %v2408 = vunpack.c.l.s4 839922192
        %v2409 = vunpack.c.0.s8 %v2408
        %v2410 = vlaneseq
        %v2411 = vshrl.u32 %v2410, 7
        %v2412 = vsub.s32 %v2409, %v2411
        %v2413 = vrot.slane %v2406, %v2412
        %v2415 = vmul.f32 %v2400, %v2413
        %v2416 = vmul.f32 %v2401, %v2413
        %v2417 = vadd.f32 %v2415, 0.0
        %v2418 = vadd.f32 %v2416, 0.0
        %2419 = vset.pattern.permute.xlu0 1
        %2420 = vperm.xlu0 %2419, %v2402
        %v2421 = vpop.permute.xlu0 %2420
        %v2423 = vunpack.c.l.s4 839922192
        %v2424 = vunpack.c.0.s8 %v2423
        %v2425 = vlaneseq
        %v2426 = vshrl.u32 %v2425, 7
        %v2427 = vsub.s32 %v2424, %v2426
        %v2428 = vrot.slane %v2421, %v2427
        %v2430 = vmul.f32 %v2400, %v2428
        %v2431 = vmul.f32 %v2401, %v2428
        %v2432 = vadd.f32 %v2430, 0.0
        %v2433 = vadd.f32 %v2431, 0.0
        %2434 = vset.pattern.permute.xlu0 2
        %2435 = vperm.xlu0 %2434, %v2402
        %v2436 = vpop.permute.xlu0 %2435
        %v2438 = vunpack.c.l.s4 839922192
        %v2439 = vunpack.c.0.s8 %v2438
        %v2440 = vlaneseq
        %v2441 = vshrl.u32 %v2440, 7
        %v2442 = vsub.s32 %v2439, %v2441
        %v2443 = vrot.slane %v2436, %v2442
        %v2445 = vmul.f32 %v2400, %v2443
        %v2446 = vmul.f32 %v2401, %v2443
        %2449 = vrot.lane.b32.xlu0 %v2445, 126
        %v2450 = vpop.permute.xlu0 %2449
        %2451 = vrot.lane.b32.xlu0 %v2446, 126
        %v2452 = vpop.permute.xlu0 %2451
        %v2453 = vrot.slane %v2450, 4
        %v2454 = vrot.slane %v2452, 4
        %v2455 = vsel %vm618, %v2453, %v2454
        %v2456 = vsel %vm620, %v2450, %v2455
        %v2459 = vadd.f32 %v2417, %v2456
        %v2460 = vadd.f32 %v2418, %v2452
        %2461 = vset.pattern.permute.xlu0 3
        %2462 = vperm.xlu0 %2461, %v2402
        %v2463 = vpop.permute.xlu0 %2462
        %v2465 = vunpack.c.l.s4 839922192
        %v2466 = vunpack.c.0.s8 %v2465
        %v2467 = vlaneseq
        %v2468 = vshrl.u32 %v2467, 7
        %v2469 = vsub.s32 %v2466, %v2468
        %v2470 = vrot.slane %v2463, %v2469
        %v2472 = vmul.f32 %v2400, %v2470
        %v2473 = vmul.f32 %v2401, %v2470
        %2476 = vrot.lane.b32.xlu0 %v2472, 126
        %v2477 = vpop.permute.xlu0 %2476
        %2478 = vrot.lane.b32.xlu0 %v2473, 126
        %v2479 = vpop.permute.xlu0 %2478
        %v2480 = vrot.slane %v2477, 4
        %v2481 = vrot.slane %v2479, 4
        %v2482 = vsel %vm618, %v2480, %v2481
        %v2483 = vsel %vm620, %v2477, %v2482
        %v2486 = vadd.f32 %v2432, %v2483
        %v2487 = vadd.f32 %v2433, %v2479
        %2488 = vset.pattern.permute.xlu0 4
        %2489 = vperm.xlu0 %2488, %v2402
        %v2490 = vpop.permute.xlu0 %2489
        %v2492 = vunpack.c.l.s4 839922192
        %v2493 = vunpack.c.0.s8 %v2492
        %v2494 = vlaneseq
        %v2495 = vshrl.u32 %v2494, 7
        %v2496 = vsub.s32 %v2493, %v2495
        %v2497 = vrot.slane %v2490, %v2496
        %v2499 = vmul.f32 %v2400, %v2497
        %v2500 = vmul.f32 %v2401, %v2497
        %2503 = vrot.lane.b32.xlu0 %v2499, 124
        %v2504 = vpop.permute.xlu0 %2503
        %2505 = vrot.lane.b32.xlu0 %v2500, 124
        %v2506 = vpop.permute.xlu0 %2505
        %v2507 = vrot.slane %v2504, 4
        %v2508 = vrot.slane %v2506, 4
        %v2509 = vsel %vm618, %v2507, %v2508
        %v2510 = vsel %vm675, %v2504, %v2509
        %v2513 = vadd.f32 %v2459, %v2510
        %v2514 = vadd.f32 %v2460, %v2506
        %2515 = vset.pattern.permute.xlu0 5
        %2516 = vperm.xlu0 %2515, %v2402
        %v2517 = vpop.permute.xlu0 %2516
        %v2519 = vunpack.c.l.s4 839922192
        %v2520 = vunpack.c.0.s8 %v2519
        %v2521 = vlaneseq
        %v2522 = vshrl.u32 %v2521, 7
        %v2523 = vsub.s32 %v2520, %v2522
        %v2524 = vrot.slane %v2517, %v2523
        %v2526 = vmul.f32 %v2400, %v2524
        %v2527 = vmul.f32 %v2401, %v2524
        %2530 = vrot.lane.b32.xlu0 %v2526, 124
        %v2531 = vpop.permute.xlu0 %2530
        %2532 = vrot.lane.b32.xlu0 %v2527, 124
        %v2533 = vpop.permute.xlu0 %2532
        %v2534 = vrot.slane %v2531, 4
        %v2535 = vrot.slane %v2533, 4
        %v2536 = vsel %vm618, %v2534, %v2535
        %v2537 = vsel %vm675, %v2531, %v2536
        %v2540 = vadd.f32 %v2486, %v2537
        %v2541 = vadd.f32 %v2487, %v2533
        %2542 = vset.pattern.permute.xlu0 6
        %2543 = vperm.xlu0 %2542, %v2402
        %v2544 = vpop.permute.xlu0 %2543
        %v2546 = vunpack.c.l.s4 839922192
        %v2547 = vunpack.c.0.s8 %v2546
        %v2548 = vlaneseq
        %v2549 = vshrl.u32 %v2548, 7
        %v2550 = vsub.s32 %v2547, %v2549
        %v2551 = vrot.slane %v2544, %v2550
        %v2553 = vmul.f32 %v2400, %v2551
        %v2554 = vmul.f32 %v2401, %v2551
        %2557 = vrot.lane.b32.xlu0 %v2553, 122
        %v2558 = vpop.permute.xlu0 %2557
        %2559 = vrot.lane.b32.xlu0 %v2554, 122
        %v2560 = vpop.permute.xlu0 %2559
        %v2561 = vrot.slane %v2558, 4
        %v2562 = vrot.slane %v2560, 4
        %v2563 = vsel %vm618, %v2561, %v2562
        %v2564 = vsel %vm730, %v2558, %v2563
        %v2567 = vadd.f32 %v2513, %v2564
        %v2568 = vadd.f32 %v2514, %v2560
        %2569 = vset.pattern.permute.xlu0 7
        %2570 = vperm.xlu0 %2569, %v2402
        %v2571 = vpop.permute.xlu0 %2570
        %v2573 = vunpack.c.l.s4 839922192
        %v2574 = vunpack.c.0.s8 %v2573
        %v2575 = vlaneseq
        %v2576 = vshrl.u32 %v2575, 7
        %v2577 = vsub.s32 %v2574, %v2576
        %v2578 = vrot.slane %v2571, %v2577
        %v2580 = vmul.f32 %v2400, %v2578
        %v2581 = vmul.f32 %v2401, %v2578
        %2584 = vrot.lane.b32.xlu0 %v2580, 107
        %v2585 = vpop.permute.xlu0 %2584
        %2586 = vrot.lane.b32.xlu0 %v2581, 107
        %v2587 = vpop.permute.xlu0 %2586
        %v2588 = vrot.slane %v2585, 4
        %v2589 = vrot.slane %v2587, 4
        %v2590 = vsel %vm618, %v2588, %v2589
        %v2591 = vsel %vm758, %v2585, %v2590
        %v2594 = vadd.f32 %v2540, %v2591
        %v2595 = vadd.f32 %v2541, %v2587
        %2596 = vset.pattern.permute.xlu0 8
        %2597 = vperm.xlu0 %2596, %v2402
        %v2598 = vpop.permute.xlu0 %2597
        %v2600 = vunpack.c.l.s4 839922192
        %v2601 = vunpack.c.0.s8 %v2600
        %v2602 = vlaneseq
        %v2603 = vshrl.u32 %v2602, 7
        %v2604 = vsub.s32 %v2601, %v2603
        %v2605 = vrot.slane %v2598, %v2604
        %v2607 = vmul.f32 %v2400, %v2605
        %v2608 = vmul.f32 %v2401, %v2605
        %2611 = vrot.lane.b32.xlu0 %v2607, 105
        %v2612 = vpop.permute.xlu0 %2611
        %2613 = vrot.lane.b32.xlu0 %v2608, 105
        %v2614 = vpop.permute.xlu0 %2613
        %v2615 = vrot.slane %v2612, 4
        %v2616 = vrot.slane %v2614, 4
        %v2617 = vsel %vm618, %v2615, %v2616
        %v2618 = vsel %vm786, %v2612, %v2617
        %v2621 = vadd.f32 %v2567, %v2618
        %v2622 = vadd.f32 %v2568, %v2614
        %2623 = vset.pattern.permute.xlu0 9
        %2624 = vperm.xlu0 %2623, %v2402
        %v2625 = vpop.permute.xlu0 %2624
        %v2627 = vunpack.c.l.s4 839922192
        %v2628 = vunpack.c.0.s8 %v2627
        %v2629 = vlaneseq
        %v2630 = vshrl.u32 %v2629, 7
        %v2631 = vsub.s32 %v2628, %v2630
        %v2632 = vrot.slane %v2625, %v2631
        %v2634 = vmul.f32 %v2400, %v2632
        %v2635 = vmul.f32 %v2401, %v2632
        %2638 = vrot.lane.b32.xlu0 %v2634, 105
        %v2639 = vpop.permute.xlu0 %2638
        %2640 = vrot.lane.b32.xlu0 %v2635, 105
        %v2641 = vpop.permute.xlu0 %2640
        %v2642 = vrot.slane %v2639, 4
        %v2643 = vrot.slane %v2641, 4
        %v2644 = vsel %vm618, %v2642, %v2643
        %v2645 = vsel %vm786, %v2639, %v2644
        %v2648 = vadd.f32 %v2594, %v2645
        %v2649 = vadd.f32 %v2595, %v2641
        %2650 = vset.pattern.permute.xlu0 10
        %2651 = vperm.xlu0 %2650, %v2402
        %v2652 = vpop.permute.xlu0 %2651
        %v2654 = vunpack.c.l.s4 839922192
        %v2655 = vunpack.c.0.s8 %v2654
        %v2656 = vlaneseq
        %v2657 = vshrl.u32 %v2656, 7
        %v2658 = vsub.s32 %v2655, %v2657
        %v2659 = vrot.slane %v2652, %v2658
        %v2661 = vmul.f32 %v2400, %v2659
        %v2662 = vmul.f32 %v2401, %v2659
        %2665 = vrot.lane.b32.xlu0 %v2661, 103
        %v2666 = vpop.permute.xlu0 %2665
        %2667 = vrot.lane.b32.xlu0 %v2662, 103
        %v2668 = vpop.permute.xlu0 %2667
        %v2669 = vrot.slane %v2666, 4
        %v2670 = vrot.slane %v2668, 4
        %v2671 = vsel %vm618, %v2669, %v2670
        %v2672 = vsel %vm841, %v2666, %v2671
        %v2675 = vadd.f32 %v2621, %v2672
        %v2676 = vadd.f32 %v2622, %v2668
        %2677 = vset.pattern.permute.xlu0 11
        %2678 = vperm.xlu0 %2677, %v2402
        %v2679 = vpop.permute.xlu0 %2678
        %v2681 = vunpack.c.l.s4 839922192
        %v2682 = vunpack.c.0.s8 %v2681
        %v2683 = vlaneseq
        %v2684 = vshrl.u32 %v2683, 7
        %v2685 = vsub.s32 %v2682, %v2684
        %v2686 = vrot.slane %v2679, %v2685
        %v2688 = vmul.f32 %v2400, %v2686
        %v2689 = vmul.f32 %v2401, %v2686
        %2692 = vrot.lane.b32.xlu0 %v2688, 103
        %v2693 = vpop.permute.xlu0 %2692
        %2694 = vrot.lane.b32.xlu0 %v2689, 103
        %v2695 = vpop.permute.xlu0 %2694
        %v2696 = vrot.slane %v2693, 4
        %v2697 = vrot.slane %v2695, 4
        %v2698 = vsel %vm618, %v2696, %v2697
        %v2699 = vsel %vm841, %v2693, %v2698
        %v2702 = vadd.f32 %v2648, %v2699
        %v2703 = vadd.f32 %v2649, %v2695
        %2704 = vset.pattern.permute.xlu0 12
        %2705 = vperm.xlu0 %2704, %v2402
        %v2706 = vpop.permute.xlu0 %2705
        %v2708 = vunpack.c.l.s4 839922192
        %v2709 = vunpack.c.0.s8 %v2708
        %v2710 = vlaneseq
        %v2711 = vshrl.u32 %v2710, 7
        %v2712 = vsub.s32 %v2709, %v2711
        %v2713 = vrot.slane %v2706, %v2712
        %v2715 = vmul.f32 %v2400, %v2713
        %v2716 = vmul.f32 %v2401, %v2713
        %2719 = vrot.lane.b32.xlu0 %v2715, 101
        %v2720 = vpop.permute.xlu0 %2719
        %2721 = vrot.lane.b32.xlu0 %v2716, 101
        %v2722 = vpop.permute.xlu0 %2721
        %v2723 = vrot.slane %v2720, 4
        %v2724 = vrot.slane %v2722, 4
        %v2725 = vsel %vm618, %v2723, %v2724
        %v2726 = vsel %vm896, %v2720, %v2725
        %v2729 = vadd.f32 %v2675, %v2726
        %v2730 = vadd.f32 %v2676, %v2722
        %2731 = vset.pattern.permute.xlu0 13
        %2732 = vperm.xlu0 %2731, %v2402
        %v2733 = vpop.permute.xlu0 %2732
        %v2735 = vunpack.c.l.s4 839922192
        %v2736 = vunpack.c.0.s8 %v2735
        %v2737 = vlaneseq
        %v2738 = vshrl.u32 %v2737, 7
        %v2739 = vsub.s32 %v2736, %v2738
        %v2740 = vrot.slane %v2733, %v2739
        %v2742 = vmul.f32 %v2400, %v2740
        %v2743 = vmul.f32 %v2401, %v2740
        %2746 = vrot.lane.b32.xlu0 %v2742, 101
        %v2747 = vpop.permute.xlu0 %2746
        %2748 = vrot.lane.b32.xlu0 %v2743, 101
        %v2749 = vpop.permute.xlu0 %2748
        %v2750 = vrot.slane %v2747, 4
        %v2751 = vrot.slane %v2749, 4
        %v2752 = vsel %vm618, %v2750, %v2751
        %v2753 = vsel %vm896, %v2747, %v2752
        %v2756 = vadd.f32 %v2702, %v2753
        %v2757 = vadd.f32 %v2703, %v2749
        %v2758 = vld [vmem:[#allocation3] sm:$0xff]
        %v2759 = vld [vmem:[#allocation3 + $0x8] sm:$0xff]
        %2760 = vset.pattern.permute.xlu0 14
        %2761 = vperm.xlu0 %2760, %v2402
        %v2762 = vpop.permute.xlu0 %2761
        %v2764 = vunpack.c.l.s4 839922192
        %v2765 = vunpack.c.0.s8 %v2764
        %v2766 = vlaneseq
        %v2767 = vshrl.u32 %v2766, 7
        %v2768 = vsub.s32 %v2765, %v2767
        %v2769 = vrot.slane %v2762, %v2768
        %v2771 = vmul.f32 %v2758, %v2769
        %v2772 = vmul.f32 %v2759, %v2769
        %2775 = vrot.lane.b32.xlu0 %v2771, 84
        %v2776 = vpop.permute.xlu0 %2775
        %2777 = vrot.lane.b32.xlu0 %v2772, 84
        %v2778 = vpop.permute.xlu0 %2777
        %v2779 = vrot.slane %v2776, 4
        %v2780 = vrot.slane %v2778, 4
        %v2781 = vsel %vm618, %v2779, %v2780
        %v2782 = vsel %vm953, %v2776, %v2781
        %v2783 = vsel %vm953, %v2778, %v2780
        %v2786 = vadd.f32 %v2729, %v2782
        %v2787 = vadd.f32 %v2730, %v2783
        %2788 = vset.pattern.permute.xlu0 15
        %2789 = vperm.xlu0 %2788, %v2402
        %v2790 = vpop.permute.xlu0 %2789
        %v2792 = vunpack.c.l.s4 839922192
        %v2793 = vunpack.c.0.s8 %v2792
        %v2794 = vlaneseq
        %v2795 = vshrl.u32 %v2794, 7
        %v2796 = vsub.s32 %v2793, %v2795
        %v2797 = vrot.slane %v2790, %v2796
        %v2799 = vmul.f32 %v2758, %v2797
        %v2800 = vmul.f32 %v2759, %v2797
        %2803 = vrot.lane.b32.xlu0 %v2799, 84
        %v2804 = vpop.permute.xlu0 %2803
        %2805 = vrot.lane.b32.xlu0 %v2800, 84
        %v2806 = vpop.permute.xlu0 %2805
        %v2807 = vrot.slane %v2804, 4
        %v2808 = vrot.slane %v2806, 4
        %v2809 = vsel %vm618, %v2807, %v2808
        %v2810 = vsel %vm953, %v2804, %v2809
        %v2811 = vsel %vm953, %v2806, %v2808
        %v2814 = vadd.f32 %v2756, %v2810
        %v2815 = vadd.f32 %v2757, %v2811
        %2816 = vset.pattern.permute.xlu0 16
        %2817 = vperm.xlu0 %2816, %v2402
        %v2818 = vpop.permute.xlu0 %2817
        %v2820 = vunpack.c.l.s4 839922192
        %v2821 = vunpack.c.0.s8 %v2820
        %v2822 = vlaneseq
        %v2823 = vshrl.u32 %v2822, 7
        %v2824 = vsub.s32 %v2821, %v2823
        %v2825 = vrot.slane %v2818, %v2824
        %v2827 = vmul.f32 %v2758, %v2825
        %v2828 = vmul.f32 %v2759, %v2825
        %2831 = vrot.lane.b32.xlu0 %v2827, 82
        %v2832 = vpop.permute.xlu0 %2831
        %2833 = vrot.lane.b32.xlu0 %v2828, 82
        %v2834 = vpop.permute.xlu0 %2833
        %v2835 = vrot.slane %v2832, 4
        %v2836 = vrot.slane %v2834, 4
        %v2837 = vsel %vm618, %v2835, %v2836
        %v2838 = vsel %vm1010, %v2832, %v2837
        %v2839 = vsel %vm1010, %v2834, %v2836
        %v2842 = vadd.f32 %v2786, %v2838
        %v2843 = vadd.f32 %v2787, %v2839
        %2844 = vset.pattern.permute.xlu0 17
        %2845 = vperm.xlu0 %2844, %v2402
        %v2846 = vpop.permute.xlu0 %2845
        %v2848 = vunpack.c.l.s4 839922192
        %v2849 = vunpack.c.0.s8 %v2848
        %v2850 = vlaneseq
        %v2851 = vshrl.u32 %v2850, 7
        %v2852 = vsub.s32 %v2849, %v2851
        %v2853 = vrot.slane %v2846, %v2852
        %v2855 = vmul.f32 %v2758, %v2853
        %v2856 = vmul.f32 %v2759, %v2853
        %2859 = vrot.lane.b32.xlu0 %v2855, 82
        %v2860 = vpop.permute.xlu0 %2859
        %2861 = vrot.lane.b32.xlu0 %v2856, 82
        %v2862 = vpop.permute.xlu0 %2861
        %v2863 = vrot.slane %v2860, 4
        %v2864 = vrot.slane %v2862, 4
        %v2865 = vsel %vm618, %v2863, %v2864
        %v2866 = vsel %vm1010, %v2860, %v2865
        %v2867 = vsel %vm1010, %v2862, %v2864
        %v2870 = vadd.f32 %v2814, %v2866
        %v2871 = vadd.f32 %v2815, %v2867
        %2872 = vset.pattern.permute.xlu0 18
        %2873 = vperm.xlu0 %2872, %v2402
        %v2874 = vpop.permute.xlu0 %2873
        %v2876 = vunpack.c.l.s4 839922192
        %v2877 = vunpack.c.0.s8 %v2876
        %v2878 = vlaneseq
        %v2879 = vshrl.u32 %v2878, 7
        %v2880 = vsub.s32 %v2877, %v2879
        %v2881 = vrot.slane %v2874, %v2880
        %v2883 = vmul.f32 %v2758, %v2881
        %v2884 = vmul.f32 %v2759, %v2881
        %2887 = vrot.lane.b32.xlu0 %v2883, 80
        %v2888 = vpop.permute.xlu0 %2887
        %2889 = vrot.lane.b32.xlu0 %v2884, 80
        %v2890 = vpop.permute.xlu0 %2889
        %v2891 = vrot.slane %v2888, 4
        %v2892 = vrot.slane %v2890, 4
        %v2893 = vsel %vm618, %v2891, %v2892
        %v2894 = vsel %vm1067, %v2888, %v2893
        %v2895 = vsel %vm1067, %v2890, %v2892
        %v2898 = vadd.f32 %v2842, %v2894
        %v2899 = vadd.f32 %v2843, %v2895
        %2900 = vset.pattern.permute.xlu0 19
        %2901 = vperm.xlu0 %2900, %v2402
        %v2902 = vpop.permute.xlu0 %2901
        %v2904 = vunpack.c.l.s4 839922192
        %v2905 = vunpack.c.0.s8 %v2904
        %v2906 = vlaneseq
        %v2907 = vshrl.u32 %v2906, 7
        %v2908 = vsub.s32 %v2905, %v2907
        %v2909 = vrot.slane %v2902, %v2908
        %v2911 = vmul.f32 %v2758, %v2909
        %v2912 = vmul.f32 %v2759, %v2909
        %2915 = vrot.lane.b32.xlu0 %v2911, 80
        %v2916 = vpop.permute.xlu0 %2915
        %2917 = vrot.lane.b32.xlu0 %v2912, 80
        %v2918 = vpop.permute.xlu0 %2917
        %v2919 = vrot.slane %v2916, 4
        %v2920 = vrot.slane %v2918, 4
        %v2921 = vsel %vm618, %v2919, %v2920
        %v2922 = vsel %vm1067, %v2916, %v2921
        %v2923 = vsel %vm1067, %v2918, %v2920
        %v2926 = vadd.f32 %v2870, %v2922
        %v2927 = vadd.f32 %v2871, %v2923
        %2928 = vset.pattern.permute.xlu0 20
        %2929 = vperm.xlu0 %2928, %v2402
        %v2930 = vpop.permute.xlu0 %2929
        %v2932 = vunpack.c.l.s4 839922192
        %v2933 = vunpack.c.0.s8 %v2932
        %v2934 = vlaneseq
        %v2935 = vshrl.u32 %v2934, 7
        %v2936 = vsub.s32 %v2933, %v2935
        %v2937 = vrot.slane %v2930, %v2936
        %v2939 = vmul.f32 %v2758, %v2937
        %v2940 = vmul.f32 %v2759, %v2937
        %2943 = vrot.lane.b32.xlu0 %v2939, 78
        %v2944 = vpop.permute.xlu0 %2943
        %2945 = vrot.lane.b32.xlu0 %v2940, 78
        %v2946 = vpop.permute.xlu0 %2945
        %v2947 = vrot.slane %v2944, 4
        %v2948 = vrot.slane %v2946, 4
        %v2949 = vsel %vm618, %v2947, %v2948
        %v2950 = vsel %vm1124, %v2944, %v2949
        %v2951 = vsel %vm1124, %v2946, %v2948
        %v2954 = vadd.f32 %v2898, %v2950
        %v2955 = vadd.f32 %v2899, %v2951
        %2956 = vset.pattern.permute.xlu0 21
        %2957 = vperm.xlu0 %2956, %v2402
        %v2958 = vpop.permute.xlu0 %2957
        %v2960 = vunpack.c.l.s4 839922192
        %v2961 = vunpack.c.0.s8 %v2960
        %v2962 = vlaneseq
        %v2963 = vshrl.u32 %v2962, 7
        %v2964 = vsub.s32 %v2961, %v2963
        %v2965 = vrot.slane %v2958, %v2964
        %v2967 = vmul.f32 %v2758, %v2965
        %v2968 = vmul.f32 %v2759, %v2965
        %2971 = vrot.lane.b32.xlu0 %v2967, 63
        %v2972 = vpop.permute.xlu0 %2971
        %2973 = vrot.lane.b32.xlu0 %v2968, 63
        %v2974 = vpop.permute.xlu0 %2973
        %v2975 = vrot.slane %v2972, 4
        %v2976 = vrot.slane %v2974, 4
        %v2977 = vsel %vm618, %v2975, %v2976
        %v2978 = vsel %vm1153, %v2972, %v2977
        %v2979 = vsel %vm1153, %v2974, %v2976
        %v2982 = vadd.f32 %v2926, %v2978
        %v2983 = vadd.f32 %v2927, %v2979
        %2984 = vset.pattern.permute.xlu0 22
        %2985 = vperm.xlu0 %2984, %v2402
        %v2986 = vpop.permute.xlu0 %2985
        %v2988 = vunpack.c.l.s4 839922192
        %v2989 = vunpack.c.0.s8 %v2988
        %v2990 = vlaneseq
        %v2991 = vshrl.u32 %v2990, 7
        %v2992 = vsub.s32 %v2989, %v2991
        %v2993 = vrot.slane %v2986, %v2992
        %v2995 = vmul.f32 %v2758, %v2993
        %v2996 = vmul.f32 %v2759, %v2993
        %2999 = vrot.lane.b32.xlu0 %v2995, 61
        %v3000 = vpop.permute.xlu0 %2999
        %3001 = vrot.lane.b32.xlu0 %v2996, 61
        %v3002 = vpop.permute.xlu0 %3001
        %v3003 = vrot.slane %v3000, 4
        %v3004 = vrot.slane %v3002, 4
        %v3005 = vsel %vm618, %v3003, %v3004
        %v3006 = vsel %vm1182, %v3000, %v3005
        %v3007 = vsel %vm1182, %v3002, %v3004
        %v3010 = vadd.f32 %v2954, %v3006
        %v3011 = vadd.f32 %v2955, %v3007
        %3012 = vset.pattern.permute.xlu0 23
        %3013 = vperm.xlu0 %3012, %v2402
        %v3014 = vpop.permute.xlu0 %3013
        %v3016 = vunpack.c.l.s4 839922192
        %v3017 = vunpack.c.0.s8 %v3016
        %v3018 = vlaneseq
        %v3019 = vshrl.u32 %v3018, 7
        %v3020 = vsub.s32 %v3017, %v3019
        %v3021 = vrot.slane %v3014, %v3020
        %v3023 = vmul.f32 %v2758, %v3021
        %v3024 = vmul.f32 %v2759, %v3021
        %3027 = vrot.lane.b32.xlu0 %v3023, 61
        %v3028 = vpop.permute.xlu0 %3027
        %3029 = vrot.lane.b32.xlu0 %v3024, 61
        %v3030 = vpop.permute.xlu0 %3029
        %v3031 = vrot.slane %v3028, 4
        %v3032 = vrot.slane %v3030, 4
        %v3033 = vsel %vm618, %v3031, %v3032
        %v3034 = vsel %vm1182, %v3028, %v3033
        %v3035 = vsel %vm1182, %v3030, %v3032
        %v3038 = vadd.f32 %v2982, %v3034
        %v3039 = vadd.f32 %v2983, %v3035
        %3040 = vset.pattern.permute.xlu0 24
        %3041 = vperm.xlu0 %3040, %v2402
        %v3042 = vpop.permute.xlu0 %3041
        %v3044 = vunpack.c.l.s4 839922192
        %v3045 = vunpack.c.0.s8 %v3044
        %v3046 = vlaneseq
        %v3047 = vshrl.u32 %v3046, 7
        %v3048 = vsub.s32 %v3045, %v3047
        %v3049 = vrot.slane %v3042, %v3048
        %v3051 = vmul.f32 %v2758, %v3049
        %v3052 = vmul.f32 %v2759, %v3049
        %3055 = vrot.lane.b32.xlu0 %v3051, 59
        %v3056 = vpop.permute.xlu0 %3055
        %3057 = vrot.lane.b32.xlu0 %v3052, 59
        %v3058 = vpop.permute.xlu0 %3057
        %v3059 = vrot.slane %v3056, 4
        %v3060 = vrot.slane %v3058, 4
        %v3061 = vsel %vm618, %v3059, %v3060
        %v3062 = vsel %vm1239, %v3056, %v3061
        %v3063 = vsel %vm1239, %v3058, %v3060
        %v3066 = vadd.f32 %v3010, %v3062
        %v3067 = vadd.f32 %v3011, %v3063
        %3068 = vset.pattern.permute.xlu0 25
        %3069 = vperm.xlu0 %3068, %v2402
        %v3070 = vpop.permute.xlu0 %3069
        %v3072 = vunpack.c.l.s4 839922192
        %v3073 = vunpack.c.0.s8 %v3072
        %v3074 = vlaneseq
        %v3075 = vshrl.u32 %v3074, 7
        %v3076 = vsub.s32 %v3073, %v3075
        %v3077 = vrot.slane %v3070, %v3076
        %v3079 = vmul.f32 %v2758, %v3077
        %v3080 = vmul.f32 %v2759, %v3077
        %3083 = vrot.lane.b32.xlu0 %v3079, 59
        %v3084 = vpop.permute.xlu0 %3083
        %3085 = vrot.lane.b32.xlu0 %v3080, 59
        %v3086 = vpop.permute.xlu0 %3085
        %v3087 = vrot.slane %v3084, 4
        %v3088 = vrot.slane %v3086, 4
        %v3089 = vsel %vm618, %v3087, %v3088
        %v3090 = vsel %vm1239, %v3084, %v3089
        %v3091 = vsel %vm1239, %v3086, %v3088
        %v3094 = vadd.f32 %v3038, %v3090
        %v3095 = vadd.f32 %v3039, %v3091
        %3096 = vset.pattern.permute.xlu0 26
        %3097 = vperm.xlu0 %3096, %v2402
        %v3098 = vpop.permute.xlu0 %3097
        %v3100 = vunpack.c.l.s4 839922192
        %v3101 = vunpack.c.0.s8 %v3100
        %v3102 = vlaneseq
        %v3103 = vshrl.u32 %v3102, 7
        %v3104 = vsub.s32 %v3101, %v3103
        %v3105 = vrot.slane %v3098, %v3104
        %v3107 = vmul.f32 %v2758, %v3105
        %v3108 = vmul.f32 %v2759, %v3105
        %3111 = vrot.lane.b32.xlu0 %v3107, 57
        %v3112 = vpop.permute.xlu0 %3111
        %3113 = vrot.lane.b32.xlu0 %v3108, 57
        %v3114 = vpop.permute.xlu0 %3113
        %v3115 = vrot.slane %v3112, 4
        %v3116 = vrot.slane %v3114, 4
        %v3117 = vsel %vm618, %v3115, %v3116
        %v3118 = vsel %vm1296, %v3112, %v3117
        %v3119 = vsel %vm1296, %v3114, %v3116
        %v3122 = vadd.f32 %v3066, %v3118
        %v3123 = vadd.f32 %v3067, %v3119
        %3124 = vset.pattern.permute.xlu0 27
        %3125 = vperm.xlu0 %3124, %v2402
        %v3126 = vpop.permute.xlu0 %3125
        %v3128 = vunpack.c.l.s4 839922192
        %v3129 = vunpack.c.0.s8 %v3128
        %v3130 = vlaneseq
        %v3131 = vshrl.u32 %v3130, 7
        %v3132 = vsub.s32 %v3129, %v3131
        %v3133 = vrot.slane %v3126, %v3132
        %v3135 = vmul.f32 %v2758, %v3133
        %v3136 = vmul.f32 %v2759, %v3133
        %3139 = vrot.lane.b32.xlu0 %v3135, 57
        %v3140 = vpop.permute.xlu0 %3139
        %3141 = vrot.lane.b32.xlu0 %v3136, 57
        %v3142 = vpop.permute.xlu0 %3141
        %v3143 = vrot.slane %v3140, 4
        %v3144 = vrot.slane %v3142, 4
        %v3145 = vsel %vm618, %v3143, %v3144
        %v3146 = vsel %vm1296, %v3140, %v3145
        %v3147 = vsel %vm1296, %v3142, %v3144
        %v3150 = vadd.f32 %v3094, %v3146
        %v3151 = vadd.f32 %v3095, %v3147
        %3152 = vset.pattern.permute.xlu0 28
        %3153 = vperm.xlu0 %3152, %v2402
        %v3154 = vpop.permute.xlu0 %3153
        %v3156 = vunpack.c.l.s4 839922192
        %v3157 = vunpack.c.0.s8 %v3156
        %v3158 = vlaneseq
        %v3159 = vshrl.u32 %v3158, 7
        %v3160 = vsub.s32 %v3157, %v3159
        %v3161 = vrot.slane %v3154, %v3160
        %v3163 = vmul.f32 %v2758, %v3161
        %v3164 = vmul.f32 %v2759, %v3161
        %3167 = vrot.lane.b32.xlu0 %v3163, 40
        %v3168 = vpop.permute.xlu0 %3167
        %3169 = vrot.lane.b32.xlu0 %v3164, 40
        %v3170 = vpop.permute.xlu0 %3169
        %v3171 = vrot.slane %v3168, 4
        %v3172 = vrot.slane %v3170, 4
        %v3173 = vsel %vm618, %v3171, %v3172
        %v3174 = vsel %vm1353, %v3168, %v3173
        %v3175 = vsel %vm1353, %v3170, %v3172
        %v3178 = vadd.f32 %v3122, %v3174
        %v3179 = vadd.f32 %v3123, %v3175
        %3180 = vset.pattern.permute.xlu0 29
        %3181 = vperm.xlu0 %3180, %v2402
        %v3182 = vpop.permute.xlu0 %3181
        %v3184 = vunpack.c.l.s4 839922192
        %v3185 = vunpack.c.0.s8 %v3184
        %v3186 = vlaneseq
        %v3187 = vshrl.u32 %v3186, 7
        %v3188 = vsub.s32 %v3185, %v3187
        %v3189 = vrot.slane %v3182, %v3188
        %v3191 = vmul.f32 %v2758, %v3189
        %v3192 = vmul.f32 %v2759, %v3189
        %3195 = vrot.lane.b32.xlu0 %v3191, 40
        %v3196 = vpop.permute.xlu0 %3195
        %3197 = vrot.lane.b32.xlu0 %v3192, 40
        %v3198 = vpop.permute.xlu0 %3197
        %v3199 = vrot.slane %v3196, 4
        %v3200 = vrot.slane %v3198, 4
        %v3201 = vsel %vm618, %v3199, %v3200
        %v3202 = vsel %vm1353, %v3196, %v3201
        %v3203 = vsel %vm1353, %v3198, %v3200
        %v3206 = vadd.f32 %v3150, %v3202
        %v3207 = vadd.f32 %v3151, %v3203
        %3208 = vset.pattern.permute.xlu0 30
        %3209 = vperm.xlu0 %3208, %v2402
        %v3210 = vpop.permute.xlu0 %3209
        %v3212 = vunpack.c.l.s4 839922192
        %v3213 = vunpack.c.0.s8 %v3212
        %v3214 = vlaneseq
        %v3215 = vshrl.u32 %v3214, 7
        %v3216 = vsub.s32 %v3213, %v3215
        %v3217 = vrot.slane %v3210, %v3216
        %v3219 = vmul.f32 %v2758, %v3217
        %v3220 = vmul.f32 %v2759, %v3217
        %3223 = vrot.lane.b32.xlu0 %v3219, 38
        %v3224 = vpop.permute.xlu0 %3223
        %3225 = vrot.lane.b32.xlu0 %v3220, 38
        %v3226 = vpop.permute.xlu0 %3225
        %v3227 = vrot.slane %v3224, 4
        %v3228 = vrot.slane %v3226, 4
        %v3229 = vsel %vm618, %v3227, %v3228
        %v3230 = vsel %vm1410, %v3224, %v3229
        %v3231 = vsel %vm1410, %v3226, %v3228
        %v3234 = vadd.f32 %v3178, %v3230
        %v3235 = vadd.f32 %v3179, %v3231
        %3236 = vset.pattern.permute.xlu0 31
        %3237 = vperm.xlu0 %3236, %v2402
        %v3238 = vpop.permute.xlu0 %3237
        %v3240 = vunpack.c.l.s4 839922192
        %v3241 = vunpack.c.0.s8 %v3240
        %v3242 = vlaneseq
        %v3243 = vshrl.u32 %v3242, 7
        %v3244 = vsub.s32 %v3241, %v3243
        %v3245 = vrot.slane %v3238, %v3244
        %v3247 = vmul.f32 %v2758, %v3245
        %v3248 = vmul.f32 %v2759, %v3245
        %3251 = vrot.lane.b32.xlu0 %v3247, 38
        %v3252 = vpop.permute.xlu0 %3251
        %3253 = vrot.lane.b32.xlu0 %v3248, 38
        %v3254 = vpop.permute.xlu0 %3253
        %v3255 = vrot.slane %v3252, 4
        %v3256 = vrot.slane %v3254, 4
        %v3257 = vsel %vm618, %v3255, %v3256
        %v3258 = vsel %vm1410, %v3252, %v3257
        %v3259 = vsel %vm1410, %v3254, %v3256
        %v3262 = vadd.f32 %v3206, %v3258
        %v3263 = vadd.f32 %v3207, %v3259
        %3264 = vset.pattern.permute.xlu0 32
        %3265 = vperm.xlu0 %3264, %v2402
        %v3266 = vpop.permute.xlu0 %3265
        %v3268 = vunpack.c.l.s4 839922192
        %v3269 = vunpack.c.0.s8 %v3268
        %v3270 = vlaneseq
        %v3271 = vshrl.u32 %v3270, 7
        %v3272 = vsub.s32 %v3269, %v3271
        %v3273 = vrot.slane %v3266, %v3272
        %v3275 = vmul.f32 %v2758, %v3273
        %v3276 = vmul.f32 %v2759, %v3273
        %3279 = vrot.lane.b32.xlu0 %v3275, 36
        %v3280 = vpop.permute.xlu0 %3279
        %3281 = vrot.lane.b32.xlu0 %v3276, 36
        %v3282 = vpop.permute.xlu0 %3281
        %v3283 = vrot.slane %v3280, 4
        %v3284 = vrot.slane %v3282, 4
        %v3285 = vsel %vm618, %v3283, %v3284
        %v3286 = vsel %vm1467, %v3280, %v3285
        %v3287 = vsel %vm1467, %v3282, %v3284
        %v3290 = vadd.f32 %v3234, %v3286
        %v3291 = vadd.f32 %v3235, %v3287
        %3292 = vset.pattern.permute.xlu0 33
        %3293 = vperm.xlu0 %3292, %v2402
        %v3294 = vpop.permute.xlu0 %3293
        %v3296 = vunpack.c.l.s4 839922192
        %v3297 = vunpack.c.0.s8 %v3296
        %v3298 = vlaneseq
        %v3299 = vshrl.u32 %v3298, 7
        %v3300 = vsub.s32 %v3297, %v3299
        %v3301 = vrot.slane %v3294, %v3300
        %v3303 = vmul.f32 %v2758, %v3301
        %v3304 = vmul.f32 %v2759, %v3301
        %3307 = vrot.lane.b32.xlu0 %v3303, 36
        %v3308 = vpop.permute.xlu0 %3307
        %3309 = vrot.lane.b32.xlu0 %v3304, 36
        %v3310 = vpop.permute.xlu0 %3309
        %v3311 = vrot.slane %v3308, 4
        %v3312 = vrot.slane %v3310, 4
        %v3313 = vsel %vm618, %v3311, %v3312
        %v3314 = vsel %vm1467, %v3308, %v3313
        %v3315 = vsel %vm1467, %v3310, %v3312
        %v3318 = vadd.f32 %v3262, %v3314
        %v3319 = vadd.f32 %v3263, %v3315
        %3320 = vset.pattern.permute.xlu0 34
        %3321 = vperm.xlu0 %3320, %v2402
        %v3322 = vpop.permute.xlu0 %3321
        %v3324 = vunpack.c.l.s4 839922192
        %v3325 = vunpack.c.0.s8 %v3324
        %v3326 = vlaneseq
        %v3327 = vshrl.u32 %v3326, 7
        %v3328 = vsub.s32 %v3325, %v3327
        %v3329 = vrot.slane %v3322, %v3328
        %v3331 = vmul.f32 %v2758, %v3329
        %v3332 = vmul.f32 %v2759, %v3329
        %3335 = vrot.lane.b32.xlu0 %v3331, 34
        %v3336 = vpop.permute.xlu0 %3335
        %3337 = vrot.lane.b32.xlu0 %v3332, 34
        %v3338 = vpop.permute.xlu0 %3337
        %v3339 = vrot.slane %v3336, 4
        %v3340 = vrot.slane %v3338, 4
        %v3341 = vsel %vm618, %v3339, %v3340
        %v3342 = vsel %vm1524, %v3336, %v3341
        %v3343 = vsel %vm1524, %v3338, %v3340
        %v3346 = vadd.f32 %v3290, %v3342
        %v3347 = vadd.f32 %v3291, %v3343
        %3348 = vset.pattern.permute.xlu0 35
        %3349 = vperm.xlu0 %3348, %v2402
        %v3350 = vpop.permute.xlu0 %3349
        %v3352 = vunpack.c.l.s4 839922192
        %v3353 = vunpack.c.0.s8 %v3352
        %v3354 = vlaneseq
        %v3355 = vshrl.u32 %v3354, 7
        %v3356 = vsub.s32 %v3353, %v3355
        %v3357 = vrot.slane %v3350, %v3356
        %v3359 = vmul.f32 %v2758, %v3357
        %v3360 = vmul.f32 %v2759, %v3357
        %3363 = vrot.lane.b32.xlu0 %v3359, 19
        %v3364 = vpop.permute.xlu0 %3363
        %3365 = vrot.lane.b32.xlu0 %v3360, 19
        %v3366 = vpop.permute.xlu0 %3365
        %v3367 = vrot.slane %v3364, 4
        %v3368 = vrot.slane %v3366, 4
        %v3369 = vsel %vm618, %v3367, %v3368
        %v3370 = vsel %vm345, %v3364, %v3369
        %v3371 = vsel %vm345, %v3366, %v3368
        %v3374 = vadd.f32 %v3318, %v3370
        %v3375 = vadd.f32 %v3319, %v3371
        %3376 = vset.pattern.permute.xlu0 36
        %3377 = vperm.xlu0 %3376, %v2402
        %v3378 = vpop.permute.xlu0 %3377
        %v3380 = vunpack.c.l.s4 839922192
        %v3381 = vunpack.c.0.s8 %v3380
        %v3382 = vlaneseq
        %v3383 = vshrl.u32 %v3382, 7
        %v3384 = vsub.s32 %v3381, %v3383
        %v3385 = vrot.slane %v3378, %v3384
        %v3387 = vmul.f32 %v2758, %v3385
        %v3388 = vmul.f32 %v2759, %v3385
        %3391 = vrot.lane.b32.xlu0 %v3387, 17
        %v3392 = vpop.permute.xlu0 %3391
        %3393 = vrot.lane.b32.xlu0 %v3388, 17
        %v3394 = vpop.permute.xlu0 %3393
        %v3395 = vrot.slane %v3392, 4
        %v3396 = vrot.slane %v3394, 4
        %v3397 = vsel %vm618, %v3395, %v3396
        %v3398 = vsel %vm1581, %v3392, %v3397
        %v3399 = vsel %vm1581, %v3394, %v3396
        %v3402 = vadd.f32 %v3346, %v3398
        %v3403 = vadd.f32 %v3347, %v3399
        %3404 = vset.pattern.permute.xlu0 37
        %3405 = vperm.xlu0 %3404, %v2402
        %v3406 = vpop.permute.xlu0 %3405
        %v3408 = vunpack.c.l.s4 839922192
        %v3409 = vunpack.c.0.s8 %v3408
        %v3410 = vlaneseq
        %v3411 = vshrl.u32 %v3410, 7
        %v3412 = vsub.s32 %v3409, %v3411
        %v3413 = vrot.slane %v3406, %v3412
        %v3415 = vmul.f32 %v2758, %v3413
        %v3416 = vmul.f32 %v2759, %v3413
        %3419 = vrot.lane.b32.xlu0 %v3415, 17
        %v3420 = vpop.permute.xlu0 %3419
        %3421 = vrot.lane.b32.xlu0 %v3416, 17
        %v3422 = vpop.permute.xlu0 %3421
        %v3423 = vrot.slane %v3420, 4
        %v3424 = vrot.slane %v3422, 4
        %v3425 = vsel %vm618, %v3423, %v3424
        %v3426 = vsel %vm1581, %v3420, %v3425
        %v3427 = vsel %vm1581, %v3422, %v3424
        %v3430 = vadd.f32 %v3374, %v3426
        %v3431 = vadd.f32 %v3375, %v3427
        %3432 = vset.pattern.permute.xlu0 38
        %3433 = vperm.xlu0 %3432, %v2402
        %v3434 = vpop.permute.xlu0 %3433
        %v3436 = vunpack.c.l.s4 839922192
        %v3437 = vunpack.c.0.s8 %v3436
        %v3438 = vlaneseq
        %v3439 = vshrl.u32 %v3438, 7
        %v3440 = vsub.s32 %v3437, %v3439
        %v3441 = vrot.slane %v3434, %v3440
        %v3443 = vmul.f32 %v2758, %v3441
        %v3444 = vmul.f32 %v2759, %v3441
        %3447 = vrot.lane.b32.xlu0 %v3443, 15
        %v3448 = vpop.permute.xlu0 %3447
        %3449 = vrot.lane.b32.xlu0 %v3444, 15
        %v3450 = vpop.permute.xlu0 %3449
        %v3451 = vrot.slane %v3448, 4
        %v3452 = vrot.slane %v3450, 4
        %v3453 = vsel %vm618, %v3451, %v3452
        %v3454 = vsel %vm1638, %v3448, %v3453
        %v3455 = vsel %vm1638, %v3450, %v3452
        %v3458 = vadd.f32 %v3402, %v3454
        %v3459 = vadd.f32 %v3403, %v3455
        %3460 = vset.pattern.permute.xlu0 39
        %3461 = vperm.xlu0 %3460, %v2402
        %v3462 = vpop.permute.xlu0 %3461
        %v3464 = vunpack.c.l.s4 839922192
        %v3465 = vunpack.c.0.s8 %v3464
        %v3466 = vlaneseq
        %v3467 = vshrl.u32 %v3466, 7
        %v3468 = vsub.s32 %v3465, %v3467
        %v3469 = vrot.slane %v3462, %v3468
        %v3471 = vmul.f32 %v2758, %v3469
        %v3472 = vmul.f32 %v2759, %v3469
        %3475 = vrot.lane.b32.xlu0 %v3471, 15
        %v3476 = vpop.permute.xlu0 %3475
        %3477 = vrot.lane.b32.xlu0 %v3472, 15
        %v3478 = vpop.permute.xlu0 %3477
        %v3479 = vrot.slane %v3476, 4
        %v3480 = vrot.slane %v3478, 4
        %v3481 = vsel %vm618, %v3479, %v3480
        %v3482 = vsel %vm1638, %v3476, %v3481
        %v3483 = vsel %vm1638, %v3478, %v3480
        %v3486 = vadd.f32 %v3430, %v3482
        %v3487 = vadd.f32 %v3431, %v3483
        %3488 = vset.pattern.permute.xlu0 40
        %3489 = vperm.xlu0 %3488, %v2402
        %v3490 = vpop.permute.xlu0 %3489
        %v3492 = vunpack.c.l.s4 839922192
        %v3493 = vunpack.c.0.s8 %v3492
        %v3494 = vlaneseq
        %v3495 = vshrl.u32 %v3494, 7
        %v3496 = vsub.s32 %v3493, %v3495
        %v3497 = vrot.slane %v3490, %v3496
        %v3499 = vmul.f32 %v2758, %v3497
        %v3500 = vmul.f32 %v2759, %v3497
        %3503 = vrot.lane.b32.xlu0 %v3499, 13
        %v3504 = vpop.permute.xlu0 %3503
        %3505 = vrot.lane.b32.xlu0 %v3500, 13
        %v3506 = vpop.permute.xlu0 %3505
        %v3507 = vrot.slane %v3504, 4
        %v3508 = vrot.slane %v3506, 4
        %v3509 = vsel %vm618, %v3507, %v3508
        %v3510 = vsel %vm1695, %v3504, %v3509
        %v3511 = vsel %vm1695, %v3506, %v3508
        %v3514 = vadd.f32 %v3458, %v3510
        %v3515 = vadd.f32 %v3459, %v3511
        %3516 = vset.pattern.permute.xlu0 41
        %3517 = vperm.xlu0 %3516, %v2402
        %v3518 = vpop.permute.xlu0 %3517
        %v3520 = vunpack.c.l.s4 839922192
        %v3521 = vunpack.c.0.s8 %v3520
        %v3522 = vlaneseq
        %v3523 = vshrl.u32 %v3522, 7
        %v3524 = vsub.s32 %v3521, %v3523
        %v3525 = vrot.slane %v3518, %v3524
        %v3527 = vmul.f32 %v2758, %v3525
        %v3528 = vmul.f32 %v2759, %v3525
        %3531 = vrot.lane.b32.xlu0 %v3527, 13
        %v3532 = vpop.permute.xlu0 %3531
        %3533 = vrot.lane.b32.xlu0 %v3528, 13
        %v3534 = vpop.permute.xlu0 %3533
        %v3535 = vrot.slane %v3532, 4
        %v3536 = vrot.slane %v3534, 4
        %v3537 = vsel %vm618, %v3535, %v3536
        %v3538 = vsel %vm1695, %v3532, %v3537
        %v3539 = vsel %vm1695, %v3534, %v3536
        %v3542 = vadd.f32 %v3486, %v3538
        %v3543 = vadd.f32 %v3487, %v3539
        %v3544 = vld [vmem:[#allocation3 + $0x4] sm:$0xff]
        %v3545 = vld [vmem:[#allocation3 + $0xc] sm:$0xf]
        %3546 = vset.pattern.permute.xlu0 42
        %3547 = vperm.xlu0 %3546, %v2402
        %v3548 = vpop.permute.xlu0 %3547
        %v3550 = vunpack.c.l.s4 839922192
        %v3551 = vunpack.c.0.s8 %v3550
        %v3552 = vlaneseq
        %v3553 = vshrl.u32 %v3552, 7
        %v3554 = vsub.s32 %v3551, %v3553
        %v3555 = vrot.slane %v3548, %v3554
        %v3557 = vmul.f32 %v3544, %v3555
        %v3558 = vmul.f32 %v3545, %v3555
        %3561 = vrot.lane.b32.xlu0 %v3557, 124
        %v3562 = vpop.permute.xlu0 %3561
        %3563 = vrot.lane.b32.xlu0 %v3558, 124
        %v3564 = vpop.permute.xlu0 %3563
        %v3565 = vrot.slane %v3562, 4
        %v3566 = vrot.slane %v3564, 4
        %v3567 = vsel %vm618, %v3565, %v3566
        %v3568 = vsel %vm675, %v3562, %v3567
        %v3571 = vadd.f32 %v3514, %v3568
        %v3572 = vadd.f32 %v3515, %v3564
        %3573 = vset.pattern.permute.xlu0 43
        %3574 = vperm.xlu0 %3573, %v2402
        %v3575 = vpop.permute.xlu0 %3574
        %v3577 = vunpack.c.l.s4 839922192
        %v3578 = vunpack.c.0.s8 %v3577
        %v3579 = vlaneseq
        %v3580 = vshrl.u32 %v3579, 7
        %v3581 = vsub.s32 %v3578, %v3580
        %v3582 = vrot.slane %v3575, %v3581
        %v3584 = vmul.f32 %v3544, %v3582
        %v3585 = vmul.f32 %v3545, %v3582
        %3588 = vrot.lane.b32.xlu0 %v3584, 124
        %v3589 = vpop.permute.xlu0 %3588
        %3590 = vrot.lane.b32.xlu0 %v3585, 124
        %v3591 = vpop.permute.xlu0 %3590
        %v3592 = vrot.slane %v3589, 4
        %v3593 = vrot.slane %v3591, 4
        %v3594 = vsel %vm618, %v3592, %v3593
        %v3595 = vsel %vm675, %v3589, %v3594
        %v3598 = vadd.f32 %v3542, %v3595
        %v3599 = vadd.f32 %v3543, %v3591
        %3600 = vset.pattern.permute.xlu0 44
        %3601 = vperm.xlu0 %3600, %v2402
        %v3602 = vpop.permute.xlu0 %3601
        %v3604 = vunpack.c.l.s4 839922192
        %v3605 = vunpack.c.0.s8 %v3604
        %v3606 = vlaneseq
        %v3607 = vshrl.u32 %v3606, 7
        %v3608 = vsub.s32 %v3605, %v3607
        %v3609 = vrot.slane %v3602, %v3608
        %v3611 = vmul.f32 %v3544, %v3609
        %v3612 = vmul.f32 %v3545, %v3609
        %3615 = vrot.lane.b32.xlu0 %v3611, 122
        %v3616 = vpop.permute.xlu0 %3615
        %3617 = vrot.lane.b32.xlu0 %v3612, 122
        %v3618 = vpop.permute.xlu0 %3617
        %v3619 = vrot.slane %v3616, 4
        %v3620 = vrot.slane %v3618, 4
        %v3621 = vsel %vm618, %v3619, %v3620
        %v3622 = vsel %vm730, %v3616, %v3621
        %v3625 = vadd.f32 %v3571, %v3622
        %v3626 = vadd.f32 %v3572, %v3618
        %3627 = vset.pattern.permute.xlu0 45
        %3628 = vperm.xlu0 %3627, %v2402
        %v3629 = vpop.permute.xlu0 %3628
        %v3631 = vunpack.c.l.s4 839922192
        %v3632 = vunpack.c.0.s8 %v3631
        %v3633 = vlaneseq
        %v3634 = vshrl.u32 %v3633, 7
        %v3635 = vsub.s32 %v3632, %v3634
        %v3636 = vrot.slane %v3629, %v3635
        %v3638 = vmul.f32 %v3544, %v3636
        %v3639 = vmul.f32 %v3545, %v3636
        %3642 = vrot.lane.b32.xlu0 %v3638, 122
        %v3643 = vpop.permute.xlu0 %3642
        %3644 = vrot.lane.b32.xlu0 %v3639, 122
        %v3645 = vpop.permute.xlu0 %3644
        %v3646 = vrot.slane %v3643, 4
        %v3647 = vrot.slane %v3645, 4
        %v3648 = vsel %vm618, %v3646, %v3647
        %v3649 = vsel %vm730, %v3643, %v3648
        %v3652 = vadd.f32 %v3598, %v3649
        %v3653 = vadd.f32 %v3599, %v3645
        %3654 = vset.pattern.permute.xlu0 46
        %3655 = vperm.xlu0 %3654, %v2402
        %v3656 = vpop.permute.xlu0 %3655
        %v3658 = vunpack.c.l.s4 839922192
        %v3659 = vunpack.c.0.s8 %v3658
        %v3660 = vlaneseq
        %v3661 = vshrl.u32 %v3660, 7
        %v3662 = vsub.s32 %v3659, %v3661
        %v3663 = vrot.slane %v3656, %v3662
        %v3665 = vmul.f32 %v3544, %v3663
        %v3666 = vmul.f32 %v3545, %v3663
        %3669 = vrot.lane.b32.xlu0 %v3665, 120
        %v3670 = vpop.permute.xlu0 %3669
        %3671 = vrot.lane.b32.xlu0 %v3666, 120
        %v3672 = vpop.permute.xlu0 %3671
        %v3673 = vrot.slane %v3670, 4
        %v3674 = vrot.slane %v3672, 4
        %v3675 = vsel %vm618, %v3673, %v3674
        %v3676 = vsel %vm1862, %v3670, %v3675
        %v3679 = vadd.f32 %v3625, %v3676
        %v3680 = vadd.f32 %v3626, %v3672
        %3681 = vset.pattern.permute.xlu0 47
        %3682 = vperm.xlu0 %3681, %v2402
        %v3683 = vpop.permute.xlu0 %3682
        %v3685 = vunpack.c.l.s4 839922192
        %v3686 = vunpack.c.0.s8 %v3685
        %v3687 = vlaneseq
        %v3688 = vshrl.u32 %v3687, 7
        %v3689 = vsub.s32 %v3686, %v3688
        %v3690 = vrot.slane %v3683, %v3689
        %v3692 = vmul.f32 %v3544, %v3690
        %v3693 = vmul.f32 %v3545, %v3690
        %3696 = vrot.lane.b32.xlu0 %v3692, 120
        %v3697 = vpop.permute.xlu0 %3696
        %3698 = vrot.lane.b32.xlu0 %v3693, 120
        %v3699 = vpop.permute.xlu0 %3698
        %v3700 = vrot.slane %v3697, 4
        %v3701 = vrot.slane %v3699, 4
        %v3702 = vsel %vm618, %v3700, %v3701
        %v3703 = vsel %vm1862, %v3697, %v3702
        %v3706 = vadd.f32 %v3652, %v3703
        %v3707 = vadd.f32 %v3653, %v3699
        %3708 = vset.pattern.permute.xlu0 48
        %3709 = vperm.xlu0 %3708, %v2402
        %v3710 = vpop.permute.xlu0 %3709
        %v3712 = vunpack.c.l.s4 839922192
        %v3713 = vunpack.c.0.s8 %v3712
        %v3714 = vlaneseq
        %v3715 = vshrl.u32 %v3714, 7
        %v3716 = vsub.s32 %v3713, %v3715
        %v3717 = vrot.slane %v3710, %v3716
        %v3719 = vmul.f32 %v3544, %v3717
        %v3720 = vmul.f32 %v3545, %v3717
        %3723 = vrot.lane.b32.xlu0 %v3719, 118
        %v3724 = vpop.permute.xlu0 %3723
        %3725 = vrot.lane.b32.xlu0 %v3720, 118
        %v3726 = vpop.permute.xlu0 %3725
        %v3727 = vrot.slane %v3724, 4
        %v3728 = vrot.slane %v3726, 4
        %v3729 = vsel %vm618, %v3727, %v3728
        %v3730 = vsel %vm543, %v3724, %v3729
        %v3733 = vadd.f32 %v3679, %v3730
        %v3734 = vadd.f32 %v3680, %v3726
        %3737 = vrot.lane.b32.xlu0 %v3706, 127
        %v3738 = vpop.permute.xlu0 %3737
        %3739 = vrot.lane.b32.xlu0 %v3707, 127
        %v3740 = vpop.permute.xlu0 %3739
        %v3741 = vrot.slane %v3738, 4
        %v3742 = vrot.slane %v3740, 4
        %v3743 = vsel %vm618, %v3741, %v3742
        %v3744 = vsel %vm1931, %v3738, %v3743
        %v3747 = vadd.f32 %v3733, %v3744
        %v3748 = vadd.f32 %v3734, %v3740
        %v3749 = vld [vmem:[%s8] sm:$0xf]
        %3751 = vset.pattern.permute.xlu0 0
        %3752 = vperm.xlu0 %3751, %v3749
        %v3753 = vpop.permute.xlu0 %3752
        %v3755 = vunpack.c.l.s4 839922192
        %v3756 = vunpack.c.0.s8 %v3755
        %v3757 = vlaneseq
        %v3758 = vshrl.u32 %v3757, 7
        %v3759 = vsub.s32 %v3756, %v3758
        %v3760 = vrot.slane %v3753, %v3759
        %v3762 = vadd.f32 %v3747, %v3760
        %v3763 = vadd.f32 %v3748, %v3760
        %3765 = vrot.lane.b32.xlu0 %v3762, 122
        %v3766 = vpop.permute.xlu0 %3765
        %3768 = vrot.lane.b32.xlu0 %v3762, 116
        %v3769 = vpop.permute.xlu0 %3768
        %3771 = vrot.lane.b32.xlu0 %v3762, 110
        %v3772 = vpop.permute.xlu0 %3771
        %3774 = vrot.lane.b32.xlu0 %v3762, 104
        %v3775 = vpop.permute.xlu0 %3774
        %3777 = vrot.lane.b32.xlu0 %v3762, 98
        %v3778 = vpop.permute.xlu0 %3777
        %v3780 = vcombine.high %v3762, %v3762
        %3781 = vrot.lane.b32.xlu0 %v3780, 92
        %v3782 = vpop.permute.xlu0 %3781
        %3784 = vrot.lane.b32.xlu0 %v3780, 86
        %v3785 = vpop.permute.xlu0 %3784
        %3787 = vrot.lane.b32.xlu0 %v3780, 80
        %v3788 = vpop.permute.xlu0 %3787
        %3790 = vrot.lane.b32.xlu0 %v3780, 74
        %v3791 = vpop.permute.xlu0 %3790
        %3793 = vrot.lane.b32.xlu0 %v3780, 68
        %v3794 = vpop.permute.xlu0 %3793
        %3797 = vrot.lane.b32.xlu0 %v3780, 62
        %v3798 = vpop.permute.xlu0 %3797
        %3799 = vrot.lane.b32.xlu0 %v3763, 62
        %v3800 = vpop.permute.xlu0 %3799
        %vm3801 = vcmask 506880
        %v3802 = vsel %vm3801, %v3798, %v3800
        %3804 = vrot.lane.b32.xlu0 %v3763, 56
        %v3805 = vpop.permute.xlu0 %3804
        %3807 = vrot.lane.b32.xlu0 %v3763, 50
        %v3808 = vpop.permute.xlu0 %3807
        %3810 = vrot.lane.b32.xlu0 %v3763, 44
        %v3811 = vpop.permute.xlu0 %3810
        %3813 = vrot.lane.b32.xlu0 %v3763, 38
        %v3814 = vpop.permute.xlu0 %3813
        %v3816 = vsel %vm2143, %v3762, %v3766
        %vm3817 = vcmask 261120
        %v3818 = vsel %vm3817, %v3816, %v3769
        %vm3819 = vcmask 392192
        %v3820 = vsel %vm3819, %v3818, %v3772
        %vm3821 = vcmask 523264
        %v3822 = vsel %vm3821, %v3820, %v3775
        %v3823 = vsel %vm1067, %v3822, %v3778
        %vm3824 = vcmask 785408
        %v3825 = vsel %vm3824, %v3823, %v3782
        %vm3826 = vcmask 916480
        %v3827 = vsel %vm3826, %v3825, %v3785
        %v3828 = vsel %vm2143, %v3788, %v3791
        %v3829 = vsel %vm3817, %v3828, %v3794
        %v3830 = vsel %vm3819, %v3829, %v3802
        %v3831 = vsel %vm3821, %v3830, %v3805
        %v3832 = vsel %vm1067, %v3831, %v3808
        %v3833 = vsel %vm3824, %v3832, %v3811
        %v3834 = vsel %vm3826, %v3833, %v3814
        %v3835 = vld [vmem:[%s330] sm:$0xff]
        %v3838 = vcombine.low %v3827, %v3834
        %v3840 = vadd.f32 %v3835, %v3838
        %3841 = vst [vmem:[%s325] sm:$0xff] %v3840
        %s3842 = sand.u32 %s225, 1
        %s3843 = scalar_lea.sflag [#allocation5], %s3842
        %s3844 = sand.u32 %s225, 1
        %s3845 = smul.addr %s3844, 8
        %s3846 = scalar_lea.vmem [#allocation4], %s3845
        // Predicated region
        $region57: #{tpu_custom_call.1} parent=55 // pred_check
          %p3847 = pneg %p235
        $region58: #{tpu_custom_call.1} parent=55 // pred_check_branch
          %3849 = sbr.rel (%p3847) target = $region60
        $region59: #{tpu_custom_call.1} parent=55 // pred_region
          %s3851 = ssub.s32 128, 128
          %3852 = vsyncadd %s3843, %s3851
          %s3853 = smul.addr %s23, 2
          %s3854 = smul.addr %s3853, 64
          %s3855 = scalar_lea.hbm %s9, %s3854
          %s3857 = sshll.u32 %s3846, 4
          %s3858 = int_to_ptr.vmem [resolvable:$true] %s3857
          %3860 = dma.vmem_to_hbm [thread:$0]  %s3858, 128, %s3855, %s3843
        $region60: #{tpu_custom_call.1} parent=55 // pred_fallthru
          _
      $region56: #{tpu_custom_call.1} parent=5 // pred_fallthru
        _
      %p3861 = scmp.le.s32.totalorder 2, %s18
      // Predicated region
      $region61: #{tpu_custom_call.1} parent=5 // pred_check
        %p3862 = pneg %p3861
      $region62: #{tpu_custom_call.1} parent=5 // pred_check_branch
        %3864 = sbr.rel (%p3862) target = $region64
      $region63: #{tpu_custom_call.1} parent=5 // pred_region
        %s3865 = ssub.s32 %s18, 2
        // Predicated region
        $region65: #{tpu_custom_call.1} parent=63 // pred_check
          %p3866 = pneg %p241
        $region66: #{tpu_custom_call.1} parent=63 // pred_check_branch
          %3868 = sbr.rel (%p3866) target = $region68
        $region67: #{tpu_custom_call.1} parent=63 // pred_region
          %s3869 = sand.u32 %s226, 1
          %s3870 = scalar_lea.sflag [#allocation5], %s3869
          %s3871 = sand.u32 %s226, 1
          %s3872 = smul.addr %s3871, 8
          %s3873 = scalar_lea.vmem [#allocation4], %s3872
          %3874 = dma.done %s3870, 128
        $region68: #{tpu_custom_call.1} parent=63 // pred_fallthru
          _
      $region64: #{tpu_custom_call.1} parent=5 // pred_fallthru
        _
    $region6: #{tpu_custom_call.1} parent=1 // loop_footer
      %s22 = sadd.s32 1, %s18
    $region7: #{tpu_custom_call.1} parent=1 // loop_footer_branch
      %17 = sbr.rel target = $region3
    $region8: #{tpu_custom_call.1} parent=1 // loop_exit
      _
    %3875 = vsyncpa [#allocation5], 1
    %s3876 = scalar_lea.sflag [#allocation5], 1
    %3877 = vsyncpa %s3876, 1

</llo_original>
